<compile_context>
chip_gen: v7x
topology: tpu7x:2x2x1
jax: 0.10.0
libtpu: 0.0.40
codegen_flags: <defaults>
</compile_context>

<pallas_src>
import jax
import jax.numpy as jnp
from jax.experimental import pallas as pl
from jax.experimental.pallas import tpu as pltpu

EPS = 1.1920929e-07   # torch.finfo(torch.float32).eps, used by F.rms_norm(eps=None)
NEG_BIAS = -1e30      # additive causal-mask bias (avoids inf-inf NaN paths)


def _rms_norm(x, scale=1.0):
    # `scale` folds an extra scalar (e.g. the 15/head_dim attention scale) into
    # the existing (T,1) rsqrt factor for free.
    return x * (jax.lax.rsqrt(jnp.mean(x * x, axis=-1, keepdims=True) + EPS) * scale)


# ------------------------------ fused Block kernel ------------------------------

def _make_block_kernel(*, num_heads, head_dim, scale, has_attn, has_ve, T, dim, hdim):
    half = head_dim // 2

    def kernel(*refs):
        it = iter(refs)
        blk_lam = next(it)                                # SMEM (2,) f32
        attn_lam = next(it) if has_attn else None         # SMEM (2,) f32
        x_ref = next(it)                                  # (1, T, dim)  f32
        x0_ref = next(it)                                 # (1, T, dim)  f32
        ve_ref = next(it) if (has_attn and has_ve) else None   # (1, T, hdim) f32
        if has_attn:
            cos_ref = next(it)                            # (T, head_dim) f32 = [cos, cos]
            sin_ref = next(it)                            # (T, head_dim) f32 = [sin, -sin]
            qkv_w_ref = next(it)                          # (dim, 3*hdim) bf16  (K,N)
            attn_proj_w_ref = next(it)                    # (hdim, dim)   bf16  (K,N)
        fc_w_ref = next(it)                               # (dim, 2*dim)  bf16  chunk
        mlp_proj_w_ref = next(it)                         # (2*dim, dim)  bf16  chunk
        out_ref = next(it)                                # (1, T, dim)   f32
        if has_attn:
            qkv_sc = next(it)                             # VMEM (T, 3*hdim) f32
            y_sc = next(it)                               # VMEM (T, hdim)   bf16
        xres_sc = next(it)                                # VMEM (T, dim) f32
        xn_sc = next(it)                                  # VMEM (T, dim) bf16

        step = pl.program_id(0)
        last = pl.num_programs(0) - 1

        # ---- step 0: residual mix + attention; stage x_res / norm(x_res) in VMEM ----
        @pl.when(step == 0)
        def _attention_and_residual():
            x_mix = blk_lam[0] * x_ref[0] + blk_lam[1] * x0_ref[0]
            if has_attn:
                # one K=dim GEMM; result staged in VMEM so the 384 KiB slab
                # never has to live in vregs across the head loop.
                qkv_sc[...] = jnp.dot(_rms_norm(x_mix).astype(jnp.bfloat16),
                                      qkv_w_ref[...],
                                      preferred_element_type=jnp.float32)
                cos = cos_ref[...]
                sin = sin_ref[...]
                row = jax.lax.broadcasted_iota(jnp.int32, (T, T), 0)
                col = jax.lax.broadcasted_iota(jnp.int32, (T, T), 1)
                bias = jnp.where(col <= row, jnp.float32(0.0), jnp.float32(NEG_BIAS))
                # TODO(synk): general FlexAttention BlockMask (document / sliding-window
                # masks) is not representable here; plain causal masking only.

                def rope(u):
                    # u*[cos,cos] + roll(u, half)*[sin,-sin]  (roll uses the XLU slot)
                    return u * cos + pltpu.roll(u, half, axis=1) * sin

                for h in range(num_heads):                # static unroll; lane-aligned slices
                    q = rope(_rms_norm(
                        qkv_sc[:, h * head_dim:(h + 1) * head_dim], scale))
                    k = rope(_rms_norm(
                        qkv_sc[:, hdim + h * head_dim: hdim + (h + 1) * head_dim]))
                    v = qkv_sc[:, 2 * hdim + h * head_dim: 2 * hdim + (h + 1) * head_dim]
                    if has_ve:
                        v = (attn_lam[0] * v +
                             attn_lam[1] * ve_ref[0, :, h * head_dim:(h + 1) * head_dim])
                    else:
                        v = attn_lam[0] * v
                    s = jax.lax.dot_general(
                        q.astype(jnp.bfloat16), k.astype(jnp.bfloat16),
                        (((1,), (1,)), ((), ())),
                        preferred_element_type=jnp.float32) + bias
                    m = jnp.max(s, axis=-1, keepdims=True)
                    p = jnp.exp(s - m)
                    l = jnp.sum(p, axis=-1, keepdims=True)
                    # approx reciprocal: EUP slot; rows sum to 1 +/- ~2^-12 (inference OK).
                    p = p * pl.reciprocal(l, approx=True)
                    # head output lands at a lane-aligned offset of y_sc (no concat copy).
                    y_sc[:, h * head_dim:(h + 1) * head_dim] = jnp.dot(
                        p.astype(jnp.bfloat16), v.astype(jnp.bfloat16),
                        preferred_element_type=jnp.float32).astype(jnp.bfloat16)
                # c_proj: single K=hdim GEMM (full MXU depth on v6e/v7x).
                x_res = x_mix + jnp.dot(y_sc[...], attn_proj_w_ref[...],
                                        preferred_element_type=jnp.float32)
            else:
                x_res = x_mix
            xres_sc[...] = x_res
            xn_sc[...] = _rms_norm(x_res).astype(jnp.bfloat16)

        # ---- both steps: one half of the MLP hidden dim. The per-step weight
        # chunks mean chunk-1 DMA is prefetched while step-0 attention runs. ----
        hact = jnp.dot(xn_sc[...], fc_w_ref[...], preferred_element_type=jnp.float32)
        hact = jnp.square(jnp.maximum(hact, 0.0)).astype(jnp.bfloat16)
        mlp_part = jnp.dot(hact, mlp_proj_w_ref[...], preferred_element_type=jnp.float32)

        @pl.when(step != last)
        def _accumulate():
            xres_sc[...] = xres_sc[...] + mlp_part

        @pl.when(step == last)
        def _finalize():
            out_ref[0] = xres_sc[...] + mlp_part

    return kernel


# ------------------------------ wrappers ------------------------------

_SMEM_SPEC = pl.BlockSpec(memory_space=pltpu.MemorySpace.SMEM)


def _const_spec(shape):
    zeros = (0,) * len(shape)
    return pl.BlockSpec(shape, lambda i, z=zeros: z)


def prepare_block_params(params, cos, sin):
    """One-time per-layer prep: bf16 casts, (K,N) weight layouts, full-width rotary
    tables. Keeps per-call XLA convert/reshape/concat kernels off the hot path."""
    prepared = {
        "block_lambdas": jnp.asarray(params["block_lambdas"], jnp.float32),
        "w_fc_t": jnp.asarray(params["w_fc"], jnp.float32).T.astype(jnp.bfloat16),           # (dim, 4*dim)
        "w_mlp_proj_t": jnp.asarray(params["w_mlp_proj"], jnp.float32).T.astype(jnp.bfloat16),  # (4*dim, dim)
        "qkv_w_t": None,
    }
    if params["qkv_w"] is not None:
        _, hdim, dim = params["qkv_w"].shape
        prepared["qkv_w_t"] = (params["qkv_w"].reshape(3 * hdim, dim).T
                               .astype(jnp.bfloat16))                                        # (dim, 3*hdim)
        prepared["w_attn_proj_t"] = (jnp.asarray(params["w_attn_proj"], jnp.float32).T
                                     .astype(jnp.bfloat16))                                  # (hdim, dim)
        prepared["attn_lambdas"] = jnp.asarray(params["attn_lambdas"], jnp.float32)
        prepared["cos_full"] = jnp.concatenate([cos, cos], axis=-1)                          # (S, head_dim)
        prepared["sin_full"] = jnp.concatenate([sin, -sin], axis=-1)                         # (S, head_dim)
    return prepared


def block_forward(prepared, x, ve, x0, num_heads, head_dim):
    B, T, dim = x.shape
    assert B == 1, "Must use batch size = 1 (FlexAttention constraint in the module)"
    hdim = num_heads * head_dim
    scale = 15.0 / head_dim
    has_attn = prepared["qkv_w_t"] is not None
    has_ve = has_attn and (ve is not None)
    mh = 2 * dim   # half of the 4*dim MLP hidden dim (split across the 2-step grid)

    args = [prepared["block_lambdas"]]
    specs = [_SMEM_SPEC]
    if has_attn:
        args.append(prepared["attn_lambdas"])
        specs.append(_SMEM_SPEC)
    args += [x, x0]
    specs += [_const_spec((1, T, dim)), _const_spec((1, T, dim))]
    if has_attn:
        if has_ve:
            args.append(ve)
            specs.append(_const_spec((1, T, hdim)))
        # rotary tables are (max_seq_len, head_dim); the BlockSpec grabs rows [0, T).
        args += [prepared["cos_full"], prepared["sin_full"],
                 prepared["qkv_w_t"], prepared["w_attn_proj_t"]]
        specs += [_const_spec((T, head_dim)), _const_spec((T, head_dim)),
                  _const_spec((dim, 3 * hdim)), _const_spec((hdim, dim))]
    # MLP weights split into per-step chunks: chunk-1 DMA overlaps step-0 compute.
    args += [prepared["w_fc_t"], prepared["w_mlp_proj_t"]]
    specs += [pl.BlockSpec((dim, mh), lambda i: (0, i)),
              pl.BlockSpec((mh, dim), lambda i: (i, 0))]

    scratch = []
    if has_attn:
        scratch += [pltpu.VMEM((T, 3 * hdim), jnp.float32),
                    pltpu.VMEM((T, hdim), jnp.bfloat16)]
    scratch += [pltpu.VMEM((T, dim), jnp.float32),
                pltpu.VMEM((T, dim), jnp.bfloat16)]

    kernel = _make_block_kernel(num_heads=num_heads, head_dim=head_dim, scale=scale,
                                has_attn=has_attn, has_ve=has_ve,
                                T=T, dim=dim, hdim=hdim)

    return pl.pallas_call(
        kernel,
        grid=(2,),
        out_shape=jax.ShapeDtypeStruct((1, T, dim), jnp.float32),
        in_specs=specs,
        out_specs=_const_spec((1, T, dim)),
        scratch_shapes=scratch,
        compiler_params=pltpu.CompilerParams(
            # step 1 consumes step-0 scratch state -> "arbitrary".
            # TODO(synk): on v7x a second "parallel" axis over heads/query rows could
            # use both TensorCores; not implemented here.
            dimension_semantics=("arbitrary",),
        ),
    )(*args)


# ------------------------------ pure-JAX f32 reference ------------------------------

def ref_block_forward(params, x, ve, x0, cos, sin, num_heads, head_dim):
    def rmsn(a):
        return a * jax.lax.rsqrt(jnp.mean(a * a, axis=-1, keepdims=True) + EPS)

    B, T, dim = x.shape
    hdim = num_heads * head_dim
    l = params["block_lambdas"]
    x = l[0] * x + l[1] * x0
    if params["qkv_w"] is not None:
        xn = rmsn(x)
        qkv = xn @ params["qkv_w"].reshape(3 * hdim, dim).T
        qkv = qkv.reshape(B, T, 3, num_heads, head_dim)
        q, k, v = qkv[:, :, 0], qkv[:, :, 1], qkv[:, :, 2]
        q, k = rmsn(q), rmsn(k)
        c = cos[None, :T, None, :]
        s = sin[None, :T, None, :]

        def rot(u):
            u1, u2 = u[..., : head_dim // 2], u[..., head_dim // 2:]
            return jnp.concatenate([u1 * c + u2 * s, -u1 * s + u2 * c], axis=-1)

        q, k = rot(q), rot(k)
        la = params["attn_lambdas"]
        v = la[0] * v + la[1] * ve.reshape(v.shape) if ve is not None else la[0] * v
        qh, kh, vh = (jnp.transpose(a, (0, 2, 1, 3)) for a in (q, k, v))
        scores = jnp.einsum("bhqd,bhkd->bhqk", qh, kh) * (15.0 / head_dim)
        mask = jnp.tril(jnp.ones((T, T), bool))
        scores = jnp.where(mask[None, None], scores, -jnp.inf)
        p = jax.nn.softmax(scores, axis=-1)
        y = jnp.einsum("bhqk,bhkd->bhqd", p, vh)
        y = jnp.transpose(y, (0, 2, 1, 3)).reshape(B, T, hdim)
        x = x + y @ params["w_attn_proj"].T
    xn = rmsn(x)
    h = jnp.square(jax.nn.relu(xn @ params["w_fc"].T))
    return x + h @ params["w_mlp_proj"].T


# ------------------------------ main ------------------------------

if __name__ == "__main__":
    dim = 128
    num_heads = 2
    head_dim = 128          # fixed default in CausalSelfAttention
    hdim = num_heads * head_dim
    T = 128
    max_seq_len = 128

    key = jax.random.PRNGKey(0)
    ks = jax.random.split(key, 8)

    bound_qkv = (3 ** 0.5) * 0.5 * dim ** -0.5
    bound_attn_proj = (3 ** 0.5) * 0.5 * hdim ** -0.5
    bound_fc = (3 ** 0.5) * 0.5 * dim ** -0.5
    bound_mlp_proj = (3 ** 0.5) * 0.5 * (4 * dim) ** -0.5

    params = {
        "qkv_w": jax.random.uniform(ks[0], (3, hdim, dim), jnp.float32,
                                    -bound_qkv, bound_qkv),
        "attn_lambdas": jnp.array([0.5, 0.5], jnp.float32),
        # NOTE: the module zero-inits both c_proj weights; deterministic small random
        # values are used here (same shapes) so the kernel computes something non-trivial.
        "w_attn_proj": jax.random.uniform(ks[1], (dim, hdim), jnp.float32,
                                          -bound_attn_proj, bound_attn_proj),
        "w_fc": jax.random.uniform(ks[2], (4 * dim, dim), jnp.float32,
                                   -bound_fc, bound_fc),
        "w_mlp_proj": jax.random.uniform(ks[3], (dim, 4 * dim), jnp.float32,
                                         -bound_mlp_proj, bound_mlp_proj),
        "block_lambdas": jnp.array([1.0, 0.0], jnp.float32),
    }
    params_no_attn = dict(params, qkv_w=None)   # layer_idx == 7 variant

    # Rotary tables: head_dim//4 = 32 nonzero freqs + 32 zeros -> 64 = head_dim//2
    angular_freq = (1.0 / 1024.0) ** jnp.linspace(0.0, 1.0, head_dim // 4,
                                                  dtype=jnp.float32)
    angular_freq = jnp.concatenate([angular_freq, jnp.zeros(head_dim // 4, jnp.float32)])
    t = jnp.arange(max_seq_len, dtype=jnp.float32)
    theta = t[:, None] * angular_freq[None, :]
    cos, sin = jnp.cos(theta), jnp.sin(theta)

    x = jax.random.normal(ks[4], (1, T, dim), jnp.float32)
    x0 = jax.random.normal(ks[5], (1, T, dim), jnp.float32)
    ve = jax.random.normal(ks[6], (1, T, hdim), jnp.float32)

    # One-time weight prep (outside the per-step hot path).
    prepared = jax.block_until_ready(prepare_block_params(params, cos, sin))
    prepared_no_attn = jax.block_until_ready(
        prepare_block_params(params_no_attn, cos, sin))

    # bf16 matmul operands (f32 accumulate) vs the pure-f32 reference -> relaxed tol.
    ATOL = RTOL = 5e-2
    cases = [
        ("attn+ve", params, prepared, ve),
        ("attn_no_ve", params, prepared, None),
        ("no_attn", params_no_attn, prepared_no_attn, None),
    ]
    for name, p_ref, p_prep, ve_in in cases:
        out = jax.block_until_ready(
            block_forward(p_prep, x, ve_in, x0, num_heads, head_dim))
        ref = ref_block_forward(p_ref, x, ve_in, x0, cos, sin, num_heads, head_dim)
        assert out.shape == ref.shape == (1, T, dim)
        max_err = float(jnp.max(jnp.abs(out - ref)))
        assert jnp.allclose(out, ref, atol=ATOL, rtol=RTOL), \
            f"{name}: max abs err {max_err}"

    print("KERNEL_OK")
</pallas_src>

<mosaic_0001>
module attributes {stable_mosaic.version = 11 : i64} {
  func.func @kernel(%arg0: i32, %arg1: memref<2xf32, #tpu.memory_space<smem>>, %arg2: memref<2xf32, #tpu.memory_space<smem>>, %arg3: memref<1x128x128xf32, #tpu.memory_space<vmem>>, %arg4: memref<1x128x128xf32, #tpu.memory_space<vmem>>, %arg5: memref<1x128x256xf32, #tpu.memory_space<vmem>>, %arg6: memref<128x128xf32, #tpu.memory_space<vmem>>, %arg7: memref<128x128xf32, #tpu.memory_space<vmem>>, %arg8: memref<128x768xbf16, #tpu.memory_space<vmem>>, %arg9: memref<256x128xbf16, #tpu.memory_space<vmem>>, %arg10: memref<128x256xbf16, #tpu.memory_space<vmem>>, %arg11: memref<256x128xbf16, #tpu.memory_space<vmem>>, %arg12: memref<1x128x128xf32, #tpu.memory_space<vmem>>, %arg13: memref<128x768xf32, #tpu.memory_space<vmem>>, %arg14: memref<128x256xbf16, #tpu.memory_space<vmem>>, %arg15: memref<128x128xf32, #tpu.memory_space<vmem>>, %arg16: memref<128x128xbf16, #tpu.memory_space<vmem>>) attributes {dimension_semantics = [#tpu.dimension_semantics<arbitrary>], iteration_bounds = array<i64: 2>, scalar_prefetch = 0 : i64, scratch_operands = 4 : i64, tpu.core_type = #tpu.core_type<tc>, window_params = [{transform_indices = @transform_0, window_bounds = array<i64: 2>}, {transform_indices = @transform_1, window_bounds = array<i64: 2>}, {pipeline_mode = #tpu.pipeline_mode<synchronous>, transform_indices = @transform_2, window_bounds = array<i64: 1, 128, 128>}, {pipeline_mode = #tpu.pipeline_mode<synchronous>, transform_indices = @transform_3, window_bounds = array<i64: 1, 128, 128>}, {pipeline_mode = #tpu.pipeline_mode<synchronous>, transform_indices = @transform_4, window_bounds = array<i64: 1, 128, 256>}, {pipeline_mode = #tpu.pipeline_mode<synchronous>, transform_indices = @transform_5, window_bounds = array<i64: 128, 128>}, {pipeline_mode = #tpu.pipeline_mode<synchronous>, transform_indices = @transform_6, window_bounds = array<i64: 128, 128>}, {pipeline_mode = #tpu.pipeline_mode<synchronous>, transform_indices = @transform_7, window_bounds = array<i64: 128, 768>}, {pipeline_mode = #tpu.pipeline_mode<synchronous>, transform_indices = @transform_8, window_bounds = array<i64: 256, 128>}, {transform_indices = @transform_9, window_bounds = array<i64: 128, 256>}, {transform_indices = @transform_10, window_bounds = array<i64: 256, 128>}, {pipeline_mode = #tpu.pipeline_mode<synchronous>, transform_indices = @transform_11, window_bounds = array<i64: 1, 128, 128>}]} {
    %c0_i32 = arith.constant 0 : i32
    %0 = arith.cmpi eq, %arg0, %c0_i32 : i32
    %1 = arith.extui %0 : i1 to i32
    %c0_i32_0 = arith.constant 0 : i32
    %2 = arith.cmpi ne, %1, %c0_i32_0 : i32
    scf.if %2 {
      %c0_11 = arith.constant 0 : index
      %18 = memref.load %arg1[%c0_11] : memref<2xf32, #tpu.memory_space<smem>>
      %c0_12 = arith.constant 0 : index
      %c0_13 = arith.constant 0 : index
      %c0_14 = arith.constant 0 : index
      %19 = vector.load %arg3[%c0_12, %c0_13, %c0_14] : memref<1x128x128xf32, #tpu.memory_space<vmem>>, vector<1x128x128xf32>
      %20 = vector.shape_cast %19 : vector<1x128x128xf32> to vector<128x128xf32>
      %21 = vector.broadcast %18 : f32 to vector<128x128xf32>
      %22 = arith.mulf %21, %20 : vector<128x128xf32>
      %c1 = arith.constant 1 : index
      %23 = memref.load %arg1[%c1] : memref<2xf32, #tpu.memory_space<smem>>
      %c0_15 = arith.constant 0 : index
      %c0_16 = arith.constant 0 : index
      %c0_17 = arith.constant 0 : index
      %24 = vector.load %arg4[%c0_15, %c0_16, %c0_17] : memref<1x128x128xf32, #tpu.memory_space<vmem>>, vector<1x128x128xf32>
      %25 = vector.shape_cast %24 : vector<1x128x128xf32> to vector<128x128xf32>
      %26 = vector.broadcast %23 : f32 to vector<128x128xf32>
      %27 = arith.mulf %26, %25 : vector<128x128xf32>
      %28 = arith.addf %22, %27 : vector<128x128xf32>
      %29 = arith.mulf %28, %28 : vector<128x128xf32>
      %cst_18 = arith.constant dense<0.000000e+00> : vector<128xf32>
      %30 = vector.multi_reduction <add>, %29, %cst_18 [1] : vector<128x128xf32> to vector<128xf32>
      %31 = vector.shape_cast %30 : vector<128xf32> to vector<128x1xf32>
      %cst_19 = arith.constant 1.280000e+02 : f32
      %32 = vector.broadcast %cst_19 : f32 to vector<128x1xf32>
      %33 = arith.divf %31, %32 : vector<128x1xf32>
      %cst_20 = arith.constant 1.1920929E-7 : f32
      %34 = vector.broadcast %cst_20 : f32 to vector<128x1xf32>
      %35 = arith.addf %33, %34 : vector<128x1xf32>
      %36 = math.rsqrt %35 : vector<128x1xf32>
      %cst_21 = arith.constant 1.000000e+00 : f32
      %37 = vector.broadcast %cst_21 : f32 to vector<128x1xf32>
      %38 = arith.mulf %36, %37 : vector<128x1xf32>
      %39 = vector.broadcast %38 : vector<128x1xf32> to vector<128x128xf32>
      %40 = arith.mulf %28, %39 : vector<128x128xf32>
      %41 = arith.truncf %40 : vector<128x128xf32> to vector<128x128xbf16>
      %c0_22 = arith.constant 0 : index
      %c0_23 = arith.constant 0 : index
      %42 = vector.load %arg8[%c0_22, %c0_23] : memref<128x768xbf16, #tpu.memory_space<vmem>>, vector<128x768xbf16>
      %cst_24 = arith.constant dense<0.000000e+00> : vector<128x768xf32>
      %43 = tpu.matmul %41, %42, %cst_24 {dimension_numbers = #tpu.dot_dimension_numbers<[1], [0], [0], [1], [0, 0, 1, 1], [], []>} : vector<128x128xbf16>, vector<128x768xbf16>, vector<128x768xf32> -> vector<128x768xf32>
      %c0_25 = arith.constant 0 : index
      %c0_26 = arith.constant 0 : index
      %44 = vector.load %arg13[%c0_25, %c0_26] : memref<128x768xf32, #tpu.memory_space<vmem>>, vector<128x768xf32>
      tpu.vector_store %arg13[%c0_25, %c0_26], %43 {strides = array<i32>} : memref<128x768xf32, #tpu.memory_space<vmem>>, vector<128x768xf32>,
      %c0_27 = arith.constant 0 : index
      %c0_28 = arith.constant 0 : index
      %45 = vector.load %arg6[%c0_27, %c0_28] : memref<128x128xf32, #tpu.memory_space<vmem>>, vector<128x128xf32>
      %c0_29 = arith.constant 0 : index
      %c0_30 = arith.constant 0 : index
      %46 = vector.load %arg7[%c0_29, %c0_30] : memref<128x128xf32, #tpu.memory_space<vmem>>, vector<128x128xf32>
      %47 = tpu.iota {dimensions = array<i32: 0>} : vector<128x128xi32>
      %48 = tpu.iota {dimensions = array<i32: 1>} : vector<128x128xi32>
      %49 = arith.cmpi sle, %48, %47 : vector<128x128xi32>
      %cst_31 = arith.constant 0.000000e+00 : f32
      %cst_32 = arith.constant -1.000000e+30 : f32
      %50 = vector.broadcast %cst_31 : f32 to vector<128x128xf32>
      %51 = vector.broadcast %cst_32 : f32 to vector<128x128xf32>
      %52 = arith.select %49, %50, %51 : vector<128x128xi1>, vector<128x128xf32>
      %c0_33 = arith.constant 0 : index
      %c0_34 = arith.constant 0 : index
      %53 = vector.load %arg13[%c0_33, %c0_34] : memref<128x768xf32, #tpu.memory_space<vmem>>, vector<128x128xf32>
      %54 = arith.mulf %53, %53 : vector<128x128xf32>
      %cst_35 = arith.constant dense<0.000000e+00> : vector<128xf32>
      %55 = vector.multi_reduction <add>, %54, %cst_35 [1] : vector<128x128xf32> to vector<128xf32>
      %56 = vector.shape_cast %55 : vector<128xf32> to vector<128x1xf32>
      %cst_36 = arith.constant 1.280000e+02 : f32
      %57 = vector.broadcast %cst_36 : f32 to vector<128x1xf32>
      %58 = arith.divf %56, %57 : vector<128x1xf32>
      %cst_37 = arith.constant 1.1920929E-7 : f32
      %59 = vector.broadcast %cst_37 : f32 to vector<128x1xf32>
      %60 = arith.addf %58, %59 : vector<128x1xf32>
      %61 = math.rsqrt %60 : vector<128x1xf32>
      %cst_38 = arith.constant 0.1171875 : f32
      %62 = vector.broadcast %cst_38 : f32 to vector<128x1xf32>
      %63 = arith.mulf %61, %62 : vector<128x1xf32>
      %64 = vector.broadcast %63 : vector<128x1xf32> to vector<128x128xf32>
      %65 = arith.mulf %53, %64 : vector<128x128xf32>
      %66 = arith.mulf %65, %45 : vector<128x128xf32>
      %c64_i32 = arith.constant 64 : i32
      %67 = tpu.dynamic_rotate %65 by %c64_i32 dim 1 : vector<128x128xf32>, i32 -> vector<128x128xf32>
      %68 = arith.mulf %67, %46 : vector<128x128xf32>
      %69 = arith.addf %66, %68 : vector<128x128xf32>
      %c0_39 = arith.constant 0 : index
      %c256 = arith.constant 256 : index
      %70 = vector.load %arg13[%c0_39, %c256] : memref<128x768xf32, #tpu.memory_space<vmem>>, vector<128x128xf32>
      %71 = arith.mulf %70, %70 : vector<128x128xf32>
      %cst_40 = arith.constant dense<0.000000e+00> : vector<128xf32>
      %72 = vector.multi_reduction <add>, %71, %cst_40 [1] : vector<128x128xf32> to vector<128xf32>
      %73 = vector.shape_cast %72 : vector<128xf32> to vector<128x1xf32>
      %cst_41 = arith.constant 1.280000e+02 : f32
      %74 = vector.broadcast %cst_41 : f32 to vector<128x1xf32>
      %75 = arith.divf %73, %74 : vector<128x1xf32>
      %cst_42 = arith.constant 1.1920929E-7 : f32
      %76 = vector.broadcast %cst_42 : f32 to vector<128x1xf32>
      %77 = arith.addf %75, %76 : vector<128x1xf32>
      %78 = math.rsqrt %77 : vector<128x1xf32>
      %cst_43 = arith.constant 1.000000e+00 : f32
      %79 = vector.broadcast %cst_43 : f32 to vector<128x1xf32>
      %80 = arith.mulf %78, %79 : vector<128x1xf32>
      %81 = vector.broadcast %80 : vector<128x1xf32> to vector<128x128xf32>
      %82 = arith.mulf %70, %81 : vector<128x128xf32>
      %83 = arith.mulf %82, %45 : vector<128x128xf32>
      %c64_i32_44 = arith.constant 64 : i32
      %84 = tpu.dynamic_rotate %82 by %c64_i32_44 dim 1 : vector<128x128xf32>, i32 -> vector<128x128xf32>
      %85 = arith.mulf %84, %46 : vector<128x128xf32>
      %86 = arith.addf %83, %85 : vector<128x128xf32>
      %c0_45 = arith.constant 0 : index
      %c512 = arith.constant 512 : index
      %87 = vector.load %arg13[%c0_45, %c512] : memref<128x768xf32, #tpu.memory_space<vmem>>, vector<128x128xf32>
      %c0_46 = arith.constant 0 : index
      %88 = memref.load %arg2[%c0_46] : memref<2xf32, #tpu.memory_space<smem>>
      %89 = vector.broadcast %88 : f32 to vector<128x128xf32>
      %90 = arith.mulf %89, %87 : vector<128x128xf32>
      %c1_47 = arith.constant 1 : index
      %91 = memref.load %arg2[%c1_47] : memref<2xf32, #tpu.memory_space<smem>>
      %c0_48 = arith.constant 0 : index
      %c0_49 = arith.constant 0 : index
      %c0_50 = arith.constant 0 : index
      %92 = vector.load %arg5[%c0_48, %c0_49, %c0_50] : memref<1x128x256xf32, #tpu.memory_space<vmem>>, vector<1x128x128xf32>
      %93 = vector.shape_cast %92 : vector<1x128x128xf32> to vector<128x128xf32>
      %94 = vector.broadcast %91 : f32 to vector<128x128xf32>
      %95 = arith.mulf %94, %93 : vector<128x128xf32>
      %96 = arith.addf %90, %95 : vector<128x128xf32>
      %97 = arith.truncf %69 : vector<128x128xf32> to vector<128x128xbf16>
      %98 = arith.truncf %86 : vector<128x128xf32> to vector<128x128xbf16>
      %cst_51 = arith.constant dense<0.000000e+00> : vector<128x128xf32>
      %99 = tpu.matmul %97, %98, %cst_51 {dimension_numbers = #tpu.dot_dimension_numbers<[1], [1], [0], [0], [0, 0, 1, 0], [], []>} : vector<128x128xbf16>, vector<128x128xbf16>, vector<128x128xf32> -> vector<128x128xf32>
      %100 = arith.addf %99, %52 : vector<128x128xf32>
      %cst_52 = arith.constant dense<0xFF800000> : vector<128xf32>
      %101 = vector.multi_reduction <maximumf>, %100, %cst_52 [1] : vector<128x128xf32> to vector<128xf32>
      %102 = vector.shape_cast %101 : vector<128xf32> to vector<128x1xf32>
      %103 = vector.broadcast %102 : vector<128x1xf32> to vector<128x128xf32>
      %104 = arith.subf %100, %103 : vector<128x128xf32>
      %105 = math.exp %104 : vector<128x128xf32>
      %cst_53 = arith.constant dense<0.000000e+00> : vector<128xf32>
      %106 = vector.multi_reduction <add>, %105, %cst_53 [1] : vector<128x128xf32> to vector<128xf32>
      %107 = vector.shape_cast %106 : vector<128xf32> to vector<128x1xf32>
      %108 = tpu.reciprocal %107 {approx = true} : vector<128x1xf32> -> vector<128x1xf32>
      %109 = vector.broadcast %108 : vector<128x1xf32> to vector<128x128xf32>
      %110 = arith.mulf %105, %109 : vector<128x128xf32>
      %111 = arith.truncf %110 : vector<128x128xf32> to vector<128x128xbf16>
      %112 = arith.truncf %96 : vector<128x128xf32> to vector<128x128xbf16>
      %cst_54 = arith.constant dense<0.000000e+00> : vector<128x128xf32>
      %113 = tpu.matmul %111, %112, %cst_54 {dimension_numbers = #tpu.dot_dimension_numbers<[1], [0], [0], [1], [0, 0, 1, 1], [], []>} : vector<128x128xbf16>, vector<128x128xbf16>, vector<128x128xf32> -> vector<128x128xf32>
      %114 = arith.truncf %113 : vector<128x128xf32> to vector<128x128xbf16>
      %c0_55 = arith.constant 0 : index
      %c0_56 = arith.constant 0 : index
      %115 = vector.load %arg14[%c0_55, %c0_56] : memref<128x256xbf16, #tpu.memory_space<vmem>>, vector<128x128xbf16>
      tpu.vector_store %arg14[%c0_55, %c0_56], %114 {strides = array<i32>} : memref<128x256xbf16, #tpu.memory_space<vmem>>, vector<128x128xbf16>,
      %c0_57 = arith.constant 0 : index
      %c128 = arith.constant 128 : index
      %116 = vector.load %arg13[%c0_57, %c128] : memref<128x768xf32, #tpu.memory_space<vmem>>, vector<128x128xf32>
      %117 = arith.mulf %116, %116 : vector<128x128xf32>
      %cst_58 = arith.constant dense<0.000000e+00> : vector<128xf32>
      %118 = vector.multi_reduction <add>, %117, %cst_58 [1] : vector<128x128xf32> to vector<128xf32>
      %119 = vector.shape_cast %118 : vector<128xf32> to vector<128x1xf32>
      %cst_59 = arith.constant 1.280000e+02 : f32
      %120 = vector.broadcast %cst_59 : f32 to vector<128x1xf32>
      %121 = arith.divf %119, %120 : vector<128x1xf32>
      %cst_60 = arith.constant 1.1920929E-7 : f32
      %122 = vector.broadcast %cst_60 : f32 to vector<128x1xf32>
      %123 = arith.addf %121, %122 : vector<128x1xf32>
      %124 = math.rsqrt %123 : vector<128x1xf32>
      %cst_61 = arith.constant 0.1171875 : f32
      %125 = vector.broadcast %cst_61 : f32 to vector<128x1xf32>
      %126 = arith.mulf %124, %125 : vector<128x1xf32>
      %127 = vector.broadcast %126 : vector<128x1xf32> to vector<128x128xf32>
      %128 = arith.mulf %116, %127 : vector<128x128xf32>
      %129 = arith.mulf %128, %45 : vector<128x128xf32>
      %c64_i32_62 = arith.constant 64 : i32
      %130 = tpu.dynamic_rotate %128 by %c64_i32_62 dim 1 : vector<128x128xf32>, i32 -> vector<128x128xf32>
      %131 = arith.mulf %130, %46 : vector<128x128xf32>
      %132 = arith.addf %129, %131 : vector<128x128xf32>
      %c0_63 = arith.constant 0 : index
      %c384 = arith.constant 384 : index
      %133 = vector.load %arg13[%c0_63, %c384] : memref<128x768xf32, #tpu.memory_space<vmem>>, vector<128x128xf32>
      %134 = arith.mulf %133, %133 : vector<128x128xf32>
      %cst_64 = arith.constant dense<0.000000e+00> : vector<128xf32>
      %135 = vector.multi_reduction <add>, %134, %cst_64 [1] : vector<128x128xf32> to vector<128xf32>
      %136 = vector.shape_cast %135 : vector<128xf32> to vector<128x1xf32>
      %cst_65 = arith.constant 1.280000e+02 : f32
      %137 = vector.broadcast %cst_65 : f32 to vector<128x1xf32>
      %138 = arith.divf %136, %137 : vector<128x1xf32>
      %cst_66 = arith.constant 1.1920929E-7 : f32
      %139 = vector.broadcast %cst_66 : f32 to vector<128x1xf32>
      %140 = arith.addf %138, %139 : vector<128x1xf32>
      %141 = math.rsqrt %140 : vector<128x1xf32>
      %cst_67 = arith.constant 1.000000e+00 : f32
      %142 = vector.broadcast %cst_67 : f32 to vector<128x1xf32>
      %143 = arith.mulf %141, %142 : vector<128x1xf32>
      %144 = vector.broadcast %143 : vector<128x1xf32> to vector<128x128xf32>
      %145 = arith.mulf %133, %144 : vector<128x128xf32>
      %146 = arith.mulf %145, %45 : vector<128x128xf32>
      %c64_i32_68 = arith.constant 64 : i32
      %147 = tpu.dynamic_rotate %145 by %c64_i32_68 dim 1 : vector<128x128xf32>, i32 -> vector<128x128xf32>
      %148 = arith.mulf %147, %46 : vector<128x128xf32>
      %149 = arith.addf %146, %148 : vector<128x128xf32>
      %c0_69 = arith.constant 0 : index
      %c640 = arith.constant 640 : index
      %150 = vector.load %arg13[%c0_69, %c640] : memref<128x768xf32, #tpu.memory_space<vmem>>, vector<128x128xf32>
      %c0_70 = arith.constant 0 : index
      %151 = memref.load %arg2[%c0_70] : memref<2xf32, #tpu.memory_space<smem>>
      %152 = vector.broadcast %151 : f32 to vector<128x128xf32>
      %153 = arith.mulf %152, %150 : vector<128x128xf32>
      %c1_71 = arith.constant 1 : index
      %154 = memref.load %arg2[%c1_71] : memref<2xf32, #tpu.memory_space<smem>>
      %c0_72 = arith.constant 0 : index
      %c0_73 = arith.constant 0 : index
      %c128_74 = arith.constant 128 : index
      %155 = vector.load %arg5[%c0_72, %c0_73, %c128_74] : memref<1x128x256xf32, #tpu.memory_space<vmem>>, vector<1x128x128xf32>
      %156 = vector.shape_cast %155 : vector<1x128x128xf32> to vector<128x128xf32>
      %157 = vector.broadcast %154 : f32 to vector<128x128xf32>
      %158 = arith.mulf %157, %156 : vector<128x128xf32>
      %159 = arith.addf %153, %158 : vector<128x128xf32>
      %160 = arith.truncf %132 : vector<128x128xf32> to vector<128x128xbf16>
      %161 = arith.truncf %149 : vector<128x128xf32> to vector<128x128xbf16>
      %cst_75 = arith.constant dense<0.000000e+00> : vector<128x128xf32>
      %162 = tpu.matmul %160, %161, %cst_75 {dimension_numbers = #tpu.dot_dimension_numbers<[1], [1], [0], [0], [0, 0, 1, 0], [], []>} : vector<128x128xbf16>, vector<128x128xbf16>, vector<128x128xf32> -> vector<128x128xf32>
      %163 = arith.addf %162, %52 : vector<128x128xf32>
      %cst_76 = arith.constant dense<0xFF800000> : vector<128xf32>
      %164 = vector.multi_reduction <maximumf>, %163, %cst_76 [1] : vector<128x128xf32> to vector<128xf32>
      %165 = vector.shape_cast %164 : vector<128xf32> to vector<128x1xf32>
      %166 = vector.broadcast %165 : vector<128x1xf32> to vector<128x128xf32>
      %167 = arith.subf %163, %166 : vector<128x128xf32>
      %168 = math.exp %167 : vector<128x128xf32>
      %cst_77 = arith.constant dense<0.000000e+00> : vector<128xf32>
      %169 = vector.multi_reduction <add>, %168, %cst_77 [1] : vector<128x128xf32> to vector<128xf32>
      %170 = vector.shape_cast %169 : vector<128xf32> to vector<128x1xf32>
      %171 = tpu.reciprocal %170 {approx = true} : vector<128x1xf32> -> vector<128x1xf32>
      %172 = vector.broadcast %171 : vector<128x1xf32> to vector<128x128xf32>
      %173 = arith.mulf %168, %172 : vector<128x128xf32>
      %174 = arith.truncf %173 : vector<128x128xf32> to vector<128x128xbf16>
      %175 = arith.truncf %159 : vector<128x128xf32> to vector<128x128xbf16>
      %cst_78 = arith.constant dense<0.000000e+00> : vector<128x128xf32>
      %176 = tpu.matmul %174, %175, %cst_78 {dimension_numbers = #tpu.dot_dimension_numbers<[1], [0], [0], [1], [0, 0, 1, 1], [], []>} : vector<128x128xbf16>, vector<128x128xbf16>, vector<128x128xf32> -> vector<128x128xf32>
      %177 = arith.truncf %176 : vector<128x128xf32> to vector<128x128xbf16>
      %c0_79 = arith.constant 0 : index
      %c128_80 = arith.constant 128 : index
      %178 = vector.load %arg14[%c0_79, %c128_80] : memref<128x256xbf16, #tpu.memory_space<vmem>>, vector<128x128xbf16>
      tpu.vector_store %arg14[%c0_79, %c128_80], %177 {strides = array<i32>} : memref<128x256xbf16, #tpu.memory_space<vmem>>, vector<128x128xbf16>,
      %c0_81 = arith.constant 0 : index
      %c0_82 = arith.constant 0 : index
      %179 = vector.load %arg14[%c0_81, %c0_82] : memref<128x256xbf16, #tpu.memory_space<vmem>>, vector<128x256xbf16>
      %c0_83 = arith.constant 0 : index
      %c0_84 = arith.constant 0 : index
      %180 = vector.load %arg9[%c0_83, %c0_84] : memref<256x128xbf16, #tpu.memory_space<vmem>>, vector<256x128xbf16>
      %cst_85 = arith.constant dense<0.000000e+00> : vector<128x128xf32>
      %181 = tpu.matmul %179, %180, %cst_85 {dimension_numbers = #tpu.dot_dimension_numbers<[1], [0], [0], [1], [0, 0, 1, 1], [], []>} : vector<128x256xbf16>, vector<256x128xbf16>, vector<128x128xf32> -> vector<128x128xf32>
      %182 = arith.addf %28, %181 : vector<128x128xf32>
      %c0_86 = arith.constant 0 : index
      %c0_87 = arith.constant 0 : index
      %183 = vector.load %arg15[%c0_86, %c0_87] : memref<128x128xf32, #tpu.memory_space<vmem>>, vector<128x128xf32>
      tpu.vector_store %arg15[%c0_86, %c0_87], %182 {strides = array<i32>} : memref<128x128xf32, #tpu.memory_space<vmem>>, vector<128x128xf32>,
      %184 = arith.mulf %182, %182 : vector<128x128xf32>
      %cst_88 = arith.constant dense<0.000000e+00> : vector<128xf32>
      %185 = vector.multi_reduction <add>, %184, %cst_88 [1] : vector<128x128xf32> to vector<128xf32>
      %186 = vector.shape_cast %185 : vector<128xf32> to vector<128x1xf32>
      %cst_89 = arith.constant 1.280000e+02 : f32
      %187 = vector.broadcast %cst_89 : f32 to vector<128x1xf32>
      %188 = arith.divf %186, %187 : vector<128x1xf32>
      %cst_90 = arith.constant 1.1920929E-7 : f32
      %189 = vector.broadcast %cst_90 : f32 to vector<128x1xf32>
      %190 = arith.addf %188, %189 : vector<128x1xf32>
      %191 = math.rsqrt %190 : vector<128x1xf32>
      %cst_91 = arith.constant 1.000000e+00 : f32
      %192 = vector.broadcast %cst_91 : f32 to vector<128x1xf32>
      %193 = arith.mulf %191, %192 : vector<128x1xf32>
      %194 = vector.broadcast %193 : vector<128x1xf32> to vector<128x128xf32>
      %195 = arith.mulf %182, %194 : vector<128x128xf32>
      %196 = arith.truncf %195 : vector<128x128xf32> to vector<128x128xbf16>
      %c0_92 = arith.constant 0 : index
      %c0_93 = arith.constant 0 : index
      %197 = vector.load %arg16[%c0_92, %c0_93] : memref<128x128xbf16, #tpu.memory_space<vmem>>, vector<128x128xbf16>
      tpu.vector_store %arg16[%c0_92, %c0_93], %196 {strides = array<i32>} : memref<128x128xbf16, #tpu.memory_space<vmem>>, vector<128x128xbf16>,
    } else {
    }
    %c0 = arith.constant 0 : index
    %c0_1 = arith.constant 0 : index
    %3 = vector.load %arg16[%c0, %c0_1] : memref<128x128xbf16, #tpu.memory_space<vmem>>, vector<128x128xbf16>
    %c0_2 = arith.constant 0 : index
    %c0_3 = arith.constant 0 : index
    %4 = vector.load %arg10[%c0_2, %c0_3] : memref<128x256xbf16, #tpu.memory_space<vmem>>, vector<128x256xbf16>
    %cst = arith.constant dense<0.000000e+00> : vector<128x256xf32>
    %5 = tpu.matmul %3, %4, %cst {dimension_numbers = #tpu.dot_dimension_numbers<[1], [0], [0], [1], [0, 0, 1, 1], [], []>} : vector<128x128xbf16>, vector<128x256xbf16>, vector<128x256xf32> -> vector<128x256xf32>
    %cst_4 = arith.constant 0.000000e+00 : f32
    %6 = vector.broadcast %cst_4 : f32 to vector<128x256xf32>
    %7 = arith.maximumf %5, %6 : vector<128x256xf32>
    %8 = arith.mulf %7, %7 : vector<128x256xf32>
    %9 = arith.truncf %8 : vector<128x256xf32> to vector<128x256xbf16>
    %c0_5 = arith.constant 0 : index
    %c0_6 = arith.constant 0 : index
    %10 = vector.load %arg11[%c0_5, %c0_6] : memref<256x128xbf16, #tpu.memory_space<vmem>>, vector<256x128xbf16>
    %cst_7 = arith.constant dense<0.000000e+00> : vector<128x128xf32>
    %11 = tpu.matmul %9, %10, %cst_7 {dimension_numbers = #tpu.dot_dimension_numbers<[1], [0], [0], [1], [0, 0, 1, 1], [], []>} : vector<128x256xbf16>, vector<256x128xbf16>, vector<128x128xf32> -> vector<128x128xf32>
    %c1_i32 = arith.constant 1 : i32
    %12 = arith.cmpi ne, %arg0, %c1_i32 : i32
    %13 = arith.extui %12 : i1 to i32
    %c0_i32_8 = arith.constant 0 : i32
    %14 = arith.cmpi ne, %13, %c0_i32_8 : i32
    scf.if %14 {
      %c0_11 = arith.constant 0 : index
      %c0_12 = arith.constant 0 : index
      %18 = vector.load %arg15[%c0_11, %c0_12] : memref<128x128xf32, #tpu.memory_space<vmem>>, vector<128x128xf32>
      %19 = arith.addf %18, %11 : vector<128x128xf32>
      %c0_13 = arith.constant 0 : index
      %c0_14 = arith.constant 0 : index
      %20 = vector.load %arg15[%c0_13, %c0_14] : memref<128x128xf32, #tpu.memory_space<vmem>>, vector<128x128xf32>
      tpu.vector_store %arg15[%c0_13, %c0_14], %19 {strides = array<i32>} : memref<128x128xf32, #tpu.memory_space<vmem>>, vector<128x128xf32>,
    } else {
    }
    %c1_i32_9 = arith.constant 1 : i32
    %15 = arith.cmpi eq, %arg0, %c1_i32_9 : i32
    %16 = arith.extui %15 : i1 to i32
    %c0_i32_10 = arith.constant 0 : i32
    %17 = arith.cmpi ne, %16, %c0_i32_10 : i32
    scf.if %17 {
      %c0_11 = arith.constant 0 : index
      %c0_12 = arith.constant 0 : index
      %18 = vector.load %arg15[%c0_11, %c0_12] : memref<128x128xf32, #tpu.memory_space<vmem>>, vector<128x128xf32>
      %19 = arith.addf %18, %11 : vector<128x128xf32>
      %c0_13 = arith.constant 0 : index
      %c0_14 = arith.constant 0 : index
      %c0_15 = arith.constant 0 : index
      %20 = vector.load %arg12[%c0_13, %c0_14, %c0_15] : memref<1x128x128xf32, #tpu.memory_space<vmem>>, vector<1x128x128xf32>
      %21 = vector.shape_cast %20 : vector<1x128x128xf32> to vector<128x128xf32>
      %22 = vector.shape_cast %19 : vector<128x128xf32> to vector<1x128x128xf32>
      tpu.vector_store %arg12[%c0_13, %c0_14, %c0_15], %22 {strides = array<i32>} : memref<1x128x128xf32, #tpu.memory_space<vmem>>, vector<1x128x128xf32>,
    } else {
    }
    return
  }
  func.func @transform_0(%arg0: i32) -> i32 {
    %c0_i32 = arith.constant 0 : i32
    %c0_i32_0 = arith.constant 0 : i32
    return %c0_i32 : i32
  }
  func.func @transform_1(%arg0: i32) -> i32 {
    %c0_i32 = arith.constant 0 : i32
    %c0_i32_0 = arith.constant 0 : i32
    return %c0_i32 : i32
  }
  func.func @transform_2(%arg0: i32) -> (i32, i32, i32) {
    %c0_i32 = arith.constant 0 : i32
    %c0_i32_0 = arith.constant 0 : i32
    %c0_i32_1 = arith.constant 0 : i32
    %c0_i32_2 = arith.constant 0 : i32
    return %c0_i32, %c0_i32_0, %c0_i32_1 : i32, i32, i32
  }
  func.func @transform_3(%arg0: i32) -> (i32, i32, i32) {
    %c0_i32 = arith.constant 0 : i32
    %c0_i32_0 = arith.constant 0 : i32
    %c0_i32_1 = arith.constant 0 : i32
    %c0_i32_2 = arith.constant 0 : i32
    return %c0_i32, %c0_i32_0, %c0_i32_1 : i32, i32, i32
  }
  func.func @transform_4(%arg0: i32) -> (i32, i32, i32) {
    %c0_i32 = arith.constant 0 : i32
    %c0_i32_0 = arith.constant 0 : i32
    %c0_i32_1 = arith.constant 0 : i32
    %c0_i32_2 = arith.constant 0 : i32
    return %c0_i32, %c0_i32_0, %c0_i32_1 : i32, i32, i32
  }
  func.func @transform_5(%arg0: i32) -> (i32, i32) {
    %c0_i32 = arith.constant 0 : i32
    %c0_i32_0 = arith.constant 0 : i32
    %c0_i32_1 = arith.constant 0 : i32
    return %c0_i32, %c0_i32_0 : i32, i32
  }
  func.func @transform_6(%arg0: i32) -> (i32, i32) {
    %c0_i32 = arith.constant 0 : i32
    %c0_i32_0 = arith.constant 0 : i32
    %c0_i32_1 = arith.constant 0 : i32
    return %c0_i32, %c0_i32_0 : i32, i32
  }
  func.func @transform_7(%arg0: i32) -> (i32, i32) {
    %c0_i32 = arith.constant 0 : i32
    %c0_i32_0 = arith.constant 0 : i32
    %c0_i32_1 = arith.constant 0 : i32
    return %c0_i32, %c0_i32_0 : i32, i32
  }
  func.func @transform_8(%arg0: i32) -> (i32, i32) {
    %c0_i32 = arith.constant 0 : i32
    %c0_i32_0 = arith.constant 0 : i32
    %c0_i32_1 = arith.constant 0 : i32
    return %c0_i32, %c0_i32_0 : i32, i32
  }
  func.func @transform_9(%arg0: i32) -> (i32, i32) {
    %c0_i32 = arith.constant 0 : i32
    %c0_i32_0 = arith.constant 0 : i32
    return %c0_i32, %arg0 : i32, i32
  }
  func.func @transform_10(%arg0: i32) -> (i32, i32) {
    %c0_i32 = arith.constant 0 : i32
    %c0_i32_0 = arith.constant 0 : i32
    return %arg0, %c0_i32 : i32, i32
  }
  func.func @transform_11(%arg0: i32) -> (i32, i32, i32) {
    %c0_i32 = arith.constant 0 : i32
    %c0_i32_0 = arith.constant 0 : i32
    %c0_i32_1 = arith.constant 0 : i32
    %c0_i32_2 = arith.constant 0 : i32
    return %c0_i32, %c0_i32_0, %c0_i32_1 : i32, i32, i32
  }
}

</mosaic_0001>

<llo_original>
// kernel: tpu_custom_call.1
$region0: #{tpu_custom_call.1}
  #allocation0 [shape = 'u32[]', space=smem, size = 0x4, offset = 0x4, fixed_abs, tag = 'smem constant byte address 0x4 - core index']
  #allocation1 [shape = 'u32[144,128]{1,0:T(1,128)}', space=vmem, size = 0x12000, scoped, tag = 'internal scratch']
  #allocation2 [shape = 'f32[128,768]{1,0:T(8,128)}', space=vmem, size = 0x60000, scoped, tag = 'scratch operand']
  #allocation3 [shape = 'bf16[128,256]{1,0:T(16,128)(2,1)}', space=vmem, size = 0x10000, scoped, tag = 'scratch operand']
  #allocation4 [shape = 'f32[128,128]{1,0:T(8,128)}', space=vmem, size = 0x10000, scoped, tag = 'scratch operand']
  #allocation5 [shape = 'bf16[128,128]{1,0:T(16,128)(2,1)}', space=vmem, size = 0x8000, scoped, tag = 'scratch operand']
  %s0 = inlined_call_operand.hbm [shape: f32[2], index: 0, kind: input, shape index: {}]
  %s1 = inlined_call_operand.vmem [shape: f32[2], index: 1, kind: input, shape index: {}]
  %s2 = inlined_call_operand.hbm [shape: f32[1,128,128], index: 2, kind: input, shape index: {}]
  %s3 = inlined_call_operand.hbm [shape: f32[1,128,128], index: 3, kind: input, shape index: {}]
  %s4 = inlined_call_operand.hbm [shape: f32[1,128,256], index: 4, kind: input, shape index: {}]
  %s5 = inlined_call_operand.hbm [shape: f32[128,128], index: 5, kind: input, shape index: {}]
  %s6 = inlined_call_operand.hbm [shape: f32[128,128], index: 6, kind: input, shape index: {}]
  %s7 = inlined_call_operand.hbm [shape: bf16[128,768], index: 7, kind: input, shape index: {}]
  %s8 = inlined_call_operand.hbm [shape: bf16[256,128], index: 8, kind: input, shape index: {}]
  %s9 = inlined_call_operand.hbm [shape: bf16[128,512], index: 9, kind: input, shape index: {}]
  %s10 = inlined_call_operand.hbm [shape: bf16[512,128], index: 10, kind: input, shape index: {}]
  %s11 = inlined_call_operand.hbm [shape: f32[1,128,128], index: 11, kind: output, shape index: {}]
  %s12 = sld [smem:[#allocation0]]
  $region133: #{tpu_custom_call.1} parent=0
    _
  %s14 = ssub.s32 1, %s12
  %s15 = scalar_select 0, %s14, %s12
  $region1: #{tpu_custom_call.1} parent=0
    #allocation6 [shape = 'u8[512]{0}', space=smem, size = 0x200, scoped, tag = 'input window, operand 0, single buffered']
    #allocation7 [shape = 's32[2]{0}', space=sflag, size = 0x8, scoped, tag = 'scoped memory for tpu_custom_call.1']
    #allocation8 [shape = 's32[2]{0}', space=sflag, size = 0x8, scoped, tag = 'scoped memory for tpu_custom_call.1']
    #allocation9 [shape = 's32[2]{0}', space=sflag, size = 0x8, scoped, tag = 'scoped memory for tpu_custom_call.1']
    #allocation10 [shape = 's32[2]{0}', space=sflag, size = 0x8, scoped, tag = 'scoped memory for tpu_custom_call.1']
    #allocation11 [shape = 'u8[512]{0}', space=smem, size = 0x200, scoped, tag = 'input window, operand 1, single buffered']
    #allocation12 [shape = 'u8[65536]{0}', space=vmem, size = 0x10000, scoped, tag = 'input window, operand 2, single buffered']
    #allocation13 [shape = 'u8[65536]{0}', space=vmem, size = 0x10000, scoped, tag = 'input window, operand 3, single buffered']
    #allocation14 [shape = 's32[1]{0}', space=sflag, size = 0x4, scoped, tag = 'scoped memory for tpu_custom_call.1']
    #allocation15 [shape = 'u8[131072]{0}', space=vmem, size = 0x20000, scoped, tag = 'input window, operand 4, single buffered']
    #allocation16 [shape = 'u8[65536]{0}', space=vmem, size = 0x10000, scoped, tag = 'input window, operand 5, single buffered']
    #allocation17 [shape = 's32[1]{0}', space=sflag, size = 0x4, scoped, tag = 'scoped memory for tpu_custom_call.1']
    #allocation18 [shape = 'u8[65536]{0}', space=vmem, size = 0x10000, scoped, tag = 'input window, operand 6, single buffered']
    #allocation19 [shape = 'u8[196608]{0}', space=vmem, size = 0x30000, scoped, tag = 'input window, operand 7, single buffered']
    #allocation20 [shape = 's32[1]{0}', space=sflag, size = 0x4, scoped, tag = 'scoped memory for tpu_custom_call.1']
    #allocation21 [shape = 'u8[65536]{0}', space=vmem, size = 0x10000, scoped, tag = 'input window, operand 8, single buffered']
    #allocation22 [shape = 'u8[131072]{0}', space=vmem, size = 0x20000, scoped, tag = 'input window, operand 9']
    #allocation23 [shape = 's32[2]{0}', space=sflag, size = 0x8, scoped, tag = 'scoped memory for tpu_custom_call.1']
    #allocation24 [shape = 'u8[131072]{0}', space=vmem, size = 0x20000, scoped, tag = 'input window, operand 10']
    #allocation25 [shape = 'u8[65536]{0}', space=vmem, size = 0x10000, scoped, tag = 'output window, operand 0, single buffered']
    %16 = vsyncpa [#allocation9], 0
    %17 = vsyncpa [#allocation10], 0
    %18 = vsyncpa [#allocation7], 0
    %19 = vsyncpa [#allocation14], 0
    %20 = vsyncpa [#allocation17], 0
    %21 = vsyncpa [#allocation20], 0
    %22 = vsyncpa [#allocation23], 0
    %s23 = scalar_lea.sflag [#allocation23], 1
    %24 = vsyncpa %s23, 0
    %25 = vsyncpa [#allocation8], 0
    loop: start=0, step=1, limit=4
    $region2: #{tpu_custom_call.1} parent=1 // loop_pre_header
      _
    $region3: #{tpu_custom_call.1} parent=1 // loop_header
      %s27 = sphi 0, %s31
      %p28 = scmp.ge.s32.totalorder %s27, 4
      %s35 = sphi 0, %s35
      %s37 = sphi 0, %s35
      %s38 = sphi 0, %s37
      %s52 = sphi 0, %s38
      %s56 = sphi 0, %s56
      %s58 = sphi 0, %s56
      %s59 = sphi 0, %s58
      %s73 = sphi 0, %s59
      %s77 = sphi 0, %s77
      %s79 = sphi 0, %s77
      %s80 = sphi 0, %s79
      %s94 = sphi 0, %s80
      %s98 = sphi 0, %s98
      %s100 = sphi 0, %s98
      %s101 = sphi 0, %s100
      %s115 = sphi 0, %s101
      %s119 = sphi 0, %s119
      %s121 = sphi 0, %s119
      %s122 = sphi 0, %s121
      %s136 = sphi 0, %s122
      %s140 = sphi 0, %s140
      %s142 = sphi 0, %s140
      %s143 = sphi 0, %s142
      %s157 = sphi 0, %s143
      %s161 = sphi 0, %s161
      %s163 = sphi 0, %s161
      %s164 = sphi 0, %s163
      %s178 = sphi 0, %s164
      %s182 = sphi 0, %s182
      %s184 = sphi 0, %s182
      %s185 = sphi 0, %s184
      %s199 = sphi 0, %s185
      %s203 = sphi 0, %s203
      %s205 = sphi 0, %s203
      %s206 = sphi 0, %s205
      %s220 = sphi 0, %s206
      %s226 = sphi 0, %s228
      %s229 = sphi 0, %s226
      %s230 = sphi 0, %s229
      %s246 = sphi 0, %s230
      %s252 = sphi 0, %s254
      %s255 = sphi 0, %s252
      %s256 = sphi 0, %s255
      %s272 = sphi 0, %s256
      %s276 = sphi 0, %s276
      %s278 = sphi 0, %s276
      %s279 = sphi 0, %s278
      %s293 = sphi 0, %s279
    $region4: #{tpu_custom_call.1} parent=1 // loop_header_branch
      %30 = sbr.rel (%p28) target = $region8
    $region5: #{tpu_custom_call.1} parent=1 // loop_body
      %s32 = ssub.s32 %s27, 1
      %s33 = ssub.s32 %s27, 2
      %s34 = sadd.s32 %s27, 1
      %s36 = sadd.s32 %s35, 1
      %p39 = scmp.eq.s32.totalorder %s27, 1
      %p40 = scmp.ne.s32.totalorder %s35, %s37
      %p41 = scmp.eq.s32.totalorder %s27, 0
      %p42 = por %p40, %p41
      %p43 = scmp.ne.s32.totalorder %s35, %s37
      %p44 = scmp.eq.s32.totalorder %s32, 1
      %p45 = por %p43, %p44
      %p46 = scmp.ne.s32.totalorder %s37, %s38
      %p47 = scmp.eq.s32.totalorder %s32, 0
      %p48 = por %p46, %p47
      %p49 = scmp.ne.s32.totalorder %s37, %s38
      %p50 = scmp.eq.s32.totalorder %s33, 1
      %p51 = por %p49, %p50
      %p53 = scmp.ne.s32.totalorder %s38, %s52
      %p54 = scmp.eq.s32.totalorder %s33, 0
      %p55 = por %p53, %p54
      %s57 = sadd.s32 %s56, 1
      %p60 = scmp.eq.s32.totalorder %s27, 1
      %p61 = scmp.ne.s32.totalorder %s56, %s58
      %p62 = scmp.eq.s32.totalorder %s27, 0
      %p63 = por %p61, %p62
      %p64 = scmp.ne.s32.totalorder %s56, %s58
      %p65 = scmp.eq.s32.totalorder %s32, 1
      %p66 = por %p64, %p65
      %p67 = scmp.ne.s32.totalorder %s58, %s59
      %p68 = scmp.eq.s32.totalorder %s32, 0
      %p69 = por %p67, %p68
      %p70 = scmp.ne.s32.totalorder %s58, %s59
      %p71 = scmp.eq.s32.totalorder %s33, 1
      %p72 = por %p70, %p71
      %p74 = scmp.ne.s32.totalorder %s59, %s73
      %p75 = scmp.eq.s32.totalorder %s33, 0
      %p76 = por %p74, %p75
      %s78 = sadd.s32 %s77, 1
      %p81 = scmp.eq.s32.totalorder %s27, 1
      %p82 = scmp.ne.s32.totalorder %s77, %s79
      %p83 = scmp.eq.s32.totalorder %s27, 0
      %p84 = por %p82, %p83
      %p85 = scmp.ne.s32.totalorder %s77, %s79
      %p86 = scmp.eq.s32.totalorder %s32, 1
      %p87 = por %p85, %p86
      %p88 = scmp.ne.s32.totalorder %s79, %s80
      %p89 = scmp.eq.s32.totalorder %s32, 0
      %p90 = por %p88, %p89
      %p91 = scmp.ne.s32.totalorder %s79, %s80
      %p92 = scmp.eq.s32.totalorder %s33, 1
      %p93 = por %p91, %p92
      %p95 = scmp.ne.s32.totalorder %s80, %s94
      %p96 = scmp.eq.s32.totalorder %s33, 0
      %p97 = por %p95, %p96
      %s99 = sadd.s32 %s98, 1
      %p102 = scmp.eq.s32.totalorder %s27, 1
      %p103 = scmp.ne.s32.totalorder %s98, %s100
      %p104 = scmp.eq.s32.totalorder %s27, 0
      %p105 = por %p103, %p104
      %p106 = scmp.ne.s32.totalorder %s98, %s100
      %p107 = scmp.eq.s32.totalorder %s32, 1
      %p108 = por %p106, %p107
      %p109 = scmp.ne.s32.totalorder %s100, %s101
      %p110 = scmp.eq.s32.totalorder %s32, 0
      %p111 = por %p109, %p110
      %p112 = scmp.ne.s32.totalorder %s100, %s101
      %p113 = scmp.eq.s32.totalorder %s33, 1
      %p114 = por %p112, %p113
      %p116 = scmp.ne.s32.totalorder %s101, %s115
      %p117 = scmp.eq.s32.totalorder %s33, 0
      %p118 = por %p116, %p117
      %s120 = sadd.s32 %s119, 1
      %p123 = scmp.eq.s32.totalorder %s27, 1
      %p124 = scmp.ne.s32.totalorder %s119, %s121
      %p125 = scmp.eq.s32.totalorder %s27, 0
      %p126 = por %p124, %p125
      %p127 = scmp.ne.s32.totalorder %s119, %s121
      %p128 = scmp.eq.s32.totalorder %s32, 1
      %p129 = por %p127, %p128
      %p130 = scmp.ne.s32.totalorder %s121, %s122
      %p131 = scmp.eq.s32.totalorder %s32, 0
      %p132 = por %p130, %p131
      %p133 = scmp.ne.s32.totalorder %s121, %s122
      %p134 = scmp.eq.s32.totalorder %s33, 1
      %p135 = por %p133, %p134
      %p137 = scmp.ne.s32.totalorder %s122, %s136
      %p138 = scmp.eq.s32.totalorder %s33, 0
      %p139 = por %p137, %p138
      %s141 = sadd.s32 %s140, 1
      %p144 = scmp.eq.s32.totalorder %s27, 1
      %p145 = scmp.ne.s32.totalorder %s140, %s142
      %p146 = scmp.eq.s32.totalorder %s27, 0
      %p147 = por %p145, %p146
      %p148 = scmp.ne.s32.totalorder %s140, %s142
      %p149 = scmp.eq.s32.totalorder %s32, 1
      %p150 = por %p148, %p149
      %p151 = scmp.ne.s32.totalorder %s142, %s143
      %p152 = scmp.eq.s32.totalorder %s32, 0
      %p153 = por %p151, %p152
      %p154 = scmp.ne.s32.totalorder %s142, %s143
      %p155 = scmp.eq.s32.totalorder %s33, 1
      %p156 = por %p154, %p155
      %p158 = scmp.ne.s32.totalorder %s143, %s157
      %p159 = scmp.eq.s32.totalorder %s33, 0
      %p160 = por %p158, %p159
      %s162 = sadd.s32 %s161, 1
      %p165 = scmp.eq.s32.totalorder %s27, 1
      %p166 = scmp.ne.s32.totalorder %s161, %s163
      %p167 = scmp.eq.s32.totalorder %s27, 0
      %p168 = por %p166, %p167
      %p169 = scmp.ne.s32.totalorder %s161, %s163
      %p170 = scmp.eq.s32.totalorder %s32, 1
      %p171 = por %p169, %p170
      %p172 = scmp.ne.s32.totalorder %s163, %s164
      %p173 = scmp.eq.s32.totalorder %s32, 0
      %p174 = por %p172, %p173
      %p175 = scmp.ne.s32.totalorder %s163, %s164
      %p176 = scmp.eq.s32.totalorder %s33, 1
      %p177 = por %p175, %p176
      %p179 = scmp.ne.s32.totalorder %s164, %s178
      %p180 = scmp.eq.s32.totalorder %s33, 0
      %p181 = por %p179, %p180
      %s183 = sadd.s32 %s182, 1
      %p186 = scmp.eq.s32.totalorder %s27, 1
      %p187 = scmp.ne.s32.totalorder %s182, %s184
      %p188 = scmp.eq.s32.totalorder %s27, 0
      %p189 = por %p187, %p188
      %p190 = scmp.ne.s32.totalorder %s182, %s184
      %p191 = scmp.eq.s32.totalorder %s32, 1
      %p192 = por %p190, %p191
      %p193 = scmp.ne.s32.totalorder %s184, %s185
      %p194 = scmp.eq.s32.totalorder %s32, 0
      %p195 = por %p193, %p194
      %p196 = scmp.ne.s32.totalorder %s184, %s185
      %p197 = scmp.eq.s32.totalorder %s33, 1
      %p198 = por %p196, %p197
      %p200 = scmp.ne.s32.totalorder %s185, %s199
      %p201 = scmp.eq.s32.totalorder %s33, 0
      %p202 = por %p200, %p201
      %s204 = sadd.s32 %s203, 1
      %p207 = scmp.eq.s32.totalorder %s27, 1
      %p208 = scmp.ne.s32.totalorder %s203, %s205
      %p209 = scmp.eq.s32.totalorder %s27, 0
      %p210 = por %p208, %p209
      %p211 = scmp.ne.s32.totalorder %s203, %s205
      %p212 = scmp.eq.s32.totalorder %s32, 1
      %p213 = por %p211, %p212
      %p214 = scmp.ne.s32.totalorder %s205, %s206
      %p215 = scmp.eq.s32.totalorder %s32, 0
      %p216 = por %p214, %p215
      %p217 = scmp.ne.s32.totalorder %s205, %s206
      %p218 = scmp.eq.s32.totalorder %s33, 1
      %p219 = por %p217, %p218
      %p221 = scmp.ne.s32.totalorder %s206, %s220
      %p222 = scmp.eq.s32.totalorder %s33, 0
      %p223 = por %p221, %p222
      %s224 = ssub.s32 %s27, %s34
      %p225 = scmp.eq.s32.totalorder %s224, 0
      %s227 = sadd.s32 %s226, 1
      %s228 = scalar_select %p225, %s226, %s227
      %p231 = pneg %p225
      %p232 = scmp.eq.s32.totalorder %s27, 1
      %p233 = por %p231, %p232
      %p234 = scmp.ne.s32.totalorder %s226, %s229
      %p235 = scmp.eq.s32.totalorder %s27, 0
      %p236 = por %p234, %p235
      %p237 = scmp.ne.s32.totalorder %s226, %s229
      %p238 = scmp.eq.s32.totalorder %s32, 1
      %p239 = por %p237, %p238
      %p240 = scmp.ne.s32.totalorder %s229, %s230
      %p241 = scmp.eq.s32.totalorder %s32, 0
      %p242 = por %p240, %p241
      %p243 = scmp.ne.s32.totalorder %s229, %s230
      %p244 = scmp.eq.s32.totalorder %s33, 1
      %p245 = por %p243, %p244
      %p247 = scmp.ne.s32.totalorder %s230, %s246
      %p248 = scmp.eq.s32.totalorder %s33, 0
      %p249 = por %p247, %p248
      %s250 = ssub.s32 %s27, %s34
      %p251 = scmp.eq.s32.totalorder %s250, 0
      %s253 = sadd.s32 %s252, 1
      %s254 = scalar_select %p251, %s252, %s253
      %p257 = pneg %p251
      %p258 = scmp.eq.s32.totalorder %s27, 1
      %p259 = por %p257, %p258
      %p260 = scmp.ne.s32.totalorder %s252, %s255
      %p261 = scmp.eq.s32.totalorder %s27, 0
      %p262 = por %p260, %p261
      %p263 = scmp.ne.s32.totalorder %s252, %s255
      %p264 = scmp.eq.s32.totalorder %s32, 1
      %p265 = por %p263, %p264
      %p266 = scmp.ne.s32.totalorder %s255, %s256
      %p267 = scmp.eq.s32.totalorder %s32, 0
      %p268 = por %p266, %p267
      %p269 = scmp.ne.s32.totalorder %s255, %s256
      %p270 = scmp.eq.s32.totalorder %s33, 1
      %p271 = por %p269, %p270
      %p273 = scmp.ne.s32.totalorder %s256, %s272
      %p274 = scmp.eq.s32.totalorder %s33, 0
      %p275 = por %p273, %p274
      %s277 = sadd.s32 %s276, 1
      %p280 = scmp.eq.s32.totalorder %s27, 1
      %p281 = scmp.ne.s32.totalorder %s276, %s278
      %p282 = scmp.eq.s32.totalorder %s27, 0
      %p283 = por %p281, %p282
      %p284 = scmp.ne.s32.totalorder %s276, %s278
      %p285 = scmp.eq.s32.totalorder %s32, 1
      %p286 = por %p284, %p285
      %p287 = scmp.ne.s32.totalorder %s278, %s279
      %p288 = scmp.eq.s32.totalorder %s32, 0
      %p289 = por %p287, %p288
      %p290 = scmp.ne.s32.totalorder %s278, %s279
      %p291 = scmp.eq.s32.totalorder %s33, 1
      %p292 = por %p290, %p291
      %p294 = scmp.ne.s32.totalorder %s279, %s293
      %p295 = scmp.eq.s32.totalorder %s33, 0
      %p296 = por %p294, %p295
      %p297 = scmp.le.s32.totalorder 1, %s27
      %p298 = scmp.lt.s32.totalorder %s27, 3
      %p299 = pnand %p297, %p298
      %p300 = pneg %p299
      // Predicated region
      $region9: #{tpu_custom_call.1} parent=5 // pred_check
        _
      $region10: #{tpu_custom_call.1} parent=5 // pred_check_branch
        %302 = sbr.rel (%p299) target = $region12
      $region11: #{tpu_custom_call.1} parent=5 // pred_region
        %s303 = ssub.s32 %s27, 1
        // Predicated region
        $region13: #{tpu_custom_call.1} parent=11 // pred_check
          %p304 = pneg %p48
        $region14: #{tpu_custom_call.1} parent=11 // pred_check_branch
          %306 = sbr.rel (%p304) target = $region16
        $region15: #{tpu_custom_call.1} parent=11 // pred_region
          %s308 = ssub.s32 16, 16
          %309 = vsyncadd [#allocation9], %s308
          %312 = dma.hbm_to_smem %s0, 16, [#allocation6], [#allocation9]
        $region16: #{tpu_custom_call.1} parent=11 // pred_fallthru
          _
        // Predicated region
        $region17: #{tpu_custom_call.1} parent=11 // pred_check
          %p313 = pneg %p69
        $region18: #{tpu_custom_call.1} parent=11 // pred_check_branch
          %315 = sbr.rel (%p313) target = $region20
        $region19: #{tpu_custom_call.1} parent=11 // pred_region
          %s317 = ssub.s32 16, 16
          %318 = vsyncadd [#allocation10], %s317
          %s320 = sshll.u32 %s1, 4
          %s321 = int_to_ptr.vmem [resolvable:$true] %s320
          %323 = dma.vmem_to_smem %s321, 16, [#allocation11], [#allocation10]
        $region20: #{tpu_custom_call.1} parent=11 // pred_fallthru
          _
        // Predicated region
        $region21: #{tpu_custom_call.1} parent=11 // pred_check
          %p324 = pneg %p90
        $region22: #{tpu_custom_call.1} parent=11 // pred_check_branch
          %326 = sbr.rel (%p324) target = $region24
        $region23: #{tpu_custom_call.1} parent=11 // pred_region
          %s328 = ssub.s32 2048, 2048
          %329 = vsyncadd [#allocation7], %s328
          %s330 = sshll.u32 [#allocation12], 4
          %s331 = int_to_ptr.vmem [resolvable:$true] %s330
          %336 = dma.hbm_to_vmem [thread:$0]  %s2, 2048, %s331, [#allocation7], 128, 128, 8
        $region24: #{tpu_custom_call.1} parent=11 // pred_fallthru
          _
        // Predicated region
        $region25: #{tpu_custom_call.1} parent=11 // pred_check
          %p337 = pneg %p111
        $region26: #{tpu_custom_call.1} parent=11 // pred_check_branch
          %339 = sbr.rel (%p337) target = $region28
        $region27: #{tpu_custom_call.1} parent=11 // pred_region
          %s341 = ssub.s32 2048, 2048
          %342 = vsyncadd [#allocation14], %s341
          %s343 = sshll.u32 [#allocation13], 4
          %s344 = int_to_ptr.vmem [resolvable:$true] %s343
          %349 = dma.hbm_to_vmem [thread:$0]  %s3, 2048, %s344, [#allocation14], 128, 128, 8
        $region28: #{tpu_custom_call.1} parent=11 // pred_fallthru
          _
        // Predicated region
        $region29: #{tpu_custom_call.1} parent=11 // pred_check
          %p350 = pneg %p132
        $region30: #{tpu_custom_call.1} parent=11 // pred_check_branch
          %352 = sbr.rel (%p350) target = $region32
        $region31: #{tpu_custom_call.1} parent=11 // pred_region
          %s354 = ssub.s32 4096, 4096
          %355 = vsyncadd [#allocation14], %s354
          %s356 = sshll.u32 [#allocation15], 4
          %s357 = int_to_ptr.vmem [resolvable:$true] %s356
          %362 = dma.hbm_to_vmem [thread:$0]  %s4, 4096, %s357, [#allocation14], 256, 256, 16
        $region32: #{tpu_custom_call.1} parent=11 // pred_fallthru
          _
        // Predicated region
        $region33: #{tpu_custom_call.1} parent=11 // pred_check
          %p363 = pneg %p153
        $region34: #{tpu_custom_call.1} parent=11 // pred_check_branch
          %365 = sbr.rel (%p363) target = $region36
        $region35: #{tpu_custom_call.1} parent=11 // pred_region
          %s367 = ssub.s32 2048, 2048
          %368 = vsyncadd [#allocation17], %s367
          %s369 = sshll.u32 [#allocation16], 4
          %s370 = int_to_ptr.vmem [resolvable:$true] %s369
          %375 = dma.hbm_to_vmem [thread:$0]  %s5, 2048, %s370, [#allocation17], 128, 128, 8
        $region36: #{tpu_custom_call.1} parent=11 // pred_fallthru
          _
        // Predicated region
        $region37: #{tpu_custom_call.1} parent=11 // pred_check
          %p376 = pneg %p174
        $region38: #{tpu_custom_call.1} parent=11 // pred_check_branch
          %378 = sbr.rel (%p376) target = $region40
        $region39: #{tpu_custom_call.1} parent=11 // pred_region
          %s380 = ssub.s32 2048, 2048
          %381 = vsyncadd [#allocation17], %s380
          %s382 = sshll.u32 [#allocation18], 4
          %s383 = int_to_ptr.vmem [resolvable:$true] %s382
          %388 = dma.hbm_to_vmem [thread:$0]  %s6, 2048, %s383, [#allocation17], 128, 128, 8
        $region40: #{tpu_custom_call.1} parent=11 // pred_fallthru
          _
        // Predicated region
        $region41: #{tpu_custom_call.1} parent=11 // pred_check
          %p389 = pneg %p195
        $region42: #{tpu_custom_call.1} parent=11 // pred_check_branch
          %391 = sbr.rel (%p389) target = $region44
        $region43: #{tpu_custom_call.1} parent=11 // pred_region
          %s393 = ssub.s32 6144, 6144
          %394 = vsyncadd [#allocation20], %s393
          %s395 = sshll.u32 [#allocation19], 4
          %s396 = int_to_ptr.vmem [resolvable:$true] %s395
          %401 = dma.hbm_to_vmem [thread:$0]  %s7, 6144, %s396, [#allocation20], 384, 384, 24
        $region44: #{tpu_custom_call.1} parent=11 // pred_fallthru
          _
        // Predicated region
        $region45: #{tpu_custom_call.1} parent=11 // pred_check
          %p402 = pneg %p216
        $region46: #{tpu_custom_call.1} parent=11 // pred_check_branch
          %404 = sbr.rel (%p402) target = $region48
        $region47: #{tpu_custom_call.1} parent=11 // pred_region
          %s406 = ssub.s32 2048, 2048
          %407 = vsyncadd [#allocation20], %s406
          %s408 = sshll.u32 [#allocation21], 4
          %s409 = int_to_ptr.vmem [resolvable:$true] %s408
          %414 = dma.hbm_to_vmem [thread:$0]  %s8, 2048, %s409, [#allocation20], 64, 64, 4
        $region48: #{tpu_custom_call.1} parent=11 // pred_fallthru
          _
      $region12: #{tpu_custom_call.1} parent=5 // pred_fallthru
        _
      %p415 = scmp.lt.s32.totalorder %s27, 2
      // Predicated region
      $region49: #{tpu_custom_call.1} parent=5 // pred_check
        %p416 = pneg %p415
      $region50: #{tpu_custom_call.1} parent=5 // pred_check_branch
        %418 = sbr.rel (%p416) target = $region52
      $region51: #{tpu_custom_call.1} parent=5 // pred_region
        // Predicated region
        $region53: #{tpu_custom_call.1} parent=51 // pred_check
          %p419 = pneg %p236
        $region54: #{tpu_custom_call.1} parent=51 // pred_check_branch
          %421 = sbr.rel (%p419) target = $region56
        $region55: #{tpu_custom_call.1} parent=51 // pred_region
          %s422 = sand.u32 %s27, 1
          %s423 = scalar_lea.sflag [#allocation23], %s422
          %s424 = sand.u32 %s226, 1
          %s425 = smul.addr %s424, 128
          %s426 = scalar_lea.vmem [#allocation22], %s425
          %s427 = smul.u32 2, %s27
          %s429 = ssub.s32 2048, 2048
          %430 = vsyncadd %s423, %s429
          %s431 = smul.addr %s427, 64
          %s432 = scalar_lea.hbm %s9, %s431
          %s433 = sshll.u32 %s426, 4
          %s434 = int_to_ptr.vmem [resolvable:$true] %s433
          %439 = dma.hbm_to_vmem [thread:$0]  %s432, 2048, %s434, %s423, 256, 128, 8
        $region56: #{tpu_custom_call.1} parent=51 // pred_fallthru
          _
        // Predicated region
        $region57: #{tpu_custom_call.1} parent=51 // pred_check
          %p440 = pneg %p262
        $region58: #{tpu_custom_call.1} parent=51 // pred_check_branch
          %442 = sbr.rel (%p440) target = $region60
        $region59: #{tpu_custom_call.1} parent=51 // pred_region
          %s443 = sand.u32 %s27, 1
          %s444 = scalar_lea.sflag [#allocation23], %s443
          %s445 = sand.u32 %s252, 1
          %s446 = smul.addr %s445, 128
          %s447 = scalar_lea.vmem [#allocation24], %s446
          %s448 = smul.u32 32, %s27
          %s450 = ssub.s32 2048, 2048
          %451 = vsyncadd %s444, %s450
          %s452 = smul.addr %s448, 64
          %s453 = scalar_lea.hbm %s10, %s452
          %s454 = sshll.u32 %s447, 4
          %s455 = int_to_ptr.vmem [resolvable:$true] %s454
          %460 = dma.hbm_to_vmem [thread:$0]  %s453, 2048, %s455, %s444, 64, 64, 4
        $region60: #{tpu_custom_call.1} parent=51 // pred_fallthru
          _
      $region52: #{tpu_custom_call.1} parent=5 // pred_fallthru
        _
      %p461 = scmp.le.s32.totalorder 1, %s27
      %p462 = scmp.lt.s32.totalorder %s27, 3
      %p463 = pnand %p461, %p462
      %p464 = pneg %p463
      // Predicated region
      $region61: #{tpu_custom_call.1} parent=5 // pred_check
        _
      $region62: #{tpu_custom_call.1} parent=5 // pred_check_branch
        %466 = sbr.rel (%p463) target = $region64
      $region63: #{tpu_custom_call.1} parent=5 // pred_region
        %s467 = ssub.s32 %s27, 1
        // Predicated region
        $region65: #{tpu_custom_call.1} parent=63 // pred_check
          %p468 = pneg %p48
        $region66: #{tpu_custom_call.1} parent=63 // pred_check_branch
          %470 = sbr.rel (%p468) target = $region68
        $region67: #{tpu_custom_call.1} parent=63 // pred_region
          %471 = dma.done [#allocation9], 16
        $region68: #{tpu_custom_call.1} parent=63 // pred_fallthru
          _
        // Predicated region
        $region69: #{tpu_custom_call.1} parent=63 // pred_check
          %p472 = pneg %p69
        $region70: #{tpu_custom_call.1} parent=63 // pred_check_branch
          %474 = sbr.rel (%p472) target = $region72
        $region71: #{tpu_custom_call.1} parent=63 // pred_region
          %475 = dma.done [#allocation10], 16
        $region72: #{tpu_custom_call.1} parent=63 // pred_fallthru
          _
        // Predicated region
        $region73: #{tpu_custom_call.1} parent=63 // pred_check
          %p476 = pneg %p90
        $region74: #{tpu_custom_call.1} parent=63 // pred_check_branch
          %478 = sbr.rel (%p476) target = $region76
        $region75: #{tpu_custom_call.1} parent=63 // pred_region
          %479 = dma.done [#allocation7], 2048
        $region76: #{tpu_custom_call.1} parent=63 // pred_fallthru
          _
        // Predicated region
        $region77: #{tpu_custom_call.1} parent=63 // pred_check
          %p480 = pneg %p111
        $region78: #{tpu_custom_call.1} parent=63 // pred_check_branch
          %482 = sbr.rel (%p480) target = $region80
        $region79: #{tpu_custom_call.1} parent=63 // pred_region
          %483 = dma.done [#allocation14], 2048
        $region80: #{tpu_custom_call.1} parent=63 // pred_fallthru
          _
        // Predicated region
        $region81: #{tpu_custom_call.1} parent=63 // pred_check
          %p484 = pneg %p132
        $region82: #{tpu_custom_call.1} parent=63 // pred_check_branch
          %486 = sbr.rel (%p484) target = $region84
        $region83: #{tpu_custom_call.1} parent=63 // pred_region
          %487 = dma.done [#allocation14], 4096
        $region84: #{tpu_custom_call.1} parent=63 // pred_fallthru
          _
        // Predicated region
        $region85: #{tpu_custom_call.1} parent=63 // pred_check
          %p488 = pneg %p153
        $region86: #{tpu_custom_call.1} parent=63 // pred_check_branch
          %490 = sbr.rel (%p488) target = $region88
        $region87: #{tpu_custom_call.1} parent=63 // pred_region
          %491 = dma.done [#allocation17], 2048
        $region88: #{tpu_custom_call.1} parent=63 // pred_fallthru
          _
        // Predicated region
        $region89: #{tpu_custom_call.1} parent=63 // pred_check
          %p492 = pneg %p174
        $region90: #{tpu_custom_call.1} parent=63 // pred_check_branch
          %494 = sbr.rel (%p492) target = $region92
        $region91: #{tpu_custom_call.1} parent=63 // pred_region
          %495 = dma.done [#allocation17], 2048
        $region92: #{tpu_custom_call.1} parent=63 // pred_fallthru
          _
        // Predicated region
        $region93: #{tpu_custom_call.1} parent=63 // pred_check
          %p496 = pneg %p195
        $region94: #{tpu_custom_call.1} parent=63 // pred_check_branch
          %498 = sbr.rel (%p496) target = $region96
        $region95: #{tpu_custom_call.1} parent=63 // pred_region
          %499 = dma.done [#allocation20], 6144
        $region96: #{tpu_custom_call.1} parent=63 // pred_fallthru
          _
        // Predicated region
        $region97: #{tpu_custom_call.1} parent=63 // pred_check
          %p500 = pneg %p216
        $region98: #{tpu_custom_call.1} parent=63 // pred_check_branch
          %502 = sbr.rel (%p500) target = $region100
        $region99: #{tpu_custom_call.1} parent=63 // pred_region
          %503 = dma.done [#allocation20], 2048
        $region100: #{tpu_custom_call.1} parent=63 // pred_fallthru
          _
        %s504 = sand.u32 %s32, 1
        %s505 = scalar_lea.sflag [#allocation23], %s504
        %s506 = sand.u32 %s229, 1
        %s507 = smul.addr %s506, 128
        %s508 = scalar_lea.vmem [#allocation22], %s507
        // Predicated region
        $region101: #{tpu_custom_call.1} parent=63 // pred_check
          %p509 = pneg %p242
        $region102: #{tpu_custom_call.1} parent=63 // pred_check_branch
          %511 = sbr.rel (%p509) target = $region104
        $region103: #{tpu_custom_call.1} parent=63 // pred_region
          %512 = dma.done %s505, 2048
        $region104: #{tpu_custom_call.1} parent=63 // pred_fallthru
          _
        %s513 = sand.u32 %s32, 1
        %s514 = scalar_lea.sflag [#allocation23], %s513
        %s515 = sand.u32 %s255, 1
        %s516 = smul.addr %s515, 128
        %s517 = scalar_lea.vmem [#allocation24], %s516
        // Predicated region
        $region105: #{tpu_custom_call.1} parent=63 // pred_check
          %p518 = pneg %p268
        $region106: #{tpu_custom_call.1} parent=63 // pred_check_branch
          %520 = sbr.rel (%p518) target = $region108
        $region107: #{tpu_custom_call.1} parent=63 // pred_region
          %521 = dma.done %s514, 2048
        $region108: #{tpu_custom_call.1} parent=63 // pred_fallthru
          _
        %522 = sfence
        %p523 = pneg %p48
        %p524 = pneg %p45
        %p525 = pneg %p69
        %p526 = pneg %p66
        %p527 = pneg %p90
        %p528 = pneg %p87
        %p529 = pneg %p111
        %p530 = pneg %p108
        %p531 = pneg %p132
        %p532 = pneg %p129
        %p533 = pneg %p153
        %p534 = pneg %p150
        %p535 = pneg %p174
        %p536 = pneg %p171
        %p537 = pneg %p195
        %p538 = pneg %p192
        %p539 = pneg %p216
        %p540 = pneg %p213
        %s541 = sand.u32 %s32, 1
        %s542 = scalar_lea.sflag [#allocation23], %s541
        %s543 = sand.u32 %s229, 1
        %s544 = smul.addr %s543, 128
        %s545 = scalar_lea.vmem [#allocation22], %s544
        %p546 = pneg %p242
        %p547 = pneg %p239
        %s548 = sand.u32 %s32, 1
        %s549 = scalar_lea.sflag [#allocation23], %s548
        %s550 = sand.u32 %s255, 1
        %s551 = smul.addr %s550, 128
        %s552 = scalar_lea.vmem [#allocation24], %s551
        %p553 = pneg %p268
        %p554 = pneg %p265
        %p555 = pneg %p289
        %p556 = pneg %p286
        %s557 = smul.u32 2, %s32
        %s558 = smul.u32 32, %s32
        %p560 = scmp.eq.s32.totalorder %s32, 0
        // Predicated region
        $region109: #{tpu_custom_call.1} parent=63 // pred_check
          %p561 = pneg %p560
        $region110: #{tpu_custom_call.1} parent=63 // pred_check_branch
          %563 = sbr.rel (%p561) target = $region112
        $region111: #{tpu_custom_call.1} parent=63 // pred_region
          %s564 = sld [smem:[#allocation6]]
          %v565 = vld [vmem:[#allocation12] sm:$0xff]
          %v566 = vld [vmem:[#allocation12 + $0x8] sm:$0xff]
          %v567 = vld [vmem:[#allocation12 + $0x10] sm:$0xff]
          %v568 = vld [vmem:[#allocation12 + $0x18] sm:$0xff]
          %v569 = vld [vmem:[#allocation12 + $0x20] sm:$0xff]
          %v570 = vld [vmem:[#allocation12 + $0x28] sm:$0xff]
          %v571 = vld [vmem:[#allocation12 + $0x30] sm:$0xff]
          %v572 = vld [vmem:[#allocation12 + $0x38] sm:$0xff]
          %v573 = vld [vmem:[#allocation12 + $0x40] sm:$0xff]
          %v574 = vld [vmem:[#allocation12 + $0x48] sm:$0xff]
          %v575 = vld [vmem:[#allocation12 + $0x50] sm:$0xff]
          %v576 = vld [vmem:[#allocation12 + $0x58] sm:$0xff]
          %v577 = vld [vmem:[#allocation12 + $0x60] sm:$0xff]
          %v578 = vld [vmem:[#allocation12 + $0x68] sm:$0xff]
          %v579 = vld [vmem:[#allocation12 + $0x70] sm:$0xff]
          %v580 = vld [vmem:[#allocation12 + $0x78] sm:$0xff]
          %v581 = vstv %s564
          %v582 = vmul.f32 %v581, %v565
          %v583 = vmul.f32 %v581, %v566
          %v584 = vmul.f32 %v581, %v567
          %v585 = vmul.f32 %v581, %v568
          %v586 = vmul.f32 %v581, %v569
          %v587 = vmul.f32 %v581, %v570
          %v588 = vmul.f32 %v581, %v571
          %v589 = vmul.f32 %v581, %v572
          %v590 = vmul.f32 %v581, %v573
          %v591 = vmul.f32 %v581, %v574
          %v592 = vmul.f32 %v581, %v575
          %v593 = vmul.f32 %v581, %v576
          %v594 = vmul.f32 %v581, %v577
          %v595 = vmul.f32 %v581, %v578
          %v596 = vmul.f32 %v581, %v579
          %v597 = vmul.f32 %v581, %v580
          %s598 = sld [smem:[#allocation6 + $0x1]]
          %v599 = vld [vmem:[#allocation13] sm:$0xff]
          %v600 = vld [vmem:[#allocation13 + $0x8] sm:$0xff]
          %v601 = vld [vmem:[#allocation13 + $0x10] sm:$0xff]
          %v602 = vld [vmem:[#allocation13 + $0x18] sm:$0xff]
          %v603 = vld [vmem:[#allocation13 + $0x20] sm:$0xff]
          %v604 = vld [vmem:[#allocation13 + $0x28] sm:$0xff]
          %v605 = vld [vmem:[#allocation13 + $0x30] sm:$0xff]
          %v606 = vld [vmem:[#allocation13 + $0x38] sm:$0xff]
          %v607 = vld [vmem:[#allocation13 + $0x40] sm:$0xff]
          %v608 = vld [vmem:[#allocation13 + $0x48] sm:$0xff]
          %v609 = vld [vmem:[#allocation13 + $0x50] sm:$0xff]
          %v610 = vld [vmem:[#allocation13 + $0x58] sm:$0xff]
          %v611 = vld [vmem:[#allocation13 + $0x60] sm:$0xff]
          %v612 = vld [vmem:[#allocation13 + $0x68] sm:$0xff]
          %v613 = vld [vmem:[#allocation13 + $0x70] sm:$0xff]
          %v614 = vld [vmem:[#allocation13 + $0x78] sm:$0xff]
          %v615 = vstv %s598
          %v616 = vmul.f32 %v615, %v599
          %v617 = vmul.f32 %v615, %v600
          %v618 = vmul.f32 %v615, %v601
          %v619 = vmul.f32 %v615, %v602
          %v620 = vmul.f32 %v615, %v603
          %v621 = vmul.f32 %v615, %v604
          %v622 = vmul.f32 %v615, %v605
          %v623 = vmul.f32 %v615, %v606
          %v624 = vmul.f32 %v615, %v607
          %v625 = vmul.f32 %v615, %v608
          %v626 = vmul.f32 %v615, %v609
          %v627 = vmul.f32 %v615, %v610
          %v628 = vmul.f32 %v615, %v611
          %v629 = vmul.f32 %v615, %v612
          %v630 = vmul.f32 %v615, %v613
          %v631 = vmul.f32 %v615, %v614
          %v632 = vadd.f32 %v582, %v616
          %v633 = vadd.f32 %v583, %v617
          %v634 = vadd.f32 %v584, %v618
          %v635 = vadd.f32 %v585, %v619
          %v636 = vadd.f32 %v586, %v620
          %v637 = vadd.f32 %v587, %v621
          %v638 = vadd.f32 %v588, %v622
          %v639 = vadd.f32 %v589, %v623
          %v640 = vadd.f32 %v590, %v624
          %v641 = vadd.f32 %v591, %v625
          %v642 = vadd.f32 %v592, %v626
          %v643 = vadd.f32 %v593, %v627
          %v644 = vadd.f32 %v594, %v628
          %v645 = vadd.f32 %v595, %v629
          %v646 = vadd.f32 %v596, %v630
          %v647 = vadd.f32 %v597, %v631
          %v648 = vmul.f32 %v632, %v632
          %v649 = vmul.f32 %v633, %v633
          %v650 = vmul.f32 %v634, %v634
          %v651 = vmul.f32 %v635, %v635
          %v652 = vmul.f32 %v636, %v636
          %v653 = vmul.f32 %v637, %v637
          %v654 = vmul.f32 %v638, %v638
          %v655 = vmul.f32 %v639, %v639
          %v656 = vmul.f32 %v640, %v640
          %v657 = vmul.f32 %v641, %v641
          %v658 = vmul.f32 %v642, %v642
          %v659 = vmul.f32 %v643, %v643
          %v660 = vmul.f32 %v644, %v644
          %v661 = vmul.f32 %v645, %v645
          %v662 = vmul.f32 %v646, %v646
          %v663 = vmul.f32 %v647, %v647
          %664 = vadd.xlane.f32.xlu0 %v648
          %v665 = vpop.xlane.xlu0 %664
          %666 = vadd.xlane.f32.xlu0 %v649
          %v667 = vpop.xlane.xlu0 %666
          %668 = vadd.xlane.f32.xlu0 %v650
          %v669 = vpop.xlane.xlu0 %668
          %670 = vadd.xlane.f32.xlu0 %v651
          %v671 = vpop.xlane.xlu0 %670
          %672 = vadd.xlane.f32.xlu0 %v652
          %v673 = vpop.xlane.xlu0 %672
          %674 = vadd.xlane.f32.xlu0 %v653
          %v675 = vpop.xlane.xlu0 %674
          %676 = vadd.xlane.f32.xlu0 %v654
          %v677 = vpop.xlane.xlu0 %676
          %678 = vadd.xlane.f32.xlu0 %v655
          %v679 = vpop.xlane.xlu0 %678
          %680 = vadd.xlane.f32.xlu0 %v656
          %v681 = vpop.xlane.xlu0 %680
          %682 = vadd.xlane.f32.xlu0 %v657
          %v683 = vpop.xlane.xlu0 %682
          %684 = vadd.xlane.f32.xlu0 %v658
          %v685 = vpop.xlane.xlu0 %684
          %686 = vadd.xlane.f32.xlu0 %v659
          %v687 = vpop.xlane.xlu0 %686
          %688 = vadd.xlane.f32.xlu0 %v660
          %v689 = vpop.xlane.xlu0 %688
          %690 = vadd.xlane.f32.xlu0 %v661
          %v691 = vpop.xlane.xlu0 %690
          %692 = vadd.xlane.f32.xlu0 %v662
          %v693 = vpop.xlane.xlu0 %692
          %694 = vadd.xlane.f32.xlu0 %v663
          %v695 = vpop.xlane.xlu0 %694
          %v696 = vrcp.pop 128.0
          %v697 = vmul.f32 %v665, %v696
          %v698 = vmul.f32 %v667, %v696
          %v699 = vmul.f32 %v669, %v696
          %v700 = vmul.f32 %v671, %v696
          %v701 = vmul.f32 %v673, %v696
          %v702 = vmul.f32 %v675, %v696
          %v703 = vmul.f32 %v677, %v696
          %v704 = vmul.f32 %v679, %v696
          %v705 = vmul.f32 %v681, %v696
          %v706 = vmul.f32 %v683, %v696
          %v707 = vmul.f32 %v685, %v696
          %v708 = vmul.f32 %v687, %v696
          %v709 = vmul.f32 %v689, %v696
          %v710 = vmul.f32 %v691, %v696
          %v711 = vmul.f32 %v693, %v696
          %v712 = vmul.f32 %v695, %v696
          %v713 = vadd.f32 %v697, 1.1920929e-07
          %v714 = vadd.f32 %v698, 1.1920929e-07
          %v715 = vadd.f32 %v699, 1.1920929e-07
          %v716 = vadd.f32 %v700, 1.1920929e-07
          %v717 = vadd.f32 %v701, 1.1920929e-07
          %v718 = vadd.f32 %v702, 1.1920929e-07
          %v719 = vadd.f32 %v703, 1.1920929e-07
          %v720 = vadd.f32 %v704, 1.1920929e-07
          %v721 = vadd.f32 %v705, 1.1920929e-07
          %v722 = vadd.f32 %v706, 1.1920929e-07
          %v723 = vadd.f32 %v707, 1.1920929e-07
          %v724 = vadd.f32 %v708, 1.1920929e-07
          %v725 = vadd.f32 %v709, 1.1920929e-07
          %v726 = vadd.f32 %v710, 1.1920929e-07
          %v727 = vadd.f32 %v711, 1.1920929e-07
          %v728 = vadd.f32 %v712, 1.1920929e-07
          %v729 = vrsqrt.pop %v713
          %v730 = vrsqrt.pop %v714
          %v731 = vrsqrt.pop %v715
          %v732 = vrsqrt.pop %v716
          %v733 = vrsqrt.pop %v717
          %v734 = vrsqrt.pop %v718
          %v735 = vrsqrt.pop %v719
          %v736 = vrsqrt.pop %v720
          %v737 = vrsqrt.pop %v721
          %v738 = vrsqrt.pop %v722
          %v739 = vrsqrt.pop %v723
          %v740 = vrsqrt.pop %v724
          %v741 = vrsqrt.pop %v725
          %v742 = vrsqrt.pop %v726
          %v743 = vrsqrt.pop %v727
          %v744 = vrsqrt.pop %v728
          %v745 = vmul.f32 %v632, %v729
          %v746 = vmul.f32 %v633, %v730
          %v747 = vmul.f32 %v634, %v731
          %v748 = vmul.f32 %v635, %v732
          %v749 = vmul.f32 %v636, %v733
          %v750 = vmul.f32 %v637, %v734
          %v751 = vmul.f32 %v638, %v735
          %v752 = vmul.f32 %v639, %v736
          %v753 = vmul.f32 %v640, %v737
          %v754 = vmul.f32 %v641, %v738
          %v755 = vmul.f32 %v642, %v739
          %v756 = vmul.f32 %v643, %v740
          %v757 = vmul.f32 %v644, %v741
          %v758 = vmul.f32 %v645, %v742
          %v759 = vmul.f32 %v646, %v743
          %v760 = vmul.f32 %v647, %v744
          %v761 = vpack.c.bf16 %v746, %v745
          %v762 = vpack.c.bf16 %v748, %v747
          %v763 = vpack.c.bf16 %v750, %v749
          %v764 = vpack.c.bf16 %v752, %v751
          %v765 = vpack.c.bf16 %v754, %v753
          %v766 = vpack.c.bf16 %v756, %v755
          %v767 = vpack.c.bf16 %v758, %v757
          %v768 = vpack.c.bf16 %v760, %v759
          %v769 = vld [vmem:[#allocation19] sm:$0xff]
          %v770 = vld [vmem:[#allocation19 + $0x8] sm:$0xff]
          %v771 = vld [vmem:[#allocation19 + $0x10] sm:$0xff]
          %v772 = vld [vmem:[#allocation19 + $0x18] sm:$0xff]
          %v773 = vld [vmem:[#allocation19 + $0x20] sm:$0xff]
          %v774 = vld [vmem:[#allocation19 + $0x28] sm:$0xff]
          %v775 = vld [vmem:[#allocation19 + $0x30] sm:$0xff]
          %v776 = vld [vmem:[#allocation19 + $0x38] sm:$0xff]
          %v777 = vld [vmem:[#allocation19 + $0x40] sm:$0xff]
          %v778 = vld [vmem:[#allocation19 + $0x48] sm:$0xff]
          %v779 = vld [vmem:[#allocation19 + $0x50] sm:$0xff]
          %v780 = vld [vmem:[#allocation19 + $0x58] sm:$0xff]
          %v781 = vld [vmem:[#allocation19 + $0x60] sm:$0xff]
          %v782 = vld [vmem:[#allocation19 + $0x68] sm:$0xff]
          %v783 = vld [vmem:[#allocation19 + $0x70] sm:$0xff]
          %v784 = vld [vmem:[#allocation19 + $0x78] sm:$0xff]
          %v785 = vld [vmem:[#allocation19 + $0x80] sm:$0xff]
          %v786 = vld [vmem:[#allocation19 + $0x88] sm:$0xff]
          %v787 = vld [vmem:[#allocation19 + $0x90] sm:$0xff]
          %v788 = vld [vmem:[#allocation19 + $0x98] sm:$0xff]
          %v789 = vld [vmem:[#allocation19 + $0xa0] sm:$0xff]
          %v790 = vld [vmem:[#allocation19 + $0xa8] sm:$0xff]
          %v791 = vld [vmem:[#allocation19 + $0xb0] sm:$0xff]
          %v792 = vld [vmem:[#allocation19 + $0xb8] sm:$0xff]
          %v793 = vld [vmem:[#allocation19 + $0xc0] sm:$0xff]
          %v794 = vld [vmem:[#allocation19 + $0xc8] sm:$0xff]
          %v795 = vld [vmem:[#allocation19 + $0xd0] sm:$0xff]
          %v796 = vld [vmem:[#allocation19 + $0xd8] sm:$0xff]
          %v797 = vld [vmem:[#allocation19 + $0xe0] sm:$0xff]
          %v798 = vld [vmem:[#allocation19 + $0xe8] sm:$0xff]
          %v799 = vld [vmem:[#allocation19 + $0xf0] sm:$0xff]
          %v800 = vld [vmem:[#allocation19 + $0xf8] sm:$0xff]
          %v801 = vld [vmem:[#allocation19 + $0x100] sm:$0xff]
          %v802 = vld [vmem:[#allocation19 + $0x108] sm:$0xff]
          %v803 = vld [vmem:[#allocation19 + $0x110] sm:$0xff]
          %v804 = vld [vmem:[#allocation19 + $0x118] sm:$0xff]
          %v805 = vld [vmem:[#allocation19 + $0x120] sm:$0xff]
          %v806 = vld [vmem:[#allocation19 + $0x128] sm:$0xff]
          %v807 = vld [vmem:[#allocation19 + $0x130] sm:$0xff]
          %v808 = vld [vmem:[#allocation19 + $0x138] sm:$0xff]
          %v809 = vld [vmem:[#allocation19 + $0x140] sm:$0xff]
          %v810 = vld [vmem:[#allocation19 + $0x148] sm:$0xff]
          %v811 = vld [vmem:[#allocation19 + $0x150] sm:$0xff]
          %v812 = vld [vmem:[#allocation19 + $0x158] sm:$0xff]
          %v813 = vld [vmem:[#allocation19 + $0x160] sm:$0xff]
          %v814 = vld [vmem:[#allocation19 + $0x168] sm:$0xff]
          %v815 = vld [vmem:[#allocation19 + $0x170] sm:$0xff]
          %v816 = vld [vmem:[#allocation19 + $0x178] sm:$0xff]
          %v865 = vunpack.c.l.b16 %v769
          %v866 = vunpack.c.h.b16 %v769
          %v867 = vunpack.c.l.b16 %v770
          %v868 = vunpack.c.h.b16 %v770
          %v869 = vunpack.c.l.b16 %v771
          %v870 = vunpack.c.h.b16 %v771
          %v871 = vunpack.c.l.b16 %v772
          %v872 = vunpack.c.h.b16 %v772
          %v873 = vunpack.c.l.b16 %v773
          %v874 = vunpack.c.h.b16 %v773
          %v875 = vunpack.c.l.b16 %v774
          %v876 = vunpack.c.h.b16 %v774
          %v877 = vunpack.c.l.b16 %v775
          %v878 = vunpack.c.h.b16 %v775
          %v879 = vunpack.c.l.b16 %v776
          %v880 = vunpack.c.h.b16 %v776
          %v881 = vunpack.c.l.b16 %v777
          %v882 = vunpack.c.h.b16 %v777
          %v883 = vunpack.c.l.b16 %v778
          %v884 = vunpack.c.h.b16 %v778
          %v885 = vunpack.c.l.b16 %v779
          %v886 = vunpack.c.h.b16 %v779
          %v887 = vunpack.c.l.b16 %v780
          %v888 = vunpack.c.h.b16 %v780
          %v889 = vunpack.c.l.b16 %v781
          %v890 = vunpack.c.h.b16 %v781
          %v891 = vunpack.c.l.b16 %v782
          %v892 = vunpack.c.h.b16 %v782
          %v893 = vunpack.c.l.b16 %v783
          %v894 = vunpack.c.h.b16 %v783
          %v895 = vunpack.c.l.b16 %v784
          %v896 = vunpack.c.h.b16 %v784
          %v897 = vunpack.c.l.b16 %v785
          %v898 = vunpack.c.h.b16 %v785
          %v899 = vunpack.c.l.b16 %v786
          %v900 = vunpack.c.h.b16 %v786
          %v901 = vunpack.c.l.b16 %v787
          %v902 = vunpack.c.h.b16 %v787
          %v903 = vunpack.c.l.b16 %v788
          %v904 = vunpack.c.h.b16 %v788
          %v905 = vunpack.c.l.b16 %v789
          %v906 = vunpack.c.h.b16 %v789
          %v907 = vunpack.c.l.b16 %v790
          %v908 = vunpack.c.h.b16 %v790
          %v909 = vunpack.c.l.b16 %v791
          %v910 = vunpack.c.h.b16 %v791
          %v911 = vunpack.c.l.b16 %v792
          %v912 = vunpack.c.h.b16 %v792
          %v913 = vunpack.c.l.b16 %v793
          %v914 = vunpack.c.h.b16 %v793
          %v915 = vunpack.c.l.b16 %v794
          %v916 = vunpack.c.h.b16 %v794
          %v917 = vunpack.c.l.b16 %v795
          %v918 = vunpack.c.h.b16 %v795
          %v919 = vunpack.c.l.b16 %v796
          %v920 = vunpack.c.h.b16 %v796
          %v921 = vunpack.c.l.b16 %v797
          %v922 = vunpack.c.h.b16 %v797
          %v923 = vunpack.c.l.b16 %v798
          %v924 = vunpack.c.h.b16 %v798
          %v925 = vunpack.c.l.b16 %v799
          %v926 = vunpack.c.h.b16 %v799
          %v927 = vunpack.c.l.b16 %v800
          %v928 = vunpack.c.h.b16 %v800
          %v929 = vunpack.c.l.b16 %v801
          %v930 = vunpack.c.h.b16 %v801
          %v931 = vunpack.c.l.b16 %v802
          %v932 = vunpack.c.h.b16 %v802
          %v933 = vunpack.c.l.b16 %v803
          %v934 = vunpack.c.h.b16 %v803
          %v935 = vunpack.c.l.b16 %v804
          %v936 = vunpack.c.h.b16 %v804
          %v937 = vunpack.c.l.b16 %v805
          %v938 = vunpack.c.h.b16 %v805
          %v939 = vunpack.c.l.b16 %v806
          %v940 = vunpack.c.h.b16 %v806
          %v941 = vunpack.c.l.b16 %v807
          %v942 = vunpack.c.h.b16 %v807
          %v943 = vunpack.c.l.b16 %v808
          %v944 = vunpack.c.h.b16 %v808
          %v945 = vunpack.c.l.b16 %v809
          %v946 = vunpack.c.h.b16 %v809
          %v947 = vunpack.c.l.b16 %v810
          %v948 = vunpack.c.h.b16 %v810
          %v949 = vunpack.c.l.b16 %v811
          %v950 = vunpack.c.h.b16 %v811
          %v951 = vunpack.c.l.b16 %v812
          %v952 = vunpack.c.h.b16 %v812
          %v953 = vunpack.c.l.b16 %v813
          %v954 = vunpack.c.h.b16 %v813
          %v955 = vunpack.c.l.b16 %v814
          %v956 = vunpack.c.h.b16 %v814
          %v957 = vunpack.c.l.b16 %v815
          %v958 = vunpack.c.h.b16 %v815
          %v959 = vunpack.c.l.b16 %v816
          %v960 = vunpack.c.h.b16 %v816
          %v961 = vpack.c.b16 %v871, %v865
          %v962 = vpack.c.b16 %v872, %v866
          %v963 = vpack.c.b16 %v873, %v867
          %v964 = vpack.c.b16 %v874, %v868
          %v965 = vpack.c.b16 %v875, %v869
          %v966 = vpack.c.b16 %v876, %v870
          %v967 = vpack.c.b16 %v883, %v877
          %v968 = vpack.c.b16 %v884, %v878
          %v969 = vpack.c.b16 %v885, %v879
          %v970 = vpack.c.b16 %v886, %v880
          %v971 = vpack.c.b16 %v887, %v881
          %v972 = vpack.c.b16 %v888, %v882
          %v973 = vpack.c.b16 %v895, %v889
          %v974 = vpack.c.b16 %v896, %v890
          %v975 = vpack.c.b16 %v897, %v891
          %v976 = vpack.c.b16 %v898, %v892
          %v977 = vpack.c.b16 %v899, %v893
          %v978 = vpack.c.b16 %v900, %v894
          %v979 = vpack.c.b16 %v907, %v901
          %v980 = vpack.c.b16 %v908, %v902
          %v981 = vpack.c.b16 %v909, %v903
          %v982 = vpack.c.b16 %v910, %v904
          %v983 = vpack.c.b16 %v911, %v905
          %v984 = vpack.c.b16 %v912, %v906
          %v985 = vpack.c.b16 %v919, %v913
          %v986 = vpack.c.b16 %v920, %v914
          %v987 = vpack.c.b16 %v921, %v915
          %v988 = vpack.c.b16 %v922, %v916
          %v989 = vpack.c.b16 %v923, %v917
          %v990 = vpack.c.b16 %v924, %v918
          %v991 = vpack.c.b16 %v931, %v925
          %v992 = vpack.c.b16 %v932, %v926
          %v993 = vpack.c.b16 %v933, %v927
          %v994 = vpack.c.b16 %v934, %v928
          %v995 = vpack.c.b16 %v935, %v929
          %v996 = vpack.c.b16 %v936, %v930
          %v997 = vpack.c.b16 %v943, %v937
          %v998 = vpack.c.b16 %v944, %v938
          %v999 = vpack.c.b16 %v945, %v939
          %v1000 = vpack.c.b16 %v946, %v940
          %v1001 = vpack.c.b16 %v947, %v941
          %v1002 = vpack.c.b16 %v948, %v942
          %v1003 = vpack.c.b16 %v955, %v949
          %v1004 = vpack.c.b16 %v956, %v950
          %v1005 = vpack.c.b16 %v957, %v951
          %v1006 = vpack.c.b16 %v958, %v952
          %v1007 = vpack.c.b16 %v959, %v953
          %v1008 = vpack.c.b16 %v960, %v954
          %1057 = vmatprep.subr.bf16.mxu0 %v962
          %1058 = vmatpush1.bf16.msra.mxu0 %v961
          %1059 = vmatprep.subr.bf16.mxu0 %v968
          %1060 = vmatpush1.bf16.msra.mxu0 %v967
          %1061 = vmatprep.subr.bf16.mxu0 %v974
          %1062 = vmatpush1.bf16.msra.mxu0 %v973
          %1063 = vmatprep.subr.bf16.mxu0 %v980
          %1064 = vmatpush1.bf16.msra.mxu0 %v979
          %1065 = vmatprep.subr.bf16.mxu0 %v986
          %1066 = vmatpush1.bf16.msra.mxu0 %v985
          %1067 = vmatprep.subr.bf16.mxu0 %v992
          %1068 = vmatpush1.bf16.msra.mxu0 %v991
          %1069 = vmatprep.subr.bf16.mxu0 %v998
          %1070 = vmatpush1.bf16.msra.mxu0 %v997
          %1071 = vmatprep.subr.bf16.mxu0 %v1004
          %1072 = vmatpush1.bf16.msra.mxu0 %v1003
          %1073 = vmatprep.subr.bf16.mxu0 0
          %1074 = vmatpush1.bf16.msra.mxu0 0
          %1075 = vmatprep.subr.bf16.mxu0 0
          %1076 = vmatpush1.bf16.msra.mxu0 0
          %1077 = vmatprep.subr.bf16.mxu0 0
          %1078 = vmatpush1.bf16.msra.mxu0 0
          %1079 = vmatprep.subr.bf16.mxu0 0
          %1080 = vmatpush1.bf16.msra.mxu0 0
          %1081 = vmatprep.subr.bf16.mxu0 0
          %1082 = vmatpush1.bf16.msra.mxu0 0
          %1083 = vmatprep.subr.bf16.mxu0 0
          %1084 = vmatpush1.bf16.msra.mxu0 0
          %1085 = vmatprep.subr.bf16.mxu0 0
          %1086 = vmatpush1.bf16.msra.mxu0 0
          %1087 = vmatprep.subr.bf16.mxu0 0
          %1088 = vmatpush1.bf16.msra.mxu0 0
          %1089 = vmatprep.mubr.bf16.mxu0 0
          %1090 = vmatmul.mubr.bf16.gmra.mrb[0].mxu0 %v761
          %v1091 = vpop.f32.mrb[0].mxu0
          %v1092 = vadd.f32 0.0, %v1091
          %v1093 = vpop.f32.mrb[0].mxu0
          %v1094 = vadd.f32 0.0, %v1093
          %v1095 = vpop.f32.mrb[0].mxu0
          %v1096 = vadd.f32 0.0, %v1095
          %v1097 = vpop.f32.mrb[0].mxu0
          %v1098 = vadd.f32 0.0, %v1097
          %1099 = vmatprep.mubr.bf16.mxu0 0
          %1100 = vmatmul.mubr.bf16.gmra.mrb[0].mxu0 %v762
          %v1101 = vpop.f32.mrb[0].mxu0
          %v1102 = vadd.f32 0.0, %v1101
          %v1103 = vpop.f32.mrb[0].mxu0
          %v1104 = vadd.f32 0.0, %v1103
          %v1105 = vpop.f32.mrb[0].mxu0
          %v1106 = vadd.f32 0.0, %v1105
          %v1107 = vpop.f32.mrb[0].mxu0
          %v1108 = vadd.f32 0.0, %v1107
          %1109 = vmatprep.mubr.bf16.mxu0 0
          %1110 = vmatmul.mubr.bf16.gmra.mrb[0].mxu0 %v763
          %v1111 = vpop.f32.mrb[0].mxu0
          %v1112 = vadd.f32 0.0, %v1111
          %v1113 = vpop.f32.mrb[0].mxu0
          %v1114 = vadd.f32 0.0, %v1113
          %v1115 = vpop.f32.mrb[0].mxu0
          %v1116 = vadd.f32 0.0, %v1115
          %v1117 = vpop.f32.mrb[0].mxu0
          %v1118 = vadd.f32 0.0, %v1117
          %1119 = vmatprep.mubr.bf16.mxu0 0
          %1120 = vmatmul.mubr.bf16.gmra.mrb[0].mxu0 %v764
          %v1121 = vpop.f32.mrb[0].mxu0
          %v1122 = vadd.f32 0.0, %v1121
          %v1123 = vpop.f32.mrb[0].mxu0
          %v1124 = vadd.f32 0.0, %v1123
          %v1125 = vpop.f32.mrb[0].mxu0
          %v1126 = vadd.f32 0.0, %v1125
          %v1127 = vpop.f32.mrb[0].mxu0
          %v1128 = vadd.f32 0.0, %v1127
          %1129 = vmatprep.mubr.bf16.mxu0 0
          %1130 = vmatmul.mubr.bf16.gmra.mrb[0].mxu0 %v765
          %v1131 = vpop.f32.mrb[0].mxu0
          %v1132 = vadd.f32 0.0, %v1131
          %v1133 = vpop.f32.mrb[0].mxu0
          %v1134 = vadd.f32 0.0, %v1133
          %v1135 = vpop.f32.mrb[0].mxu0
          %v1136 = vadd.f32 0.0, %v1135
          %v1137 = vpop.f32.mrb[0].mxu0
          %v1138 = vadd.f32 0.0, %v1137
          %1139 = vmatprep.mubr.bf16.mxu0 0
          %1140 = vmatmul.mubr.bf16.gmra.mrb[0].mxu0 %v766
          %v1141 = vpop.f32.mrb[0].mxu0
          %v1142 = vadd.f32 0.0, %v1141
          %v1143 = vpop.f32.mrb[0].mxu0
          %v1144 = vadd.f32 0.0, %v1143
          %v1145 = vpop.f32.mrb[0].mxu0
          %v1146 = vadd.f32 0.0, %v1145
          %v1147 = vpop.f32.mrb[0].mxu0
          %v1148 = vadd.f32 0.0, %v1147
          %1149 = vmatprep.mubr.bf16.mxu0 0
          %1150 = vmatmul.mubr.bf16.gmra.mrb[0].mxu0 %v767
          %v1151 = vpop.f32.mrb[0].mxu0
          %v1152 = vadd.f32 0.0, %v1151
          %v1153 = vpop.f32.mrb[0].mxu0
          %v1154 = vadd.f32 0.0, %v1153
          %v1155 = vpop.f32.mrb[0].mxu0
          %v1156 = vadd.f32 0.0, %v1155
          %v1157 = vpop.f32.mrb[0].mxu0
          %v1158 = vadd.f32 0.0, %v1157
          %1159 = vmatprep.mubr.bf16.mxu0 0
          %1160 = vmatmul.mubr.bf16.gmra.mrb[0].mxu0 %v768
          %v1161 = vpop.f32.mrb[0].mxu0
          %v1162 = vadd.f32 0.0, %v1161
          %v1163 = vpop.f32.mrb[0].mxu0
          %v1164 = vadd.f32 0.0, %v1163
          %v1165 = vpop.f32.mrb[0].mxu0
          %v1166 = vadd.f32 0.0, %v1165
          %v1167 = vpop.f32.mrb[0].mxu0
          %v1168 = vadd.f32 0.0, %v1167
          %1169 = vdwg.mxu0
          %1170 = vmatprep.subr.bf16.mxu0 %v964
          %1171 = vmatpush1.bf16.msra.mxu0 %v963
          %1172 = vmatprep.subr.bf16.mxu0 %v970
          %1173 = vmatpush1.bf16.msra.mxu0 %v969
          %1174 = vmatprep.subr.bf16.mxu0 %v976
          %1175 = vmatpush1.bf16.msra.mxu0 %v975
          %1176 = vmatprep.subr.bf16.mxu0 %v982
          %1177 = vmatpush1.bf16.msra.mxu0 %v981
          %1178 = vmatprep.subr.bf16.mxu0 %v988
          %1179 = vmatpush1.bf16.msra.mxu0 %v987
          %1180 = vmatprep.subr.bf16.mxu0 %v994
          %1181 = vmatpush1.bf16.msra.mxu0 %v993
          %1182 = vmatprep.subr.bf16.mxu0 %v1000
          %1183 = vmatpush1.bf16.msra.mxu0 %v999
          %1184 = vmatprep.subr.bf16.mxu0 %v1006
          %1185 = vmatpush1.bf16.msra.mxu0 %v1005
          %1186 = vmatprep.subr.bf16.mxu0 0
          %1187 = vmatpush1.bf16.msra.mxu0 0
          %1188 = vmatprep.subr.bf16.mxu0 0
          %1189 = vmatpush1.bf16.msra.mxu0 0
          %1190 = vmatprep.subr.bf16.mxu0 0
          %1191 = vmatpush1.bf16.msra.mxu0 0
          %1192 = vmatprep.subr.bf16.mxu0 0
          %1193 = vmatpush1.bf16.msra.mxu0 0
          %1194 = vmatprep.subr.bf16.mxu0 0
          %1195 = vmatpush1.bf16.msra.mxu0 0
          %1196 = vmatprep.subr.bf16.mxu0 0
          %1197 = vmatpush1.bf16.msra.mxu0 0
          %1198 = vmatprep.subr.bf16.mxu0 0
          %1199 = vmatpush1.bf16.msra.mxu0 0
          %1200 = vmatprep.subr.bf16.mxu0 0
          %1201 = vmatpush1.bf16.msra.mxu0 0
          %1202 = vmatprep.mubr.bf16.mxu0 0
          %1203 = vmatmul.mubr.bf16.gmra.mrb[0].mxu0 %v761
          %v1204 = vpop.f32.mrb[0].mxu0
          %v1205 = vadd.f32 0.0, %v1204
          %v1206 = vpop.f32.mrb[0].mxu0
          %v1207 = vadd.f32 0.0, %v1206
          %v1208 = vpop.f32.mrb[0].mxu0
          %v1209 = vadd.f32 0.0, %v1208
          %v1210 = vpop.f32.mrb[0].mxu0
          %v1211 = vadd.f32 0.0, %v1210
          %1212 = vmatprep.mubr.bf16.mxu0 0
          %1213 = vmatmul.mubr.bf16.gmra.mrb[0].mxu0 %v762
          %v1214 = vpop.f32.mrb[0].mxu0
          %v1215 = vadd.f32 0.0, %v1214
          %v1216 = vpop.f32.mrb[0].mxu0
          %v1217 = vadd.f32 0.0, %v1216
          %v1218 = vpop.f32.mrb[0].mxu0
          %v1219 = vadd.f32 0.0, %v1218
          %v1220 = vpop.f32.mrb[0].mxu0
          %v1221 = vadd.f32 0.0, %v1220
          %1222 = vmatprep.mubr.bf16.mxu0 0
          %1223 = vmatmul.mubr.bf16.gmra.mrb[0].mxu0 %v763
          %v1224 = vpop.f32.mrb[0].mxu0
          %v1225 = vadd.f32 0.0, %v1224
          %v1226 = vpop.f32.mrb[0].mxu0
          %v1227 = vadd.f32 0.0, %v1226
          %v1228 = vpop.f32.mrb[0].mxu0
          %v1229 = vadd.f32 0.0, %v1228
          %v1230 = vpop.f32.mrb[0].mxu0
          %v1231 = vadd.f32 0.0, %v1230
          %1232 = vmatprep.mubr.bf16.mxu0 0
          %1233 = vmatmul.mubr.bf16.gmra.mrb[0].mxu0 %v764
          %v1234 = vpop.f32.mrb[0].mxu0
          %v1235 = vadd.f32 0.0, %v1234
          %v1236 = vpop.f32.mrb[0].mxu0
          %v1237 = vadd.f32 0.0, %v1236
          %v1238 = vpop.f32.mrb[0].mxu0
          %v1239 = vadd.f32 0.0, %v1238
          %v1240 = vpop.f32.mrb[0].mxu0
          %v1241 = vadd.f32 0.0, %v1240
          %1242 = vmatprep.mubr.bf16.mxu0 0
          %1243 = vmatmul.mubr.bf16.gmra.mrb[0].mxu0 %v765
          %v1244 = vpop.f32.mrb[0].mxu0
          %v1245 = vadd.f32 0.0, %v1244
          %v1246 = vpop.f32.mrb[0].mxu0
          %v1247 = vadd.f32 0.0, %v1246
          %v1248 = vpop.f32.mrb[0].mxu0
          %v1249 = vadd.f32 0.0, %v1248
          %v1250 = vpop.f32.mrb[0].mxu0
          %v1251 = vadd.f32 0.0, %v1250
          %1252 = vmatprep.mubr.bf16.mxu0 0
          %1253 = vmatmul.mubr.bf16.gmra.mrb[0].mxu0 %v766
          %v1254 = vpop.f32.mrb[0].mxu0
          %v1255 = vadd.f32 0.0, %v1254
          %v1256 = vpop.f32.mrb[0].mxu0
          %v1257 = vadd.f32 0.0, %v1256
          %v1258 = vpop.f32.mrb[0].mxu0
          %v1259 = vadd.f32 0.0, %v1258
          %v1260 = vpop.f32.mrb[0].mxu0
          %v1261 = vadd.f32 0.0, %v1260
          %1262 = vmatprep.mubr.bf16.mxu0 0
          %1263 = vmatmul.mubr.bf16.gmra.mrb[0].mxu0 %v767
          %v1264 = vpop.f32.mrb[0].mxu0
          %v1265 = vadd.f32 0.0, %v1264
          %v1266 = vpop.f32.mrb[0].mxu0
          %v1267 = vadd.f32 0.0, %v1266
          %v1268 = vpop.f32.mrb[0].mxu0
          %v1269 = vadd.f32 0.0, %v1268
          %v1270 = vpop.f32.mrb[0].mxu0
          %v1271 = vadd.f32 0.0, %v1270
          %1272 = vmatprep.mubr.bf16.mxu0 0
          %1273 = vmatmul.mubr.bf16.gmra.mrb[0].mxu0 %v768
          %v1274 = vpop.f32.mrb[0].mxu0
          %v1275 = vadd.f32 0.0, %v1274
          %v1276 = vpop.f32.mrb[0].mxu0
          %v1277 = vadd.f32 0.0, %v1276
          %v1278 = vpop.f32.mrb[0].mxu0
          %v1279 = vadd.f32 0.0, %v1278
          %v1280 = vpop.f32.mrb[0].mxu0
          %v1281 = vadd.f32 0.0, %v1280
          %1282 = vdwg.mxu0
          %1283 = vmatprep.subr.bf16.mxu0 %v966
          %1284 = vmatpush1.bf16.msra.mxu0 %v965
          %1285 = vmatprep.subr.bf16.mxu0 %v972
          %1286 = vmatpush1.bf16.msra.mxu0 %v971
          %1287 = vmatprep.subr.bf16.mxu0 %v978
          %1288 = vmatpush1.bf16.msra.mxu0 %v977
          %1289 = vmatprep.subr.bf16.mxu0 %v984
          %1290 = vmatpush1.bf16.msra.mxu0 %v983
          %1291 = vmatprep.subr.bf16.mxu0 %v990
          %1292 = vmatpush1.bf16.msra.mxu0 %v989
          %1293 = vmatprep.subr.bf16.mxu0 %v996
          %1294 = vmatpush1.bf16.msra.mxu0 %v995
          %1295 = vmatprep.subr.bf16.mxu0 %v1002
          %1296 = vmatpush1.bf16.msra.mxu0 %v1001
          %1297 = vmatprep.subr.bf16.mxu0 %v1008
          %1298 = vmatpush1.bf16.msra.mxu0 %v1007
          %1299 = vmatprep.subr.bf16.mxu0 0
          %1300 = vmatpush1.bf16.msra.mxu0 0
          %1301 = vmatprep.subr.bf16.mxu0 0
          %1302 = vmatpush1.bf16.msra.mxu0 0
          %1303 = vmatprep.subr.bf16.mxu0 0
          %1304 = vmatpush1.bf16.msra.mxu0 0
          %1305 = vmatprep.subr.bf16.mxu0 0
          %1306 = vmatpush1.bf16.msra.mxu0 0
          %1307 = vmatprep.subr.bf16.mxu0 0
          %1308 = vmatpush1.bf16.msra.mxu0 0
          %1309 = vmatprep.subr.bf16.mxu0 0
          %1310 = vmatpush1.bf16.msra.mxu0 0
          %1311 = vmatprep.subr.bf16.mxu0 0
          %1312 = vmatpush1.bf16.msra.mxu0 0
          %1313 = vmatprep.subr.bf16.mxu0 0
          %1314 = vmatpush1.bf16.msra.mxu0 0
          %1315 = vmatprep.mubr.bf16.mxu0 0
          %1316 = vmatmul.mubr.bf16.gmra.mrb[0].mxu0 %v761
          %v1317 = vpop.f32.mrb[0].mxu0
          %v1318 = vadd.f32 0.0, %v1317
          %v1319 = vpop.f32.mrb[0].mxu0
          %v1320 = vadd.f32 0.0, %v1319
          %v1321 = vpop.f32.mrb[0].mxu0
          %v1322 = vadd.f32 0.0, %v1321
          %v1323 = vpop.f32.mrb[0].mxu0
          %v1324 = vadd.f32 0.0, %v1323
          %1325 = vmatprep.mubr.bf16.mxu0 0
          %1326 = vmatmul.mubr.bf16.gmra.mrb[0].mxu0 %v762
          %v1327 = vpop.f32.mrb[0].mxu0
          %v1328 = vadd.f32 0.0, %v1327
          %v1329 = vpop.f32.mrb[0].mxu0
          %v1330 = vadd.f32 0.0, %v1329
          %v1331 = vpop.f32.mrb[0].mxu0
          %v1332 = vadd.f32 0.0, %v1331
          %v1333 = vpop.f32.mrb[0].mxu0
          %v1334 = vadd.f32 0.0, %v1333
          %1335 = vmatprep.mubr.bf16.mxu0 0
          %1336 = vmatmul.mubr.bf16.gmra.mrb[0].mxu0 %v763
          %v1337 = vpop.f32.mrb[0].mxu0
          %v1338 = vadd.f32 0.0, %v1337
          %v1339 = vpop.f32.mrb[0].mxu0
          %v1340 = vadd.f32 0.0, %v1339
          %v1341 = vpop.f32.mrb[0].mxu0
          %v1342 = vadd.f32 0.0, %v1341
          %v1343 = vpop.f32.mrb[0].mxu0
          %v1344 = vadd.f32 0.0, %v1343
          %1345 = vmatprep.mubr.bf16.mxu0 0
          %1346 = vmatmul.mubr.bf16.gmra.mrb[0].mxu0 %v764
          %v1347 = vpop.f32.mrb[0].mxu0
          %v1348 = vadd.f32 0.0, %v1347
          %v1349 = vpop.f32.mrb[0].mxu0
          %v1350 = vadd.f32 0.0, %v1349
          %v1351 = vpop.f32.mrb[0].mxu0
          %v1352 = vadd.f32 0.0, %v1351
          %v1353 = vpop.f32.mrb[0].mxu0
          %v1354 = vadd.f32 0.0, %v1353
          %1355 = vmatprep.mubr.bf16.mxu0 0
          %1356 = vmatmul.mubr.bf16.gmra.mrb[0].mxu0 %v765
          %v1357 = vpop.f32.mrb[0].mxu0
          %v1358 = vadd.f32 0.0, %v1357
          %v1359 = vpop.f32.mrb[0].mxu0
          %v1360 = vadd.f32 0.0, %v1359
          %v1361 = vpop.f32.mrb[0].mxu0
          %v1362 = vadd.f32 0.0, %v1361
          %v1363 = vpop.f32.mrb[0].mxu0
          %v1364 = vadd.f32 0.0, %v1363
          %1365 = vmatprep.mubr.bf16.mxu0 0
          %1366 = vmatmul.mubr.bf16.gmra.mrb[0].mxu0 %v766
          %v1367 = vpop.f32.mrb[0].mxu0
          %v1368 = vadd.f32 0.0, %v1367
          %v1369 = vpop.f32.mrb[0].mxu0
          %v1370 = vadd.f32 0.0, %v1369
          %v1371 = vpop.f32.mrb[0].mxu0
          %v1372 = vadd.f32 0.0, %v1371
          %v1373 = vpop.f32.mrb[0].mxu0
          %v1374 = vadd.f32 0.0, %v1373
          %1375 = vmatprep.mubr.bf16.mxu0 0
          %1376 = vmatmul.mubr.bf16.gmra.mrb[0].mxu0 %v767
          %v1377 = vpop.f32.mrb[0].mxu0
          %v1378 = vadd.f32 0.0, %v1377
          %v1379 = vpop.f32.mrb[0].mxu0
          %v1380 = vadd.f32 0.0, %v1379
          %v1381 = vpop.f32.mrb[0].mxu0
          %v1382 = vadd.f32 0.0, %v1381
          %v1383 = vpop.f32.mrb[0].mxu0
          %v1384 = vadd.f32 0.0, %v1383
          %1385 = vmatprep.mubr.bf16.mxu0 0
          %1386 = vmatmul.mubr.bf16.gmra.mrb[0].mxu0 %v768
          %v1387 = vpop.f32.mrb[0].mxu0
          %v1388 = vadd.f32 0.0, %v1387
          %v1389 = vpop.f32.mrb[0].mxu0
          %v1390 = vadd.f32 0.0, %v1389
          %v1391 = vpop.f32.mrb[0].mxu0
          %v1392 = vadd.f32 0.0, %v1391
          %v1393 = vpop.f32.mrb[0].mxu0
          %v1394 = vadd.f32 0.0, %v1393
          %1395 = vdwg.mxu0
          %1396 = vst [vmem:[#allocation2] sm:$0xff] %v1092
          %1397 = vst [vmem:[#allocation2 + $0x8] sm:$0xff] %v1094
          %1398 = vst [vmem:[#allocation2 + $0x10] sm:$0xff] %v1205
          %1399 = vst [vmem:[#allocation2 + $0x18] sm:$0xff] %v1207
          %1400 = vst [vmem:[#allocation2 + $0x20] sm:$0xff] %v1318
          %1401 = vst [vmem:[#allocation2 + $0x28] sm:$0xff] %v1320
          %1402 = vst [vmem:[#allocation2 + $0x30] sm:$0xff] %v1096
          %1403 = vst [vmem:[#allocation2 + $0x38] sm:$0xff] %v1098
          %1404 = vst [vmem:[#allocation2 + $0x40] sm:$0xff] %v1209
          %1405 = vst [vmem:[#allocation2 + $0x48] sm:$0xff] %v1211
          %1406 = vst [vmem:[#allocation2 + $0x50] sm:$0xff] %v1322
          %1407 = vst [vmem:[#allocation2 + $0x58] sm:$0xff] %v1324
          %1408 = vst [vmem:[#allocation2 + $0x60] sm:$0xff] %v1102
          %1409 = vst [vmem:[#allocation2 + $0x68] sm:$0xff] %v1104
          %1410 = vst [vmem:[#allocation2 + $0x70] sm:$0xff] %v1215
          %1411 = vst [vmem:[#allocation2 + $0x78] sm:$0xff] %v1217
          %1412 = vst [vmem:[#allocation2 + $0x80] sm:$0xff] %v1328
          %1413 = vst [vmem:[#allocation2 + $0x88] sm:$0xff] %v1330
          %1414 = vst [vmem:[#allocation2 + $0x90] sm:$0xff] %v1106
          %1415 = vst [vmem:[#allocation2 + $0x98] sm:$0xff] %v1108
          %1416 = vst [vmem:[#allocation2 + $0xa0] sm:$0xff] %v1219
          %1417 = vst [vmem:[#allocation2 + $0xa8] sm:$0xff] %v1221
          %1418 = vst [vmem:[#allocation2 + $0xb0] sm:$0xff] %v1332
          %1419 = vst [vmem:[#allocation2 + $0xb8] sm:$0xff] %v1334
          %1420 = vst [vmem:[#allocation2 + $0xc0] sm:$0xff] %v1112
          %1421 = vst [vmem:[#allocation2 + $0xc8] sm:$0xff] %v1114
          %1422 = vst [vmem:[#allocation2 + $0xd0] sm:$0xff] %v1225
          %1423 = vst [vmem:[#allocation2 + $0xd8] sm:$0xff] %v1227
          %1424 = vst [vmem:[#allocation2 + $0xe0] sm:$0xff] %v1338
          %1425 = vst [vmem:[#allocation2 + $0xe8] sm:$0xff] %v1340
          %1426 = vst [vmem:[#allocation2 + $0xf0] sm:$0xff] %v1116
          %1427 = vst [vmem:[#allocation2 + $0xf8] sm:$0xff] %v1118
          %1428 = vst [vmem:[#allocation2 + $0x100] sm:$0xff] %v1229
          %1429 = vst [vmem:[#allocation2 + $0x108] sm:$0xff] %v1231
          %1430 = vst [vmem:[#allocation2 + $0x110] sm:$0xff] %v1342
          %1431 = vst [vmem:[#allocation2 + $0x118] sm:$0xff] %v1344
          %1432 = vst [vmem:[#allocation2 + $0x120] sm:$0xff] %v1122
          %1433 = vst [vmem:[#allocation2 + $0x128] sm:$0xff] %v1124
          %1434 = vst [vmem:[#allocation2 + $0x130] sm:$0xff] %v1235
          %1435 = vst [vmem:[#allocation2 + $0x138] sm:$0xff] %v1237
          %1436 = vst [vmem:[#allocation2 + $0x140] sm:$0xff] %v1348
          %1437 = vst [vmem:[#allocation2 + $0x148] sm:$0xff] %v1350
          %1438 = vst [vmem:[#allocation2 + $0x150] sm:$0xff] %v1126
          %1439 = vst [vmem:[#allocation2 + $0x158] sm:$0xff] %v1128
          %1440 = vst [vmem:[#allocation2 + $0x160] sm:$0xff] %v1239
          %1441 = vst [vmem:[#allocation2 + $0x168] sm:$0xff] %v1241
          %1442 = vst [vmem:[#allocation2 + $0x170] sm:$0xff] %v1352
          %1443 = vst [vmem:[#allocation2 + $0x178] sm:$0xff] %v1354
          %1444 = vst [vmem:[#allocation2 + $0x180] sm:$0xff] %v1132
          %1445 = vst [vmem:[#allocation2 + $0x188] sm:$0xff] %v1134
          %1446 = vst [vmem:[#allocation2 + $0x190] sm:$0xff] %v1245
          %1447 = vst [vmem:[#allocation2 + $0x198] sm:$0xff] %v1247
          %1448 = vst [vmem:[#allocation2 + $0x1a0] sm:$0xff] %v1358
          %1449 = vst [vmem:[#allocation2 + $0x1a8] sm:$0xff] %v1360
          %1450 = vst [vmem:[#allocation2 + $0x1b0] sm:$0xff] %v1136
          %1451 = vst [vmem:[#allocation2 + $0x1b8] sm:$0xff] %v1138
          %1452 = vst [vmem:[#allocation2 + $0x1c0] sm:$0xff] %v1249
          %1453 = vst [vmem:[#allocation2 + $0x1c8] sm:$0xff] %v1251
          %1454 = vst [vmem:[#allocation2 + $0x1d0] sm:$0xff] %v1362
          %1455 = vst [vmem:[#allocation2 + $0x1d8] sm:$0xff] %v1364
          %1456 = vst [vmem:[#allocation2 + $0x1e0] sm:$0xff] %v1142
          %1457 = vst [vmem:[#allocation2 + $0x1e8] sm:$0xff] %v1144
          %1458 = vst [vmem:[#allocation2 + $0x1f0] sm:$0xff] %v1255
          %1459 = vst [vmem:[#allocation2 + $0x1f8] sm:$0xff] %v1257
          %1460 = vst [vmem:[#allocation2 + $0x200] sm:$0xff] %v1368
          %1461 = vst [vmem:[#allocation2 + $0x208] sm:$0xff] %v1370
          %1462 = vst [vmem:[#allocation2 + $0x210] sm:$0xff] %v1146
          %1463 = vst [vmem:[#allocation2 + $0x218] sm:$0xff] %v1148
          %1464 = vst [vmem:[#allocation2 + $0x220] sm:$0xff] %v1259
          %1465 = vst [vmem:[#allocation2 + $0x228] sm:$0xff] %v1261
          %1466 = vst [vmem:[#allocation2 + $0x230] sm:$0xff] %v1372
          %1467 = vst [vmem:[#allocation2 + $0x238] sm:$0xff] %v1374
          %1468 = vst [vmem:[#allocation2 + $0x240] sm:$0xff] %v1152
          %1469 = vst [vmem:[#allocation2 + $0x248] sm:$0xff] %v1154
          %1470 = vst [vmem:[#allocation2 + $0x250] sm:$0xff] %v1265
          %1471 = vst [vmem:[#allocation2 + $0x258] sm:$0xff] %v1267
          %1472 = vst [vmem:[#allocation2 + $0x260] sm:$0xff] %v1378
          %1473 = vst [vmem:[#allocation2 + $0x268] sm:$0xff] %v1380
          %1474 = vst [vmem:[#allocation2 + $0x270] sm:$0xff] %v1156
          %1475 = vst [vmem:[#allocation2 + $0x278] sm:$0xff] %v1158
          %1476 = vst [vmem:[#allocation2 + $0x280] sm:$0xff] %v1269
          %1477 = vst [vmem:[#allocation2 + $0x288] sm:$0xff] %v1271
          %1478 = vst [vmem:[#allocation2 + $0x290] sm:$0xff] %v1382
          %1479 = vst [vmem:[#allocation2 + $0x298] sm:$0xff] %v1384
          %1480 = vst [vmem:[#allocation2 + $0x2a0] sm:$0xff] %v1162
          %1481 = vst [vmem:[#allocation2 + $0x2a8] sm:$0xff] %v1164
          %1482 = vst [vmem:[#allocation2 + $0x2b0] sm:$0xff] %v1275
          %1483 = vst [vmem:[#allocation2 + $0x2b8] sm:$0xff] %v1277
          %1484 = vst [vmem:[#allocation2 + $0x2c0] sm:$0xff] %v1388
          %1485 = vst [vmem:[#allocation2 + $0x2c8] sm:$0xff] %v1390
          %1486 = vst [vmem:[#allocation2 + $0x2d0] sm:$0xff] %v1166
          %1487 = vst [vmem:[#allocation2 + $0x2d8] sm:$0xff] %v1168
          %1488 = vst [vmem:[#allocation2 + $0x2e0] sm:$0xff] %v1279
          %1489 = vst [vmem:[#allocation2 + $0x2e8] sm:$0xff] %v1281
          %1490 = vst [vmem:[#allocation2 + $0x2f0] sm:$0xff] %v1392
          %1491 = vst [vmem:[#allocation2 + $0x2f8] sm:$0xff] %v1394
          %v1492 = vld [vmem:[#allocation16] sm:$0xff]
          %v1493 = vld [vmem:[#allocation16 + $0x8] sm:$0xff]
          %v1494 = vld [vmem:[#allocation16 + $0x10] sm:$0xff]
          %v1495 = vld [vmem:[#allocation16 + $0x18] sm:$0xff]
          %v1496 = vld [vmem:[#allocation16 + $0x20] sm:$0xff]
          %v1497 = vld [vmem:[#allocation16 + $0x28] sm:$0xff]
          %v1498 = vld [vmem:[#allocation16 + $0x30] sm:$0xff]
          %v1499 = vld [vmem:[#allocation16 + $0x38] sm:$0xff]
          %v1500 = vld [vmem:[#allocation16 + $0x40] sm:$0xff]
          %v1501 = vld [vmem:[#allocation16 + $0x48] sm:$0xff]
          %v1502 = vld [vmem:[#allocation16 + $0x50] sm:$0xff]
          %v1503 = vld [vmem:[#allocation16 + $0x58] sm:$0xff]
          %v1504 = vld [vmem:[#allocation16 + $0x60] sm:$0xff]
          %v1505 = vld [vmem:[#allocation16 + $0x68] sm:$0xff]
          %v1506 = vld [vmem:[#allocation16 + $0x70] sm:$0xff]
          %v1507 = vld [vmem:[#allocation16 + $0x78] sm:$0xff]
          %v1508 = vld [vmem:[#allocation18] sm:$0xff]
          %v1509 = vld [vmem:[#allocation18 + $0x8] sm:$0xff]
          %v1510 = vld [vmem:[#allocation18 + $0x10] sm:$0xff]
          %v1511 = vld [vmem:[#allocation18 + $0x18] sm:$0xff]
          %v1512 = vld [vmem:[#allocation18 + $0x20] sm:$0xff]
          %v1513 = vld [vmem:[#allocation18 + $0x28] sm:$0xff]
          %v1514 = vld [vmem:[#allocation18 + $0x30] sm:$0xff]
          %v1515 = vld [vmem:[#allocation18 + $0x38] sm:$0xff]
          %v1516 = vld [vmem:[#allocation18 + $0x40] sm:$0xff]
          %v1517 = vld [vmem:[#allocation18 + $0x48] sm:$0xff]
          %v1518 = vld [vmem:[#allocation18 + $0x50] sm:$0xff]
          %v1519 = vld [vmem:[#allocation18 + $0x58] sm:$0xff]
          %v1520 = vld [vmem:[#allocation18 + $0x60] sm:$0xff]
          %v1521 = vld [vmem:[#allocation18 + $0x68] sm:$0xff]
          %v1522 = vld [vmem:[#allocation18 + $0x70] sm:$0xff]
          %v1523 = vld [vmem:[#allocation18 + $0x78] sm:$0xff]
          %v1524 = vlaneseq
          %v1525 = vshrl.u32 %v1524, 7
          %v1526 = vadd.s32 %v1525, 8
          %v1527 = vadd.s32 %v1525, 16
          %v1528 = vadd.s32 %v1525, 24
          %v1529 = vadd.s32 %v1525, 32
          %v1530 = vadd.s32 %v1525, 40
          %v1531 = vadd.s32 %v1525, 48
          %v1532 = vadd.s32 %v1525, 56
          %v1533 = vadd.s32 %v1525, 64
          %v1534 = vadd.s32 %v1525, 72
          %v1535 = vadd.s32 %v1525, 80
          %v1536 = vadd.s32 %v1525, 88
          %v1537 = vadd.s32 %v1525, 96
          %v1538 = vadd.s32 %v1525, 104
          %v1539 = vadd.s32 %v1525, 112
          %v1540 = vadd.s32 %v1525, 120
          %v1541 = vlaneseq
          %v1542 = vand.u32 %v1541, 127
          %vm1543 = vcmp.le.s32.totalorder %v1542, %v1525
          %vm1544 = vcmp.le.s32.totalorder %v1542, %v1526
          %vm1545 = vcmp.le.s32.totalorder %v1542, %v1527
          %vm1546 = vcmp.le.s32.totalorder %v1542, %v1528
          %vm1547 = vcmp.le.s32.totalorder %v1542, %v1529
          %vm1548 = vcmp.le.s32.totalorder %v1542, %v1530
          %vm1549 = vcmp.le.s32.totalorder %v1542, %v1531
          %vm1550 = vcmp.le.s32.totalorder %v1542, %v1532
          %vm1551 = vcmp.le.s32.totalorder %v1542, %v1533
          %vm1552 = vcmp.le.s32.totalorder %v1542, %v1534
          %vm1553 = vcmp.le.s32.totalorder %v1542, %v1535
          %vm1554 = vcmp.le.s32.totalorder %v1542, %v1536
          %vm1555 = vcmp.le.s32.totalorder %v1542, %v1537
          %vm1556 = vcmp.le.s32.totalorder %v1542, %v1538
          %vm1557 = vcmp.le.s32.totalorder %v1542, %v1539
          %vm1558 = vcmp.le.s32.totalorder %v1542, %v1540
          %v1559 = vsel %vm1543, 0.0, -1e+30
          %v1560 = vsel %vm1544, 0.0, -1e+30
          %v1561 = vsel %vm1545, 0.0, -1e+30
          %v1562 = vsel %vm1546, 0.0, -1e+30
          %v1563 = vsel %vm1547, 0.0, -1e+30
          %v1564 = vsel %vm1548, 0.0, -1e+30
          %v1565 = vsel %vm1549, 0.0, -1e+30
          %v1566 = vsel %vm1550, 0.0, -1e+30
          %v1567 = vsel %vm1551, 0.0, -1e+30
          %v1568 = vsel %vm1552, 0.0, -1e+30
          %v1569 = vsel %vm1553, 0.0, -1e+30
          %v1570 = vsel %vm1554, 0.0, -1e+30
          %v1571 = vsel %vm1555, 0.0, -1e+30
          %v1572 = vsel %vm1556, 0.0, -1e+30
          %v1573 = vsel %vm1557, 0.0, -1e+30
          %v1574 = vsel %vm1558, 0.0, -1e+30
          %v1575 = vld [vmem:[#allocation2] sm:$0xff]
          %v1576 = vld [vmem:[#allocation2 + $0x30] sm:$0xff]
          %v1577 = vld [vmem:[#allocation2 + $0x60] sm:$0xff]
          %v1578 = vld [vmem:[#allocation2 + $0x90] sm:$0xff]
          %v1579 = vld [vmem:[#allocation2 + $0xc0] sm:$0xff]
          %v1580 = vld [vmem:[#allocation2 + $0xf0] sm:$0xff]
          %v1581 = vld [vmem:[#allocation2 + $0x120] sm:$0xff]
          %v1582 = vld [vmem:[#allocation2 + $0x150] sm:$0xff]
          %v1583 = vld [vmem:[#allocation2 + $0x180] sm:$0xff]
          %v1584 = vld [vmem:[#allocation2 + $0x1b0] sm:$0xff]
          %v1585 = vld [vmem:[#allocation2 + $0x1e0] sm:$0xff]
          %v1586 = vld [vmem:[#allocation2 + $0x210] sm:$0xff]
          %v1587 = vld [vmem:[#allocation2 + $0x240] sm:$0xff]
          %v1588 = vld [vmem:[#allocation2 + $0x270] sm:$0xff]
          %v1589 = vld [vmem:[#allocation2 + $0x2a0] sm:$0xff]
          %v1590 = vld [vmem:[#allocation2 + $0x2d0] sm:$0xff]
          %v1591 = vmul.f32 %v1575, %v1575
          %v1592 = vmul.f32 %v1576, %v1576
          %v1593 = vmul.f32 %v1577, %v1577
          %v1594 = vmul.f32 %v1578, %v1578
          %v1595 = vmul.f32 %v1579, %v1579
          %v1596 = vmul.f32 %v1580, %v1580
          %v1597 = vmul.f32 %v1581, %v1581
          %v1598 = vmul.f32 %v1582, %v1582
          %v1599 = vmul.f32 %v1583, %v1583
          %v1600 = vmul.f32 %v1584, %v1584
          %v1601 = vmul.f32 %v1585, %v1585
          %v1602 = vmul.f32 %v1586, %v1586
          %v1603 = vmul.f32 %v1587, %v1587
          %v1604 = vmul.f32 %v1588, %v1588
          %v1605 = vmul.f32 %v1589, %v1589
          %v1606 = vmul.f32 %v1590, %v1590
          %1607 = vadd.xlane.f32.xlu0 %v1591
          %v1608 = vpop.xlane.xlu0 %1607
          %1609 = vadd.xlane.f32.xlu0 %v1592
          %v1610 = vpop.xlane.xlu0 %1609
          %1611 = vadd.xlane.f32.xlu0 %v1593
          %v1612 = vpop.xlane.xlu0 %1611
          %1613 = vadd.xlane.f32.xlu0 %v1594
          %v1614 = vpop.xlane.xlu0 %1613
          %1615 = vadd.xlane.f32.xlu0 %v1595
          %v1616 = vpop.xlane.xlu0 %1615
          %1617 = vadd.xlane.f32.xlu0 %v1596
          %v1618 = vpop.xlane.xlu0 %1617
          %1619 = vadd.xlane.f32.xlu0 %v1597
          %v1620 = vpop.xlane.xlu0 %1619
          %1621 = vadd.xlane.f32.xlu0 %v1598
          %v1622 = vpop.xlane.xlu0 %1621
          %1623 = vadd.xlane.f32.xlu0 %v1599
          %v1624 = vpop.xlane.xlu0 %1623
          %1625 = vadd.xlane.f32.xlu0 %v1600
          %v1626 = vpop.xlane.xlu0 %1625
          %1627 = vadd.xlane.f32.xlu0 %v1601
          %v1628 = vpop.xlane.xlu0 %1627
          %1629 = vadd.xlane.f32.xlu0 %v1602
          %v1630 = vpop.xlane.xlu0 %1629
          %1631 = vadd.xlane.f32.xlu0 %v1603
          %v1632 = vpop.xlane.xlu0 %1631
          %1633 = vadd.xlane.f32.xlu0 %v1604
          %v1634 = vpop.xlane.xlu0 %1633
          %1635 = vadd.xlane.f32.xlu0 %v1605
          %v1636 = vpop.xlane.xlu0 %1635
          %1637 = vadd.xlane.f32.xlu0 %v1606
          %v1638 = vpop.xlane.xlu0 %1637
          %v1639 = vmul.f32 %v1608, %v696
          %v1640 = vmul.f32 %v1610, %v696
          %v1641 = vmul.f32 %v1612, %v696
          %v1642 = vmul.f32 %v1614, %v696
          %v1643 = vmul.f32 %v1616, %v696
          %v1644 = vmul.f32 %v1618, %v696
          %v1645 = vmul.f32 %v1620, %v696
          %v1646 = vmul.f32 %v1622, %v696
          %v1647 = vmul.f32 %v1624, %v696
          %v1648 = vmul.f32 %v1626, %v696
          %v1649 = vmul.f32 %v1628, %v696
          %v1650 = vmul.f32 %v1630, %v696
          %v1651 = vmul.f32 %v1632, %v696
          %v1652 = vmul.f32 %v1634, %v696
          %v1653 = vmul.f32 %v1636, %v696
          %v1654 = vmul.f32 %v1638, %v696
          %v1655 = vadd.f32 %v1639, 1.1920929e-07
          %v1656 = vadd.f32 %v1640, 1.1920929e-07
          %v1657 = vadd.f32 %v1641, 1.1920929e-07
          %v1658 = vadd.f32 %v1642, 1.1920929e-07
          %v1659 = vadd.f32 %v1643, 1.1920929e-07
          %v1660 = vadd.f32 %v1644, 1.1920929e-07
          %v1661 = vadd.f32 %v1645, 1.1920929e-07
          %v1662 = vadd.f32 %v1646, 1.1920929e-07
          %v1663 = vadd.f32 %v1647, 1.1920929e-07
          %v1664 = vadd.f32 %v1648, 1.1920929e-07
          %v1665 = vadd.f32 %v1649, 1.1920929e-07
          %v1666 = vadd.f32 %v1650, 1.1920929e-07
          %v1667 = vadd.f32 %v1651, 1.1920929e-07
          %v1668 = vadd.f32 %v1652, 1.1920929e-07
          %v1669 = vadd.f32 %v1653, 1.1920929e-07
          %v1670 = vadd.f32 %v1654, 1.1920929e-07
          %v1671 = vrsqrt.pop %v1655
          %v1672 = vrsqrt.pop %v1656
          %v1673 = vrsqrt.pop %v1657
          %v1674 = vrsqrt.pop %v1658
          %v1675 = vrsqrt.pop %v1659
          %v1676 = vrsqrt.pop %v1660
          %v1677 = vrsqrt.pop %v1661
          %v1678 = vrsqrt.pop %v1662
          %v1679 = vrsqrt.pop %v1663
          %v1680 = vrsqrt.pop %v1664
          %v1681 = vrsqrt.pop %v1665
          %v1682 = vrsqrt.pop %v1666
          %v1683 = vrsqrt.pop %v1667
          %v1684 = vrsqrt.pop %v1668
          %v1685 = vrsqrt.pop %v1669
          %v1686 = vrsqrt.pop %v1670
          %v1687 = vmul.f32 %v1671, 0.1171875
          %v1688 = vmul.f32 %v1672, 0.1171875
          %v1689 = vmul.f32 %v1673, 0.1171875
          %v1690 = vmul.f32 %v1674, 0.1171875
          %v1691 = vmul.f32 %v1675, 0.1171875
          %v1692 = vmul.f32 %v1676, 0.1171875
          %v1693 = vmul.f32 %v1677, 0.1171875
          %v1694 = vmul.f32 %v1678, 0.1171875
          %v1695 = vmul.f32 %v1679, 0.1171875
          %v1696 = vmul.f32 %v1680, 0.1171875
          %v1697 = vmul.f32 %v1681, 0.1171875
          %v1698 = vmul.f32 %v1682, 0.1171875
          %v1699 = vmul.f32 %v1683, 0.1171875
          %v1700 = vmul.f32 %v1684, 0.1171875
          %v1701 = vmul.f32 %v1685, 0.1171875
          %v1702 = vmul.f32 %v1686, 0.1171875
          %v1703 = vmul.f32 %v1575, %v1687
          %v1704 = vmul.f32 %v1576, %v1688
          %v1705 = vmul.f32 %v1577, %v1689
          %v1706 = vmul.f32 %v1578, %v1690
          %v1707 = vmul.f32 %v1579, %v1691
          %v1708 = vmul.f32 %v1580, %v1692
          %v1709 = vmul.f32 %v1581, %v1693
          %v1710 = vmul.f32 %v1582, %v1694
          %v1711 = vmul.f32 %v1583, %v1695
          %v1712 = vmul.f32 %v1584, %v1696
          %v1713 = vmul.f32 %v1585, %v1697
          %v1714 = vmul.f32 %v1586, %v1698
          %v1715 = vmul.f32 %v1587, %v1699
          %v1716 = vmul.f32 %v1588, %v1700
          %v1717 = vmul.f32 %v1589, %v1701
          %v1718 = vmul.f32 %v1590, %v1702
          %v1719 = vmul.f32 %v1703, %v1492
          %v1720 = vmul.f32 %v1704, %v1493
          %v1721 = vmul.f32 %v1705, %v1494
          %v1722 = vmul.f32 %v1706, %v1495
          %v1723 = vmul.f32 %v1707, %v1496
          %v1724 = vmul.f32 %v1708, %v1497
          %v1725 = vmul.f32 %v1709, %v1498
          %v1726 = vmul.f32 %v1710, %v1499
          %v1727 = vmul.f32 %v1711, %v1500
          %v1728 = vmul.f32 %v1712, %v1501
          %v1729 = vmul.f32 %v1713, %v1502
          %v1730 = vmul.f32 %v1714, %v1503
          %v1731 = vmul.f32 %v1715, %v1504
          %v1732 = vmul.f32 %v1716, %v1505
          %v1733 = vmul.f32 %v1717, %v1506
          %v1734 = vmul.f32 %v1718, %v1507
          %1735 = vrot.lane.b32.xlu0 %v1703, 64
          %v1736 = vpop.permute.xlu0 %1735
          %1737 = vrot.lane.b32.xlu0 %v1704, 64
          %v1738 = vpop.permute.xlu0 %1737
          %1739 = vrot.lane.b32.xlu0 %v1705, 64
          %v1740 = vpop.permute.xlu0 %1739
          %1741 = vrot.lane.b32.xlu0 %v1706, 64
          %v1742 = vpop.permute.xlu0 %1741
          %1743 = vrot.lane.b32.xlu0 %v1707, 64
          %v1744 = vpop.permute.xlu0 %1743
          %1745 = vrot.lane.b32.xlu0 %v1708, 64
          %v1746 = vpop.permute.xlu0 %1745
          %1747 = vrot.lane.b32.xlu0 %v1709, 64
          %v1748 = vpop.permute.xlu0 %1747
          %1749 = vrot.lane.b32.xlu0 %v1710, 64
          %v1750 = vpop.permute.xlu0 %1749
          %1751 = vrot.lane.b32.xlu0 %v1711, 64
          %v1752 = vpop.permute.xlu0 %1751
          %1753 = vrot.lane.b32.xlu0 %v1712, 64
          %v1754 = vpop.permute.xlu0 %1753
          %1755 = vrot.lane.b32.xlu0 %v1713, 64
          %v1756 = vpop.permute.xlu0 %1755
          %1757 = vrot.lane.b32.xlu0 %v1714, 64
          %v1758 = vpop.permute.xlu0 %1757
          %1759 = vrot.lane.b32.xlu0 %v1715, 64
          %v1760 = vpop.permute.xlu0 %1759
          %1761 = vrot.lane.b32.xlu0 %v1716, 64
          %v1762 = vpop.permute.xlu0 %1761
          %1763 = vrot.lane.b32.xlu0 %v1717, 64
          %v1764 = vpop.permute.xlu0 %1763
          %1765 = vrot.lane.b32.xlu0 %v1718, 64
          %v1766 = vpop.permute.xlu0 %1765
          %v1767 = vmul.f32 %v1736, %v1508
          %v1768 = vmul.f32 %v1738, %v1509
          %v1769 = vmul.f32 %v1740, %v1510
          %v1770 = vmul.f32 %v1742, %v1511
          %v1771 = vmul.f32 %v1744, %v1512
          %v1772 = vmul.f32 %v1746, %v1513
          %v1773 = vmul.f32 %v1748, %v1514
          %v1774 = vmul.f32 %v1750, %v1515
          %v1775 = vmul.f32 %v1752, %v1516
          %v1776 = vmul.f32 %v1754, %v1517
          %v1777 = vmul.f32 %v1756, %v1518
          %v1778 = vmul.f32 %v1758, %v1519
          %v1779 = vmul.f32 %v1760, %v1520
          %v1780 = vmul.f32 %v1762, %v1521
          %v1781 = vmul.f32 %v1764, %v1522
          %v1782 = vmul.f32 %v1766, %v1523
          %v1783 = vadd.f32 %v1719, %v1767
          %v1784 = vadd.f32 %v1720, %v1768
          %v1785 = vadd.f32 %v1721, %v1769
          %v1786 = vadd.f32 %v1722, %v1770
          %v1787 = vadd.f32 %v1723, %v1771
          %v1788 = vadd.f32 %v1724, %v1772
          %v1789 = vadd.f32 %v1725, %v1773
          %v1790 = vadd.f32 %v1726, %v1774
          %v1791 = vadd.f32 %v1727, %v1775
          %v1792 = vadd.f32 %v1728, %v1776
          %v1793 = vadd.f32 %v1729, %v1777
          %v1794 = vadd.f32 %v1730, %v1778
          %v1795 = vadd.f32 %v1731, %v1779
          %v1796 = vadd.f32 %v1732, %v1780
          %v1797 = vadd.f32 %v1733, %v1781
          %v1798 = vadd.f32 %v1734, %v1782
          %v1799 = vld [vmem:[#allocation2 + $0x10] sm:$0xff]
          %v1800 = vld [vmem:[#allocation2 + $0x40] sm:$0xff]
          %v1801 = vld [vmem:[#allocation2 + $0x70] sm:$0xff]
          %v1802 = vld [vmem:[#allocation2 + $0xa0] sm:$0xff]
          %v1803 = vld [vmem:[#allocation2 + $0xd0] sm:$0xff]
          %v1804 = vld [vmem:[#allocation2 + $0x100] sm:$0xff]
          %v1805 = vld [vmem:[#allocation2 + $0x130] sm:$0xff]
          %v1806 = vld [vmem:[#allocation2 + $0x160] sm:$0xff]
          %v1807 = vld [vmem:[#allocation2 + $0x190] sm:$0xff]
          %v1808 = vld [vmem:[#allocation2 + $0x1c0] sm:$0xff]
          %v1809 = vld [vmem:[#allocation2 + $0x1f0] sm:$0xff]
          %v1810 = vld [vmem:[#allocation2 + $0x220] sm:$0xff]
          %v1811 = vld [vmem:[#allocation2 + $0x250] sm:$0xff]
          %v1812 = vld [vmem:[#allocation2 + $0x280] sm:$0xff]
          %v1813 = vld [vmem:[#allocation2 + $0x2b0] sm:$0xff]
          %v1814 = vld [vmem:[#allocation2 + $0x2e0] sm:$0xff]
          %v1815 = vmul.f32 %v1799, %v1799
          %v1816 = vmul.f32 %v1800, %v1800
          %v1817 = vmul.f32 %v1801, %v1801
          %v1818 = vmul.f32 %v1802, %v1802
          %v1819 = vmul.f32 %v1803, %v1803
          %v1820 = vmul.f32 %v1804, %v1804
          %v1821 = vmul.f32 %v1805, %v1805
          %v1822 = vmul.f32 %v1806, %v1806
          %v1823 = vmul.f32 %v1807, %v1807
          %v1824 = vmul.f32 %v1808, %v1808
          %v1825 = vmul.f32 %v1809, %v1809
          %v1826 = vmul.f32 %v1810, %v1810
          %v1827 = vmul.f32 %v1811, %v1811
          %v1828 = vmul.f32 %v1812, %v1812
          %v1829 = vmul.f32 %v1813, %v1813
          %v1830 = vmul.f32 %v1814, %v1814
          %1831 = vadd.xlane.f32.xlu0 %v1815
          %v1832 = vpop.xlane.xlu0 %1831
          %1833 = vadd.xlane.f32.xlu0 %v1816
          %v1834 = vpop.xlane.xlu0 %1833
          %1835 = vadd.xlane.f32.xlu0 %v1817
          %v1836 = vpop.xlane.xlu0 %1835
          %1837 = vadd.xlane.f32.xlu0 %v1818
          %v1838 = vpop.xlane.xlu0 %1837
          %1839 = vadd.xlane.f32.xlu0 %v1819
          %v1840 = vpop.xlane.xlu0 %1839
          %1841 = vadd.xlane.f32.xlu0 %v1820
          %v1842 = vpop.xlane.xlu0 %1841
          %1843 = vadd.xlane.f32.xlu0 %v1821
          %v1844 = vpop.xlane.xlu0 %1843
          %1845 = vadd.xlane.f32.xlu0 %v1822
          %v1846 = vpop.xlane.xlu0 %1845
          %1847 = vadd.xlane.f32.xlu0 %v1823
          %v1848 = vpop.xlane.xlu0 %1847
          %1849 = vadd.xlane.f32.xlu0 %v1824
          %v1850 = vpop.xlane.xlu0 %1849
          %1851 = vadd.xlane.f32.xlu0 %v1825
          %v1852 = vpop.xlane.xlu0 %1851
          %1853 = vadd.xlane.f32.xlu0 %v1826
          %v1854 = vpop.xlane.xlu0 %1853
          %1855 = vadd.xlane.f32.xlu0 %v1827
          %v1856 = vpop.xlane.xlu0 %1855
          %1857 = vadd.xlane.f32.xlu0 %v1828
          %v1858 = vpop.xlane.xlu0 %1857
          %1859 = vadd.xlane.f32.xlu0 %v1829
          %v1860 = vpop.xlane.xlu0 %1859
          %1861 = vadd.xlane.f32.xlu0 %v1830
          %v1862 = vpop.xlane.xlu0 %1861
          %v1863 = vmul.f32 %v1832, %v696
          %v1864 = vmul.f32 %v1834, %v696
          %v1865 = vmul.f32 %v1836, %v696
          %v1866 = vmul.f32 %v1838, %v696
          %v1867 = vmul.f32 %v1840, %v696
          %v1868 = vmul.f32 %v1842, %v696
          %v1869 = vmul.f32 %v1844, %v696
          %v1870 = vmul.f32 %v1846, %v696
          %v1871 = vmul.f32 %v1848, %v696
          %v1872 = vmul.f32 %v1850, %v696
          %v1873 = vmul.f32 %v1852, %v696
          %v1874 = vmul.f32 %v1854, %v696
          %v1875 = vmul.f32 %v1856, %v696
          %v1876 = vmul.f32 %v1858, %v696
          %v1877 = vmul.f32 %v1860, %v696
          %v1878 = vmul.f32 %v1862, %v696
          %v1879 = vadd.f32 %v1863, 1.1920929e-07
          %v1880 = vadd.f32 %v1864, 1.1920929e-07
          %v1881 = vadd.f32 %v1865, 1.1920929e-07
          %v1882 = vadd.f32 %v1866, 1.1920929e-07
          %v1883 = vadd.f32 %v1867, 1.1920929e-07
          %v1884 = vadd.f32 %v1868, 1.1920929e-07
          %v1885 = vadd.f32 %v1869, 1.1920929e-07
          %v1886 = vadd.f32 %v1870, 1.1920929e-07
          %v1887 = vadd.f32 %v1871, 1.1920929e-07
          %v1888 = vadd.f32 %v1872, 1.1920929e-07
          %v1889 = vadd.f32 %v1873, 1.1920929e-07
          %v1890 = vadd.f32 %v1874, 1.1920929e-07
          %v1891 = vadd.f32 %v1875, 1.1920929e-07
          %v1892 = vadd.f32 %v1876, 1.1920929e-07
          %v1893 = vadd.f32 %v1877, 1.1920929e-07
          %v1894 = vadd.f32 %v1878, 1.1920929e-07
          %v1895 = vrsqrt.pop %v1879
          %v1896 = vrsqrt.pop %v1880
          %v1897 = vrsqrt.pop %v1881
          %v1898 = vrsqrt.pop %v1882
          %v1899 = vrsqrt.pop %v1883
          %v1900 = vrsqrt.pop %v1884
          %v1901 = vrsqrt.pop %v1885
          %v1902 = vrsqrt.pop %v1886
          %v1903 = vrsqrt.pop %v1887
          %v1904 = vrsqrt.pop %v1888
          %v1905 = vrsqrt.pop %v1889
          %v1906 = vrsqrt.pop %v1890
          %v1907 = vrsqrt.pop %v1891
          %v1908 = vrsqrt.pop %v1892
          %v1909 = vrsqrt.pop %v1893
          %v1910 = vrsqrt.pop %v1894
          %v1911 = vmul.f32 %v1799, %v1895
          %v1912 = vmul.f32 %v1800, %v1896
          %v1913 = vmul.f32 %v1801, %v1897
          %v1914 = vmul.f32 %v1802, %v1898
          %v1915 = vmul.f32 %v1803, %v1899
          %v1916 = vmul.f32 %v1804, %v1900
          %v1917 = vmul.f32 %v1805, %v1901
          %v1918 = vmul.f32 %v1806, %v1902
          %v1919 = vmul.f32 %v1807, %v1903
          %v1920 = vmul.f32 %v1808, %v1904
          %v1921 = vmul.f32 %v1809, %v1905
          %v1922 = vmul.f32 %v1810, %v1906
          %v1923 = vmul.f32 %v1811, %v1907
          %v1924 = vmul.f32 %v1812, %v1908
          %v1925 = vmul.f32 %v1813, %v1909
          %v1926 = vmul.f32 %v1814, %v1910
          %v1927 = vmul.f32 %v1911, %v1492
          %v1928 = vmul.f32 %v1912, %v1493
          %v1929 = vmul.f32 %v1913, %v1494
          %v1930 = vmul.f32 %v1914, %v1495
          %v1931 = vmul.f32 %v1915, %v1496
          %v1932 = vmul.f32 %v1916, %v1497
          %v1933 = vmul.f32 %v1917, %v1498
          %v1934 = vmul.f32 %v1918, %v1499
          %v1935 = vmul.f32 %v1919, %v1500
          %v1936 = vmul.f32 %v1920, %v1501
          %v1937 = vmul.f32 %v1921, %v1502
          %v1938 = vmul.f32 %v1922, %v1503
          %v1939 = vmul.f32 %v1923, %v1504
          %v1940 = vmul.f32 %v1924, %v1505
          %v1941 = vmul.f32 %v1925, %v1506
          %v1942 = vmul.f32 %v1926, %v1507
          %1943 = vrot.lane.b32.xlu0 %v1911, 64
          %v1944 = vpop.permute.xlu0 %1943
          %1945 = vrot.lane.b32.xlu0 %v1912, 64
          %v1946 = vpop.permute.xlu0 %1945
          %1947 = vrot.lane.b32.xlu0 %v1913, 64
          %v1948 = vpop.permute.xlu0 %1947
          %1949 = vrot.lane.b32.xlu0 %v1914, 64
          %v1950 = vpop.permute.xlu0 %1949
          %1951 = vrot.lane.b32.xlu0 %v1915, 64
          %v1952 = vpop.permute.xlu0 %1951
          %1953 = vrot.lane.b32.xlu0 %v1916, 64
          %v1954 = vpop.permute.xlu0 %1953
          %1955 = vrot.lane.b32.xlu0 %v1917, 64
          %v1956 = vpop.permute.xlu0 %1955
          %1957 = vrot.lane.b32.xlu0 %v1918, 64
          %v1958 = vpop.permute.xlu0 %1957
          %1959 = vrot.lane.b32.xlu0 %v1919, 64
          %v1960 = vpop.permute.xlu0 %1959
          %1961 = vrot.lane.b32.xlu0 %v1920, 64
          %v1962 = vpop.permute.xlu0 %1961
          %1963 = vrot.lane.b32.xlu0 %v1921, 64
          %v1964 = vpop.permute.xlu0 %1963
          %1965 = vrot.lane.b32.xlu0 %v1922, 64
          %v1966 = vpop.permute.xlu0 %1965
          %1967 = vrot.lane.b32.xlu0 %v1923, 64
          %v1968 = vpop.permute.xlu0 %1967
          %1969 = vrot.lane.b32.xlu0 %v1924, 64
          %v1970 = vpop.permute.xlu0 %1969
          %1971 = vrot.lane.b32.xlu0 %v1925, 64
          %v1972 = vpop.permute.xlu0 %1971
          %1973 = vrot.lane.b32.xlu0 %v1926, 64
          %v1974 = vpop.permute.xlu0 %1973
          %v1975 = vmul.f32 %v1944, %v1508
          %v1976 = vmul.f32 %v1946, %v1509
          %v1977 = vmul.f32 %v1948, %v1510
          %v1978 = vmul.f32 %v1950, %v1511
          %v1979 = vmul.f32 %v1952, %v1512
          %v1980 = vmul.f32 %v1954, %v1513
          %v1981 = vmul.f32 %v1956, %v1514
          %v1982 = vmul.f32 %v1958, %v1515
          %v1983 = vmul.f32 %v1960, %v1516
          %v1984 = vmul.f32 %v1962, %v1517
          %v1985 = vmul.f32 %v1964, %v1518
          %v1986 = vmul.f32 %v1966, %v1519
          %v1987 = vmul.f32 %v1968, %v1520
          %v1988 = vmul.f32 %v1970, %v1521
          %v1989 = vmul.f32 %v1972, %v1522
          %v1990 = vmul.f32 %v1974, %v1523
          %v1991 = vadd.f32 %v1927, %v1975
          %v1992 = vadd.f32 %v1928, %v1976
          %v1993 = vadd.f32 %v1929, %v1977
          %v1994 = vadd.f32 %v1930, %v1978
          %v1995 = vadd.f32 %v1931, %v1979
          %v1996 = vadd.f32 %v1932, %v1980
          %v1997 = vadd.f32 %v1933, %v1981
          %v1998 = vadd.f32 %v1934, %v1982
          %v1999 = vadd.f32 %v1935, %v1983
          %v2000 = vadd.f32 %v1936, %v1984
          %v2001 = vadd.f32 %v1937, %v1985
          %v2002 = vadd.f32 %v1938, %v1986
          %v2003 = vadd.f32 %v1939, %v1987
          %v2004 = vadd.f32 %v1940, %v1988
          %v2005 = vadd.f32 %v1941, %v1989
          %v2006 = vadd.f32 %v1942, %v1990
          %v2007 = vld [vmem:[#allocation2 + $0x20] sm:$0xff]
          %v2008 = vld [vmem:[#allocation2 + $0x50] sm:$0xff]
          %v2009 = vld [vmem:[#allocation2 + $0x80] sm:$0xff]
          %v2010 = vld [vmem:[#allocation2 + $0xb0] sm:$0xff]
          %v2011 = vld [vmem:[#allocation2 + $0xe0] sm:$0xff]
          %v2012 = vld [vmem:[#allocation2 + $0x110] sm:$0xff]
          %v2013 = vld [vmem:[#allocation2 + $0x140] sm:$0xff]
          %v2014 = vld [vmem:[#allocation2 + $0x170] sm:$0xff]
          %v2015 = vld [vmem:[#allocation2 + $0x1a0] sm:$0xff]
          %v2016 = vld [vmem:[#allocation2 + $0x1d0] sm:$0xff]
          %v2017 = vld [vmem:[#allocation2 + $0x200] sm:$0xff]
          %v2018 = vld [vmem:[#allocation2 + $0x230] sm:$0xff]
          %v2019 = vld [vmem:[#allocation2 + $0x260] sm:$0xff]
          %v2020 = vld [vmem:[#allocation2 + $0x290] sm:$0xff]
          %v2021 = vld [vmem:[#allocation2 + $0x2c0] sm:$0xff]
          %v2022 = vld [vmem:[#allocation2 + $0x2f0] sm:$0xff]
          %s2023 = sld [smem:[#allocation11]]
          %v2024 = vstv %s2023
          %v2025 = vmul.f32 %v2024, %v2007
          %v2026 = vmul.f32 %v2024, %v2008
          %v2027 = vmul.f32 %v2024, %v2009
          %v2028 = vmul.f32 %v2024, %v2010
          %v2029 = vmul.f32 %v2024, %v2011
          %v2030 = vmul.f32 %v2024, %v2012
          %v2031 = vmul.f32 %v2024, %v2013
          %v2032 = vmul.f32 %v2024, %v2014
          %v2033 = vmul.f32 %v2024, %v2015
          %v2034 = vmul.f32 %v2024, %v2016
          %v2035 = vmul.f32 %v2024, %v2017
          %v2036 = vmul.f32 %v2024, %v2018
          %v2037 = vmul.f32 %v2024, %v2019
          %v2038 = vmul.f32 %v2024, %v2020
          %v2039 = vmul.f32 %v2024, %v2021
          %v2040 = vmul.f32 %v2024, %v2022
          %s2041 = sld [smem:[#allocation11 + $0x1]]
          %v2042 = vld [vmem:[#allocation15] sm:$0xff]
          %v2043 = vld [vmem:[#allocation15 + $0x10] sm:$0xff]
          %v2044 = vld [vmem:[#allocation15 + $0x20] sm:$0xff]
          %v2045 = vld [vmem:[#allocation15 + $0x30] sm:$0xff]
          %v2046 = vld [vmem:[#allocation15 + $0x40] sm:$0xff]
          %v2047 = vld [vmem:[#allocation15 + $0x50] sm:$0xff]
          %v2048 = vld [vmem:[#allocation15 + $0x60] sm:$0xff]
          %v2049 = vld [vmem:[#allocation15 + $0x70] sm:$0xff]
          %v2050 = vld [vmem:[#allocation15 + $0x80] sm:$0xff]
          %v2051 = vld [vmem:[#allocation15 + $0x90] sm:$0xff]
          %v2052 = vld [vmem:[#allocation15 + $0xa0] sm:$0xff]
          %v2053 = vld [vmem:[#allocation15 + $0xb0] sm:$0xff]
          %v2054 = vld [vmem:[#allocation15 + $0xc0] sm:$0xff]
          %v2055 = vld [vmem:[#allocation15 + $0xd0] sm:$0xff]
          %v2056 = vld [vmem:[#allocation15 + $0xe0] sm:$0xff]
          %v2057 = vld [vmem:[#allocation15 + $0xf0] sm:$0xff]
          %v2058 = vstv %s2041
          %v2059 = vmul.f32 %v2058, %v2042
          %v2060 = vmul.f32 %v2058, %v2043
          %v2061 = vmul.f32 %v2058, %v2044
          %v2062 = vmul.f32 %v2058, %v2045
          %v2063 = vmul.f32 %v2058, %v2046
          %v2064 = vmul.f32 %v2058, %v2047
          %v2065 = vmul.f32 %v2058, %v2048
          %v2066 = vmul.f32 %v2058, %v2049
          %v2067 = vmul.f32 %v2058, %v2050
          %v2068 = vmul.f32 %v2058, %v2051
          %v2069 = vmul.f32 %v2058, %v2052
          %v2070 = vmul.f32 %v2058, %v2053
          %v2071 = vmul.f32 %v2058, %v2054
          %v2072 = vmul.f32 %v2058, %v2055
          %v2073 = vmul.f32 %v2058, %v2056
          %v2074 = vmul.f32 %v2058, %v2057
          %v2075 = vadd.f32 %v2025, %v2059
          %v2076 = vadd.f32 %v2026, %v2060
          %v2077 = vadd.f32 %v2027, %v2061
          %v2078 = vadd.f32 %v2028, %v2062
          %v2079 = vadd.f32 %v2029, %v2063
          %v2080 = vadd.f32 %v2030, %v2064
          %v2081 = vadd.f32 %v2031, %v2065
          %v2082 = vadd.f32 %v2032, %v2066
          %v2083 = vadd.f32 %v2033, %v2067
          %v2084 = vadd.f32 %v2034, %v2068
          %v2085 = vadd.f32 %v2035, %v2069
          %v2086 = vadd.f32 %v2036, %v2070
          %v2087 = vadd.f32 %v2037, %v2071
          %v2088 = vadd.f32 %v2038, %v2072
          %v2089 = vadd.f32 %v2039, %v2073
          %v2090 = vadd.f32 %v2040, %v2074
          %v2091 = vpack.c.bf16 %v1784, %v1783
          %v2092 = vpack.c.bf16 %v1786, %v1785
          %v2093 = vpack.c.bf16 %v1788, %v1787
          %v2094 = vpack.c.bf16 %v1790, %v1789
          %v2095 = vpack.c.bf16 %v1792, %v1791
          %v2096 = vpack.c.bf16 %v1794, %v1793
          %v2097 = vpack.c.bf16 %v1796, %v1795
          %v2098 = vpack.c.bf16 %v1798, %v1797
          %v2099 = vpack.c.bf16 %v1992, %v1991
          %v2100 = vpack.c.bf16 %v1994, %v1993
          %v2101 = vpack.c.bf16 %v1996, %v1995
          %v2102 = vpack.c.bf16 %v1998, %v1997
          %v2103 = vpack.c.bf16 %v2000, %v1999
          %v2104 = vpack.c.bf16 %v2002, %v2001
          %v2105 = vpack.c.bf16 %v2004, %v2003
          %v2106 = vpack.c.bf16 %v2006, %v2005
          %2107 = vmatprep.subr.bf16.mxu0 0
          %2108 = vmatpush1.bf16.xpose.msra.mxu0 %v2099
          %2109 = vmatprep.subr.bf16.mxu0 0
          %2110 = vmatpush1.bf16.xpose.msra.mxu0 %v2100
          %2111 = vmatprep.subr.bf16.mxu0 0
          %2112 = vmatpush1.bf16.xpose.msra.mxu0 %v2101
          %2113 = vmatprep.subr.bf16.mxu0 0
          %2114 = vmatpush1.bf16.xpose.msra.mxu0 %v2102
          %2115 = vmatprep.subr.bf16.mxu0 0
          %2116 = vmatpush1.bf16.xpose.msra.mxu0 %v2103
          %2117 = vmatprep.subr.bf16.mxu0 0
          %2118 = vmatpush1.bf16.xpose.msra.mxu0 %v2104
          %2119 = vmatprep.subr.bf16.mxu0 0
          %2120 = vmatpush1.bf16.xpose.msra.mxu0 %v2105
          %2121 = vmatprep.subr.bf16.mxu0 0
          %2122 = vmatpush1.bf16.xpose.msra.mxu0 %v2106
          %2123 = vmatprep.subr.bf16.mxu0 0
          %2124 = vmatpush1.bf16.xpose.msra.mxu0 0
          %2125 = vmatprep.subr.bf16.mxu0 0
          %2126 = vmatpush1.bf16.xpose.msra.mxu0 0
          %2127 = vmatprep.subr.bf16.mxu0 0
          %2128 = vmatpush1.bf16.xpose.msra.mxu0 0
          %2129 = vmatprep.subr.bf16.mxu0 0
          %2130 = vmatpush1.bf16.xpose.msra.mxu0 0
          %2131 = vmatprep.subr.bf16.mxu0 0
          %2132 = vmatpush1.bf16.xpose.msra.mxu0 0
          %2133 = vmatprep.subr.bf16.mxu0 0
          %2134 = vmatpush1.bf16.xpose.msra.mxu0 0
          %2135 = vmatprep.subr.bf16.mxu0 0
          %2136 = vmatpush1.bf16.xpose.msra.mxu0 0
          %2137 = vmatprep.subr.bf16.mxu0 0
          %2138 = vmatpush1.bf16.xpose.msra.mxu0 0
          %2139 = vmatprep.mubr.bf16.mxu0 0
          %2140 = vmatmul.mubr.bf16.gmra.mrb[0].mxu0 %v2091
          %v2141 = vpop.f32.mrb[0].mxu0
          %v2142 = vadd.f32 %v1559, %v2141
          %v2143 = vpop.f32.mrb[0].mxu0
          %v2144 = vpop.f32.mrb[0].mxu0
          %v2145 = vadd.f32 %v1560, %v2144
          %v2146 = vpop.f32.mrb[0].mxu0
          %2147 = vmatprep.mubr.bf16.mxu0 0
          %2148 = vmatmul.mubr.bf16.gmra.mrb[0].mxu0 %v2092
          %v2149 = vpop.f32.mrb[0].mxu0
          %v2150 = vadd.f32 %v1561, %v2149
          %v2151 = vpop.f32.mrb[0].mxu0
          %v2152 = vpop.f32.mrb[0].mxu0
          %v2153 = vadd.f32 %v1562, %v2152
          %v2154 = vpop.f32.mrb[0].mxu0
          %2155 = vmatprep.mubr.bf16.mxu0 0
          %2156 = vmatmul.mubr.bf16.gmra.mrb[0].mxu0 %v2093
          %v2157 = vpop.f32.mrb[0].mxu0
          %v2158 = vadd.f32 %v1563, %v2157
          %v2159 = vpop.f32.mrb[0].mxu0
          %v2160 = vpop.f32.mrb[0].mxu0
          %v2161 = vadd.f32 %v1564, %v2160
          %v2162 = vpop.f32.mrb[0].mxu0
          %2163 = vmatprep.mubr.bf16.mxu0 0
          %2164 = vmatmul.mubr.bf16.gmra.mrb[0].mxu0 %v2094
          %v2165 = vpop.f32.mrb[0].mxu0
          %v2166 = vadd.f32 %v1565, %v2165
          %v2167 = vpop.f32.mrb[0].mxu0
          %v2168 = vpop.f32.mrb[0].mxu0
          %v2169 = vadd.f32 %v1566, %v2168
          %v2170 = vpop.f32.mrb[0].mxu0
          %2171 = vmatprep.mubr.bf16.mxu0 0
          %2172 = vmatmul.mubr.bf16.gmra.mrb[0].mxu0 %v2095
          %v2173 = vpop.f32.mrb[0].mxu0
          %v2174 = vadd.f32 %v1567, %v2173
          %v2175 = vpop.f32.mrb[0].mxu0
          %v2176 = vpop.f32.mrb[0].mxu0
          %v2177 = vadd.f32 %v1568, %v2176
          %v2178 = vpop.f32.mrb[0].mxu0
          %2179 = vmatprep.mubr.bf16.mxu0 0
          %2180 = vmatmul.mubr.bf16.gmra.mrb[0].mxu0 %v2096
          %v2181 = vpop.f32.mrb[0].mxu0
          %v2182 = vadd.f32 %v1569, %v2181
          %v2183 = vpop.f32.mrb[0].mxu0
          %v2184 = vpop.f32.mrb[0].mxu0
          %v2185 = vadd.f32 %v1570, %v2184
          %v2186 = vpop.f32.mrb[0].mxu0
          %2187 = vmatprep.mubr.bf16.mxu0 0
          %2188 = vmatmul.mubr.bf16.gmra.mrb[0].mxu0 %v2097
          %v2189 = vpop.f32.mrb[0].mxu0
          %v2190 = vadd.f32 %v1571, %v2189
          %v2191 = vpop.f32.mrb[0].mxu0
          %v2192 = vpop.f32.mrb[0].mxu0
          %v2193 = vadd.f32 %v1572, %v2192
          %v2194 = vpop.f32.mrb[0].mxu0
          %2195 = vmatprep.mubr.bf16.mxu0 0
          %2196 = vmatmul.mubr.bf16.gmra.mrb[0].mxu0 %v2098
          %v2197 = vpop.f32.mrb[0].mxu0
          %v2198 = vadd.f32 %v1573, %v2197
          %v2199 = vpop.f32.mrb[0].mxu0
          %v2200 = vpop.f32.mrb[0].mxu0
          %v2201 = vadd.f32 %v1574, %v2200
          %v2202 = vpop.f32.mrb[0].mxu0
          %2203 = vdwg.mxu0
          %2204 = vmax.xlane.f32.xlu0 %v2142
          %v2205 = vpop.xlane.xlu0 %2204
          %2206 = vmax.xlane.f32.xlu0 %v2145
          %v2207 = vpop.xlane.xlu0 %2206
          %2208 = vmax.xlane.f32.xlu0 %v2150
          %v2209 = vpop.xlane.xlu0 %2208
          %2210 = vmax.xlane.f32.xlu0 %v2153
          %v2211 = vpop.xlane.xlu0 %2210
          %2212 = vmax.xlane.f32.xlu0 %v2158
          %v2213 = vpop.xlane.xlu0 %2212
          %2214 = vmax.xlane.f32.xlu0 %v2161
          %v2215 = vpop.xlane.xlu0 %2214
          %2216 = vmax.xlane.f32.xlu0 %v2166
          %v2217 = vpop.xlane.xlu0 %2216
          %2218 = vmax.xlane.f32.xlu0 %v2169
          %v2219 = vpop.xlane.xlu0 %2218
          %2220 = vmax.xlane.f32.xlu0 %v2174
          %v2221 = vpop.xlane.xlu0 %2220
          %2222 = vmax.xlane.f32.xlu0 %v2177
          %v2223 = vpop.xlane.xlu0 %2222
          %2224 = vmax.xlane.f32.xlu0 %v2182
          %v2225 = vpop.xlane.xlu0 %2224
          %2226 = vmax.xlane.f32.xlu0 %v2185
          %v2227 = vpop.xlane.xlu0 %2226
          %2228 = vmax.xlane.f32.xlu0 %v2190
          %v2229 = vpop.xlane.xlu0 %2228
          %2230 = vmax.xlane.f32.xlu0 %v2193
          %v2231 = vpop.xlane.xlu0 %2230
          %2232 = vmax.xlane.f32.xlu0 %v2198
          %v2233 = vpop.xlane.xlu0 %2232
          %2234 = vmax.xlane.f32.xlu0 %v2201
          %v2235 = vpop.xlane.xlu0 %2234
          %v2236 = vsub.f32 %v2142, %v2205
          %v2237 = vsub.f32 %v2145, %v2207
          %v2238 = vsub.f32 %v2150, %v2209
          %v2239 = vsub.f32 %v2153, %v2211
          %v2240 = vsub.f32 %v2158, %v2213
          %v2241 = vsub.f32 %v2161, %v2215
          %v2242 = vsub.f32 %v2166, %v2217
          %v2243 = vsub.f32 %v2169, %v2219
          %v2244 = vsub.f32 %v2174, %v2221
          %v2245 = vsub.f32 %v2177, %v2223
          %v2246 = vsub.f32 %v2182, %v2225
          %v2247 = vsub.f32 %v2185, %v2227
          %v2248 = vsub.f32 %v2190, %v2229
          %v2249 = vsub.f32 %v2193, %v2231
          %v2250 = vsub.f32 %v2198, %v2233
          %v2251 = vsub.f32 %v2201, %v2235
          %v2252 = vmul.f32 %v2236, 1.442695
          %v2253 = vpow.pop %v2252
          %v2254 = vmul.f32 %v2237, 1.442695
          %v2255 = vpow.pop %v2254
          %v2256 = vmul.f32 %v2238, 1.442695
          %v2257 = vpow.pop %v2256
          %v2258 = vmul.f32 %v2239, 1.442695
          %v2259 = vpow.pop %v2258
          %v2260 = vmul.f32 %v2240, 1.442695
          %v2261 = vpow.pop %v2260
          %v2262 = vmul.f32 %v2241, 1.442695
          %v2263 = vpow.pop %v2262
          %v2264 = vmul.f32 %v2242, 1.442695
          %v2265 = vpow.pop %v2264
          %v2266 = vmul.f32 %v2243, 1.442695
          %v2267 = vpow.pop %v2266
          %v2268 = vmul.f32 %v2244, 1.442695
          %v2269 = vpow.pop %v2268
          %v2270 = vmul.f32 %v2245, 1.442695
          %v2271 = vpow.pop %v2270
          %v2272 = vmul.f32 %v2246, 1.442695
          %v2273 = vpow.pop %v2272
          %v2274 = vmul.f32 %v2247, 1.442695
          %v2275 = vpow.pop %v2274
          %v2276 = vmul.f32 %v2248, 1.442695
          %v2277 = vpow.pop %v2276
          %v2278 = vmul.f32 %v2249, 1.442695
          %v2279 = vpow.pop %v2278
          %v2280 = vmul.f32 %v2250, 1.442695
          %v2281 = vpow.pop %v2280
          %v2282 = vmul.f32 %v2251, 1.442695
          %v2283 = vpow.pop %v2282
          %2284 = vadd.xlane.f32.xlu0 %v2253
          %v2285 = vpop.xlane.xlu0 %2284
          %2286 = vadd.xlane.f32.xlu0 %v2255
          %v2287 = vpop.xlane.xlu0 %2286
          %2288 = vadd.xlane.f32.xlu0 %v2257
          %v2289 = vpop.xlane.xlu0 %2288
          %2290 = vadd.xlane.f32.xlu0 %v2259
          %v2291 = vpop.xlane.xlu0 %2290
          %2292 = vadd.xlane.f32.xlu0 %v2261
          %v2293 = vpop.xlane.xlu0 %2292
          %2294 = vadd.xlane.f32.xlu0 %v2263
          %v2295 = vpop.xlane.xlu0 %2294
          %2296 = vadd.xlane.f32.xlu0 %v2265
          %v2297 = vpop.xlane.xlu0 %2296
          %2298 = vadd.xlane.f32.xlu0 %v2267
          %v2299 = vpop.xlane.xlu0 %2298
          %2300 = vadd.xlane.f32.xlu0 %v2269
          %v2301 = vpop.xlane.xlu0 %2300
          %2302 = vadd.xlane.f32.xlu0 %v2271
          %v2303 = vpop.xlane.xlu0 %2302
          %2304 = vadd.xlane.f32.xlu0 %v2273
          %v2305 = vpop.xlane.xlu0 %2304
          %2306 = vadd.xlane.f32.xlu0 %v2275
          %v2307 = vpop.xlane.xlu0 %2306
          %2308 = vadd.xlane.f32.xlu0 %v2277
          %v2309 = vpop.xlane.xlu0 %2308
          %2310 = vadd.xlane.f32.xlu0 %v2279
          %v2311 = vpop.xlane.xlu0 %2310
          %2312 = vadd.xlane.f32.xlu0 %v2281
          %v2313 = vpop.xlane.xlu0 %2312
          %2314 = vadd.xlane.f32.xlu0 %v2283
          %v2315 = vpop.xlane.xlu0 %2314
          %v2316 = vrcp.pop %v2285
          %v2317 = vrcp.pop %v2287
          %v2318 = vrcp.pop %v2289
          %v2319 = vrcp.pop %v2291
          %v2320 = vrcp.pop %v2293
          %v2321 = vrcp.pop %v2295
          %v2322 = vrcp.pop %v2297
          %v2323 = vrcp.pop %v2299
          %v2324 = vrcp.pop %v2301
          %v2325 = vrcp.pop %v2303
          %v2326 = vrcp.pop %v2305
          %v2327 = vrcp.pop %v2307
          %v2328 = vrcp.pop %v2309
          %v2329 = vrcp.pop %v2311
          %v2330 = vrcp.pop %v2313
          %v2331 = vrcp.pop %v2315
          %v2332 = vmul.f32 %v2253, %v2316
          %v2333 = vmul.f32 %v2255, %v2317
          %v2334 = vmul.f32 %v2257, %v2318
          %v2335 = vmul.f32 %v2259, %v2319
          %v2336 = vmul.f32 %v2261, %v2320
          %v2337 = vmul.f32 %v2263, %v2321
          %v2338 = vmul.f32 %v2265, %v2322
          %v2339 = vmul.f32 %v2267, %v2323
          %v2340 = vmul.f32 %v2269, %v2324
          %v2341 = vmul.f32 %v2271, %v2325
          %v2342 = vmul.f32 %v2273, %v2326
          %v2343 = vmul.f32 %v2275, %v2327
          %v2344 = vmul.f32 %v2277, %v2328
          %v2345 = vmul.f32 %v2279, %v2329
          %v2346 = vmul.f32 %v2281, %v2330
          %v2347 = vmul.f32 %v2283, %v2331
          %v2348 = vpack.c.bf16 %v2333, %v2332
          %v2349 = vpack.c.bf16 %v2335, %v2334
          %v2350 = vpack.c.bf16 %v2337, %v2336
          %v2351 = vpack.c.bf16 %v2339, %v2338
          %v2352 = vpack.c.bf16 %v2341, %v2340
          %v2353 = vpack.c.bf16 %v2343, %v2342
          %v2354 = vpack.c.bf16 %v2345, %v2344
          %v2355 = vpack.c.bf16 %v2347, %v2346
          %v2356 = vpack.c.bf16 %v2076, %v2075
          %v2357 = vpack.c.bf16 %v2078, %v2077
          %v2358 = vpack.c.bf16 %v2080, %v2079
          %v2359 = vpack.c.bf16 %v2082, %v2081
          %v2360 = vpack.c.bf16 %v2084, %v2083
          %v2361 = vpack.c.bf16 %v2086, %v2085
          %v2362 = vpack.c.bf16 %v2088, %v2087
          %v2363 = vpack.c.bf16 %v2090, %v2089
          %2364 = vmatprep.subr.bf16.mxu0 0
          %2365 = vmatpush1.bf16.msra.mxu0 %v2356
          %2366 = vmatprep.subr.bf16.mxu0 0
          %2367 = vmatpush1.bf16.msra.mxu0 %v2357
          %2368 = vmatprep.subr.bf16.mxu0 0
          %2369 = vmatpush1.bf16.msra.mxu0 %v2358
          %2370 = vmatprep.subr.bf16.mxu0 0
          %2371 = vmatpush1.bf16.msra.mxu0 %v2359
          %2372 = vmatprep.subr.bf16.mxu0 0
          %2373 = vmatpush1.bf16.msra.mxu0 %v2360
          %2374 = vmatprep.subr.bf16.mxu0 0
          %2375 = vmatpush1.bf16.msra.mxu0 %v2361
          %2376 = vmatprep.subr.bf16.mxu0 0
          %2377 = vmatpush1.bf16.msra.mxu0 %v2362
          %2378 = vmatprep.subr.bf16.mxu0 0
          %2379 = vmatpush1.bf16.msra.mxu0 %v2363
          %2380 = vmatprep.subr.bf16.mxu0 0
          %2381 = vmatpush1.bf16.msra.mxu0 0
          %2382 = vmatprep.subr.bf16.mxu0 0
          %2383 = vmatpush1.bf16.msra.mxu0 0
          %2384 = vmatprep.subr.bf16.mxu0 0
          %2385 = vmatpush1.bf16.msra.mxu0 0
          %2386 = vmatprep.subr.bf16.mxu0 0
          %2387 = vmatpush1.bf16.msra.mxu0 0
          %2388 = vmatprep.subr.bf16.mxu0 0
          %2389 = vmatpush1.bf16.msra.mxu0 0
          %2390 = vmatprep.subr.bf16.mxu0 0
          %2391 = vmatpush1.bf16.msra.mxu0 0
          %2392 = vmatprep.subr.bf16.mxu0 0
          %2393 = vmatpush1.bf16.msra.mxu0 0
          %2394 = vmatprep.subr.bf16.mxu0 0
          %2395 = vmatpush1.bf16.msra.mxu0 0
          %2396 = vmatprep.mubr.bf16.mxu0 0
          %2397 = vmatmul.mubr.bf16.gmra.mrb[0].mxu0 %v2348
          %v2398 = vpop.f32.mrb[0].mxu0
          %v2399 = vadd.f32 0.0, %v2398
          %v2400 = vpop.f32.mrb[0].mxu0
          %v2401 = vpop.f32.mrb[0].mxu0
          %v2402 = vadd.f32 0.0, %v2401
          %v2403 = vpop.f32.mrb[0].mxu0
          %2404 = vmatprep.mubr.bf16.mxu0 0
          %2405 = vmatmul.mubr.bf16.gmra.mrb[0].mxu0 %v2349
          %v2406 = vpop.f32.mrb[0].mxu0
          %v2407 = vadd.f32 0.0, %v2406
          %v2408 = vpop.f32.mrb[0].mxu0
          %v2409 = vpop.f32.mrb[0].mxu0
          %v2410 = vadd.f32 0.0, %v2409
          %v2411 = vpop.f32.mrb[0].mxu0
          %2412 = vmatprep.mubr.bf16.mxu0 0
          %2413 = vmatmul.mubr.bf16.gmra.mrb[0].mxu0 %v2350
          %v2414 = vpop.f32.mrb[0].mxu0
          %v2415 = vadd.f32 0.0, %v2414
          %v2416 = vpop.f32.mrb[0].mxu0
          %v2417 = vpop.f32.mrb[0].mxu0
          %v2418 = vadd.f32 0.0, %v2417
          %v2419 = vpop.f32.mrb[0].mxu0
          %2420 = vmatprep.mubr.bf16.mxu0 0
          %2421 = vmatmul.mubr.bf16.gmra.mrb[0].mxu0 %v2351
          %v2422 = vpop.f32.mrb[0].mxu0
          %v2423 = vadd.f32 0.0, %v2422
          %v2424 = vpop.f32.mrb[0].mxu0
          %v2425 = vpop.f32.mrb[0].mxu0
          %v2426 = vadd.f32 0.0, %v2425
          %v2427 = vpop.f32.mrb[0].mxu0
          %2428 = vmatprep.mubr.bf16.mxu0 0
          %2429 = vmatmul.mubr.bf16.gmra.mrb[0].mxu0 %v2352
          %v2430 = vpop.f32.mrb[0].mxu0
          %v2431 = vadd.f32 0.0, %v2430
          %v2432 = vpop.f32.mrb[0].mxu0
          %v2433 = vpop.f32.mrb[0].mxu0
          %v2434 = vadd.f32 0.0, %v2433
          %v2435 = vpop.f32.mrb[0].mxu0
          %2436 = vmatprep.mubr.bf16.mxu0 0
          %2437 = vmatmul.mubr.bf16.gmra.mrb[0].mxu0 %v2353
          %v2438 = vpop.f32.mrb[0].mxu0
          %v2439 = vadd.f32 0.0, %v2438
          %v2440 = vpop.f32.mrb[0].mxu0
          %v2441 = vpop.f32.mrb[0].mxu0
          %v2442 = vadd.f32 0.0, %v2441
          %v2443 = vpop.f32.mrb[0].mxu0
          %2444 = vmatprep.mubr.bf16.mxu0 0
          %2445 = vmatmul.mubr.bf16.gmra.mrb[0].mxu0 %v2354
          %v2446 = vpop.f32.mrb[0].mxu0
          %v2447 = vadd.f32 0.0, %v2446
          %v2448 = vpop.f32.mrb[0].mxu0
          %v2449 = vpop.f32.mrb[0].mxu0
          %v2450 = vadd.f32 0.0, %v2449
          %v2451 = vpop.f32.mrb[0].mxu0
          %2452 = vmatprep.mubr.bf16.mxu0 0
          %2453 = vmatmul.mubr.bf16.gmra.mrb[0].mxu0 %v2355
          %v2454 = vpop.f32.mrb[0].mxu0
          %v2455 = vadd.f32 0.0, %v2454
          %v2456 = vpop.f32.mrb[0].mxu0
          %v2457 = vpop.f32.mrb[0].mxu0
          %v2458 = vadd.f32 0.0, %v2457
          %v2459 = vpop.f32.mrb[0].mxu0
          %2460 = vdwg.mxu0
          %v2461 = vpack.c.bf16 %v2402, %v2399
          %v2462 = vpack.c.bf16 %v2410, %v2407
          %v2463 = vpack.c.bf16 %v2418, %v2415
          %v2464 = vpack.c.bf16 %v2426, %v2423
          %v2465 = vpack.c.bf16 %v2434, %v2431
          %v2466 = vpack.c.bf16 %v2442, %v2439
          %v2467 = vpack.c.bf16 %v2450, %v2447
          %v2468 = vpack.c.bf16 %v2458, %v2455
          %2469 = vst [vmem:[#allocation3] sm:$0xff] %v2461
          %2470 = vst [vmem:[#allocation3 + $0x10] sm:$0xff] %v2462
          %2471 = vst [vmem:[#allocation3 + $0x20] sm:$0xff] %v2463
          %2472 = vst [vmem:[#allocation3 + $0x30] sm:$0xff] %v2464
          %2473 = vst [vmem:[#allocation3 + $0x40] sm:$0xff] %v2465
          %2474 = vst [vmem:[#allocation3 + $0x50] sm:$0xff] %v2466
          %2475 = vst [vmem:[#allocation3 + $0x60] sm:$0xff] %v2467
          %2476 = vst [vmem:[#allocation3 + $0x70] sm:$0xff] %v2468
          %v2477 = vld [vmem:[#allocation2 + $0x8] sm:$0xff]
          %v2478 = vld [vmem:[#allocation2 + $0x38] sm:$0xff]
          %v2479 = vld [vmem:[#allocation2 + $0x68] sm:$0xff]
          %v2480 = vld [vmem:[#allocation2 + $0x98] sm:$0xff]
          %v2481 = vld [vmem:[#allocation2 + $0xc8] sm:$0xff]
          %v2482 = vld [vmem:[#allocation2 + $0xf8] sm:$0xff]
          %v2483 = vld [vmem:[#allocation2 + $0x128] sm:$0xff]
          %v2484 = vld [vmem:[#allocation2 + $0x158] sm:$0xff]
          %v2485 = vld [vmem:[#allocation2 + $0x188] sm:$0xff]
          %v2486 = vld [vmem:[#allocation2 + $0x1b8] sm:$0xff]
          %v2487 = vld [vmem:[#allocation2 + $0x1e8] sm:$0xff]
          %v2488 = vld [vmem:[#allocation2 + $0x218] sm:$0xff]
          %v2489 = vld [vmem:[#allocation2 + $0x248] sm:$0xff]
          %v2490 = vld [vmem:[#allocation2 + $0x278] sm:$0xff]
          %v2491 = vld [vmem:[#allocation2 + $0x2a8] sm:$0xff]
          %v2492 = vld [vmem:[#allocation2 + $0x2d8] sm:$0xff]
          %v2493 = vmul.f32 %v2477, %v2477
          %v2494 = vmul.f32 %v2478, %v2478
          %v2495 = vmul.f32 %v2479, %v2479
          %v2496 = vmul.f32 %v2480, %v2480
          %v2497 = vmul.f32 %v2481, %v2481
          %v2498 = vmul.f32 %v2482, %v2482
          %v2499 = vmul.f32 %v2483, %v2483
          %v2500 = vmul.f32 %v2484, %v2484
          %v2501 = vmul.f32 %v2485, %v2485
          %v2502 = vmul.f32 %v2486, %v2486
          %v2503 = vmul.f32 %v2487, %v2487
          %v2504 = vmul.f32 %v2488, %v2488
          %v2505 = vmul.f32 %v2489, %v2489
          %v2506 = vmul.f32 %v2490, %v2490
          %v2507 = vmul.f32 %v2491, %v2491
          %v2508 = vmul.f32 %v2492, %v2492
          %2509 = vadd.xlane.f32.xlu0 %v2493
          %v2510 = vpop.xlane.xlu0 %2509
          %2511 = vadd.xlane.f32.xlu0 %v2494
          %v2512 = vpop.xlane.xlu0 %2511
          %2513 = vadd.xlane.f32.xlu0 %v2495
          %v2514 = vpop.xlane.xlu0 %2513
          %2515 = vadd.xlane.f32.xlu0 %v2496
          %v2516 = vpop.xlane.xlu0 %2515
          %2517 = vadd.xlane.f32.xlu0 %v2497
          %v2518 = vpop.xlane.xlu0 %2517
          %2519 = vadd.xlane.f32.xlu0 %v2498
          %v2520 = vpop.xlane.xlu0 %2519
          %2521 = vadd.xlane.f32.xlu0 %v2499
          %v2522 = vpop.xlane.xlu0 %2521
          %2523 = vadd.xlane.f32.xlu0 %v2500
          %v2524 = vpop.xlane.xlu0 %2523
          %2525 = vadd.xlane.f32.xlu0 %v2501
          %v2526 = vpop.xlane.xlu0 %2525
          %2527 = vadd.xlane.f32.xlu0 %v2502
          %v2528 = vpop.xlane.xlu0 %2527
          %2529 = vadd.xlane.f32.xlu0 %v2503
          %v2530 = vpop.xlane.xlu0 %2529
          %2531 = vadd.xlane.f32.xlu0 %v2504
          %v2532 = vpop.xlane.xlu0 %2531
          %2533 = vadd.xlane.f32.xlu0 %v2505
          %v2534 = vpop.xlane.xlu0 %2533
          %2535 = vadd.xlane.f32.xlu0 %v2506
          %v2536 = vpop.xlane.xlu0 %2535
          %2537 = vadd.xlane.f32.xlu0 %v2507
          %v2538 = vpop.xlane.xlu0 %2537
          %2539 = vadd.xlane.f32.xlu0 %v2508
          %v2540 = vpop.xlane.xlu0 %2539
          %v2541 = vmul.f32 %v2510, %v696
          %v2542 = vmul.f32 %v2512, %v696
          %v2543 = vmul.f32 %v2514, %v696
          %v2544 = vmul.f32 %v2516, %v696
          %v2545 = vmul.f32 %v2518, %v696
          %v2546 = vmul.f32 %v2520, %v696
          %v2547 = vmul.f32 %v2522, %v696
          %v2548 = vmul.f32 %v2524, %v696
          %v2549 = vmul.f32 %v2526, %v696
          %v2550 = vmul.f32 %v2528, %v696
          %v2551 = vmul.f32 %v2530, %v696
          %v2552 = vmul.f32 %v2532, %v696
          %v2553 = vmul.f32 %v2534, %v696
          %v2554 = vmul.f32 %v2536, %v696
          %v2555 = vmul.f32 %v2538, %v696
          %v2556 = vmul.f32 %v2540, %v696
          %v2557 = vadd.f32 %v2541, 1.1920929e-07
          %v2558 = vadd.f32 %v2542, 1.1920929e-07
          %v2559 = vadd.f32 %v2543, 1.1920929e-07
          %v2560 = vadd.f32 %v2544, 1.1920929e-07
          %v2561 = vadd.f32 %v2545, 1.1920929e-07
          %v2562 = vadd.f32 %v2546, 1.1920929e-07
          %v2563 = vadd.f32 %v2547, 1.1920929e-07
          %v2564 = vadd.f32 %v2548, 1.1920929e-07
          %v2565 = vadd.f32 %v2549, 1.1920929e-07
          %v2566 = vadd.f32 %v2550, 1.1920929e-07
          %v2567 = vadd.f32 %v2551, 1.1920929e-07
          %v2568 = vadd.f32 %v2552, 1.1920929e-07
          %v2569 = vadd.f32 %v2553, 1.1920929e-07
          %v2570 = vadd.f32 %v2554, 1.1920929e-07
          %v2571 = vadd.f32 %v2555, 1.1920929e-07
          %v2572 = vadd.f32 %v2556, 1.1920929e-07
          %v2573 = vrsqrt.pop %v2557
          %v2574 = vrsqrt.pop %v2558
          %v2575 = vrsqrt.pop %v2559
          %v2576 = vrsqrt.pop %v2560
          %v2577 = vrsqrt.pop %v2561
          %v2578 = vrsqrt.pop %v2562
          %v2579 = vrsqrt.pop %v2563
          %v2580 = vrsqrt.pop %v2564
          %v2581 = vrsqrt.pop %v2565
          %v2582 = vrsqrt.pop %v2566
          %v2583 = vrsqrt.pop %v2567
          %v2584 = vrsqrt.pop %v2568
          %v2585 = vrsqrt.pop %v2569
          %v2586 = vrsqrt.pop %v2570
          %v2587 = vrsqrt.pop %v2571
          %v2588 = vrsqrt.pop %v2572
          %v2589 = vmul.f32 %v2573, 0.1171875
          %v2590 = vmul.f32 %v2574, 0.1171875
          %v2591 = vmul.f32 %v2575, 0.1171875
          %v2592 = vmul.f32 %v2576, 0.1171875
          %v2593 = vmul.f32 %v2577, 0.1171875
          %v2594 = vmul.f32 %v2578, 0.1171875
          %v2595 = vmul.f32 %v2579, 0.1171875
          %v2596 = vmul.f32 %v2580, 0.1171875
          %v2597 = vmul.f32 %v2581, 0.1171875
          %v2598 = vmul.f32 %v2582, 0.1171875
          %v2599 = vmul.f32 %v2583, 0.1171875
          %v2600 = vmul.f32 %v2584, 0.1171875
          %v2601 = vmul.f32 %v2585, 0.1171875
          %v2602 = vmul.f32 %v2586, 0.1171875
          %v2603 = vmul.f32 %v2587, 0.1171875
          %v2604 = vmul.f32 %v2588, 0.1171875
          %v2605 = vmul.f32 %v2477, %v2589
          %v2606 = vmul.f32 %v2478, %v2590
          %v2607 = vmul.f32 %v2479, %v2591
          %v2608 = vmul.f32 %v2480, %v2592
          %v2609 = vmul.f32 %v2481, %v2593
          %v2610 = vmul.f32 %v2482, %v2594
          %v2611 = vmul.f32 %v2483, %v2595
          %v2612 = vmul.f32 %v2484, %v2596
          %v2613 = vmul.f32 %v2485, %v2597
          %v2614 = vmul.f32 %v2486, %v2598
          %v2615 = vmul.f32 %v2487, %v2599
          %v2616 = vmul.f32 %v2488, %v2600
          %v2617 = vmul.f32 %v2489, %v2601
          %v2618 = vmul.f32 %v2490, %v2602
          %v2619 = vmul.f32 %v2491, %v2603
          %v2620 = vmul.f32 %v2492, %v2604
          %v2621 = vmul.f32 %v2605, %v1492
          %v2622 = vmul.f32 %v2606, %v1493
          %v2623 = vmul.f32 %v2607, %v1494
          %v2624 = vmul.f32 %v2608, %v1495
          %v2625 = vmul.f32 %v2609, %v1496
          %v2626 = vmul.f32 %v2610, %v1497
          %v2627 = vmul.f32 %v2611, %v1498
          %v2628 = vmul.f32 %v2612, %v1499
          %v2629 = vmul.f32 %v2613, %v1500
          %v2630 = vmul.f32 %v2614, %v1501
          %v2631 = vmul.f32 %v2615, %v1502
          %v2632 = vmul.f32 %v2616, %v1503
          %v2633 = vmul.f32 %v2617, %v1504
          %v2634 = vmul.f32 %v2618, %v1505
          %v2635 = vmul.f32 %v2619, %v1506
          %v2636 = vmul.f32 %v2620, %v1507
          %2637 = vrot.lane.b32.xlu0 %v2605, 64
          %v2638 = vpop.permute.xlu0 %2637
          %2639 = vrot.lane.b32.xlu0 %v2606, 64
          %v2640 = vpop.permute.xlu0 %2639
          %2641 = vrot.lane.b32.xlu0 %v2607, 64
          %v2642 = vpop.permute.xlu0 %2641
          %2643 = vrot.lane.b32.xlu0 %v2608, 64
          %v2644 = vpop.permute.xlu0 %2643
          %2645 = vrot.lane.b32.xlu0 %v2609, 64
          %v2646 = vpop.permute.xlu0 %2645
          %2647 = vrot.lane.b32.xlu0 %v2610, 64
          %v2648 = vpop.permute.xlu0 %2647
          %2649 = vrot.lane.b32.xlu0 %v2611, 64
          %v2650 = vpop.permute.xlu0 %2649
          %2651 = vrot.lane.b32.xlu0 %v2612, 64
          %v2652 = vpop.permute.xlu0 %2651
          %2653 = vrot.lane.b32.xlu0 %v2613, 64
          %v2654 = vpop.permute.xlu0 %2653
          %2655 = vrot.lane.b32.xlu0 %v2614, 64
          %v2656 = vpop.permute.xlu0 %2655
          %2657 = vrot.lane.b32.xlu0 %v2615, 64
          %v2658 = vpop.permute.xlu0 %2657
          %2659 = vrot.lane.b32.xlu0 %v2616, 64
          %v2660 = vpop.permute.xlu0 %2659
          %2661 = vrot.lane.b32.xlu0 %v2617, 64
          %v2662 = vpop.permute.xlu0 %2661
          %2663 = vrot.lane.b32.xlu0 %v2618, 64
          %v2664 = vpop.permute.xlu0 %2663
          %2665 = vrot.lane.b32.xlu0 %v2619, 64
          %v2666 = vpop.permute.xlu0 %2665
          %2667 = vrot.lane.b32.xlu0 %v2620, 64
          %v2668 = vpop.permute.xlu0 %2667
          %v2669 = vmul.f32 %v2638, %v1508
          %v2670 = vmul.f32 %v2640, %v1509
          %v2671 = vmul.f32 %v2642, %v1510
          %v2672 = vmul.f32 %v2644, %v1511
          %v2673 = vmul.f32 %v2646, %v1512
          %v2674 = vmul.f32 %v2648, %v1513
          %v2675 = vmul.f32 %v2650, %v1514
          %v2676 = vmul.f32 %v2652, %v1515
          %v2677 = vmul.f32 %v2654, %v1516
          %v2678 = vmul.f32 %v2656, %v1517
          %v2679 = vmul.f32 %v2658, %v1518
          %v2680 = vmul.f32 %v2660, %v1519
          %v2681 = vmul.f32 %v2662, %v1520
          %v2682 = vmul.f32 %v2664, %v1521
          %v2683 = vmul.f32 %v2666, %v1522
          %v2684 = vmul.f32 %v2668, %v1523
          %v2685 = vadd.f32 %v2621, %v2669
          %v2686 = vadd.f32 %v2622, %v2670
          %v2687 = vadd.f32 %v2623, %v2671
          %v2688 = vadd.f32 %v2624, %v2672
          %v2689 = vadd.f32 %v2625, %v2673
          %v2690 = vadd.f32 %v2626, %v2674
          %v2691 = vadd.f32 %v2627, %v2675
          %v2692 = vadd.f32 %v2628, %v2676
          %v2693 = vadd.f32 %v2629, %v2677
          %v2694 = vadd.f32 %v2630, %v2678
          %v2695 = vadd.f32 %v2631, %v2679
          %v2696 = vadd.f32 %v2632, %v2680
          %v2697 = vadd.f32 %v2633, %v2681
          %v2698 = vadd.f32 %v2634, %v2682
          %v2699 = vadd.f32 %v2635, %v2683
          %v2700 = vadd.f32 %v2636, %v2684
          %v2701 = vld [vmem:[#allocation2 + $0x18] sm:$0xff]
          %v2702 = vld [vmem:[#allocation2 + $0x48] sm:$0xff]
          %v2703 = vld [vmem:[#allocation2 + $0x78] sm:$0xff]
          %v2704 = vld [vmem:[#allocation2 + $0xa8] sm:$0xff]
          %v2705 = vld [vmem:[#allocation2 + $0xd8] sm:$0xff]
          %v2706 = vld [vmem:[#allocation2 + $0x108] sm:$0xff]
          %v2707 = vld [vmem:[#allocation2 + $0x138] sm:$0xff]
          %v2708 = vld [vmem:[#allocation2 + $0x168] sm:$0xff]
          %v2709 = vld [vmem:[#allocation2 + $0x198] sm:$0xff]
          %v2710 = vld [vmem:[#allocation2 + $0x1c8] sm:$0xff]
          %v2711 = vld [vmem:[#allocation2 + $0x1f8] sm:$0xff]
          %v2712 = vld [vmem:[#allocation2 + $0x228] sm:$0xff]
          %v2713 = vld [vmem:[#allocation2 + $0x258] sm:$0xff]
          %v2714 = vld [vmem:[#allocation2 + $0x288] sm:$0xff]
          %v2715 = vld [vmem:[#allocation2 + $0x2b8] sm:$0xff]
          %v2716 = vld [vmem:[#allocation2 + $0x2e8] sm:$0xff]
          %v2717 = vmul.f32 %v2701, %v2701
          %v2718 = vmul.f32 %v2702, %v2702
          %v2719 = vmul.f32 %v2703, %v2703
          %v2720 = vmul.f32 %v2704, %v2704
          %v2721 = vmul.f32 %v2705, %v2705
          %v2722 = vmul.f32 %v2706, %v2706
          %v2723 = vmul.f32 %v2707, %v2707
          %v2724 = vmul.f32 %v2708, %v2708
          %v2725 = vmul.f32 %v2709, %v2709
          %v2726 = vmul.f32 %v2710, %v2710
          %v2727 = vmul.f32 %v2711, %v2711
          %v2728 = vmul.f32 %v2712, %v2712
          %v2729 = vmul.f32 %v2713, %v2713
          %v2730 = vmul.f32 %v2714, %v2714
          %v2731 = vmul.f32 %v2715, %v2715
          %v2732 = vmul.f32 %v2716, %v2716
          %2733 = vadd.xlane.f32.xlu0 %v2717
          %v2734 = vpop.xlane.xlu0 %2733
          %2735 = vadd.xlane.f32.xlu0 %v2718
          %v2736 = vpop.xlane.xlu0 %2735
          %2737 = vadd.xlane.f32.xlu0 %v2719
          %v2738 = vpop.xlane.xlu0 %2737
          %2739 = vadd.xlane.f32.xlu0 %v2720
          %v2740 = vpop.xlane.xlu0 %2739
          %2741 = vadd.xlane.f32.xlu0 %v2721
          %v2742 = vpop.xlane.xlu0 %2741
          %2743 = vadd.xlane.f32.xlu0 %v2722
          %v2744 = vpop.xlane.xlu0 %2743
          %2745 = vadd.xlane.f32.xlu0 %v2723
          %v2746 = vpop.xlane.xlu0 %2745
          %2747 = vadd.xlane.f32.xlu0 %v2724
          %v2748 = vpop.xlane.xlu0 %2747
          %2749 = vadd.xlane.f32.xlu0 %v2725
          %v2750 = vpop.xlane.xlu0 %2749
          %2751 = vadd.xlane.f32.xlu0 %v2726
          %v2752 = vpop.xlane.xlu0 %2751
          %2753 = vadd.xlane.f32.xlu0 %v2727
          %v2754 = vpop.xlane.xlu0 %2753
          %2755 = vadd.xlane.f32.xlu0 %v2728
          %v2756 = vpop.xlane.xlu0 %2755
          %2757 = vadd.xlane.f32.xlu0 %v2729
          %v2758 = vpop.xlane.xlu0 %2757
          %2759 = vadd.xlane.f32.xlu0 %v2730
          %v2760 = vpop.xlane.xlu0 %2759
          %2761 = vadd.xlane.f32.xlu0 %v2731
          %v2762 = vpop.xlane.xlu0 %2761
          %2763 = vadd.xlane.f32.xlu0 %v2732
          %v2764 = vpop.xlane.xlu0 %2763
          %v2765 = vmul.f32 %v2734, %v696
          %v2766 = vmul.f32 %v2736, %v696
          %v2767 = vmul.f32 %v2738, %v696
          %v2768 = vmul.f32 %v2740, %v696
          %v2769 = vmul.f32 %v2742, %v696
          %v2770 = vmul.f32 %v2744, %v696
          %v2771 = vmul.f32 %v2746, %v696
          %v2772 = vmul.f32 %v2748, %v696
          %v2773 = vmul.f32 %v2750, %v696
          %v2774 = vmul.f32 %v2752, %v696
          %v2775 = vmul.f32 %v2754, %v696
          %v2776 = vmul.f32 %v2756, %v696
          %v2777 = vmul.f32 %v2758, %v696
          %v2778 = vmul.f32 %v2760, %v696
          %v2779 = vmul.f32 %v2762, %v696
          %v2780 = vmul.f32 %v2764, %v696
          %v2781 = vadd.f32 %v2765, 1.1920929e-07
          %v2782 = vadd.f32 %v2766, 1.1920929e-07
          %v2783 = vadd.f32 %v2767, 1.1920929e-07
          %v2784 = vadd.f32 %v2768, 1.1920929e-07
          %v2785 = vadd.f32 %v2769, 1.1920929e-07
          %v2786 = vadd.f32 %v2770, 1.1920929e-07
          %v2787 = vadd.f32 %v2771, 1.1920929e-07
          %v2788 = vadd.f32 %v2772, 1.1920929e-07
          %v2789 = vadd.f32 %v2773, 1.1920929e-07
          %v2790 = vadd.f32 %v2774, 1.1920929e-07
          %v2791 = vadd.f32 %v2775, 1.1920929e-07
          %v2792 = vadd.f32 %v2776, 1.1920929e-07
          %v2793 = vadd.f32 %v2777, 1.1920929e-07
          %v2794 = vadd.f32 %v2778, 1.1920929e-07
          %v2795 = vadd.f32 %v2779, 1.1920929e-07
          %v2796 = vadd.f32 %v2780, 1.1920929e-07
          %v2797 = vrsqrt.pop %v2781
          %v2798 = vrsqrt.pop %v2782
          %v2799 = vrsqrt.pop %v2783
          %v2800 = vrsqrt.pop %v2784
          %v2801 = vrsqrt.pop %v2785
          %v2802 = vrsqrt.pop %v2786
          %v2803 = vrsqrt.pop %v2787
          %v2804 = vrsqrt.pop %v2788
          %v2805 = vrsqrt.pop %v2789
          %v2806 = vrsqrt.pop %v2790
          %v2807 = vrsqrt.pop %v2791
          %v2808 = vrsqrt.pop %v2792
          %v2809 = vrsqrt.pop %v2793
          %v2810 = vrsqrt.pop %v2794
          %v2811 = vrsqrt.pop %v2795
          %v2812 = vrsqrt.pop %v2796
          %v2813 = vmul.f32 %v2701, %v2797
          %v2814 = vmul.f32 %v2702, %v2798
          %v2815 = vmul.f32 %v2703, %v2799
          %v2816 = vmul.f32 %v2704, %v2800
          %v2817 = vmul.f32 %v2705, %v2801
          %v2818 = vmul.f32 %v2706, %v2802
          %v2819 = vmul.f32 %v2707, %v2803
          %v2820 = vmul.f32 %v2708, %v2804
          %v2821 = vmul.f32 %v2709, %v2805
          %v2822 = vmul.f32 %v2710, %v2806
          %v2823 = vmul.f32 %v2711, %v2807
          %v2824 = vmul.f32 %v2712, %v2808
          %v2825 = vmul.f32 %v2713, %v2809
          %v2826 = vmul.f32 %v2714, %v2810
          %v2827 = vmul.f32 %v2715, %v2811
          %v2828 = vmul.f32 %v2716, %v2812
          %v2829 = vmul.f32 %v2813, %v1492
          %v2830 = vmul.f32 %v2814, %v1493
          %v2831 = vmul.f32 %v2815, %v1494
          %v2832 = vmul.f32 %v2816, %v1495
          %v2833 = vmul.f32 %v2817, %v1496
          %v2834 = vmul.f32 %v2818, %v1497
          %v2835 = vmul.f32 %v2819, %v1498
          %v2836 = vmul.f32 %v2820, %v1499
          %v2837 = vmul.f32 %v2821, %v1500
          %v2838 = vmul.f32 %v2822, %v1501
          %v2839 = vmul.f32 %v2823, %v1502
          %v2840 = vmul.f32 %v2824, %v1503
          %v2841 = vmul.f32 %v2825, %v1504
          %v2842 = vmul.f32 %v2826, %v1505
          %v2843 = vmul.f32 %v2827, %v1506
          %v2844 = vmul.f32 %v2828, %v1507
          %2845 = vrot.lane.b32.xlu0 %v2813, 64
          %v2846 = vpop.permute.xlu0 %2845
          %2847 = vrot.lane.b32.xlu0 %v2814, 64
          %v2848 = vpop.permute.xlu0 %2847
          %2849 = vrot.lane.b32.xlu0 %v2815, 64
          %v2850 = vpop.permute.xlu0 %2849
          %2851 = vrot.lane.b32.xlu0 %v2816, 64
          %v2852 = vpop.permute.xlu0 %2851
          %2853 = vrot.lane.b32.xlu0 %v2817, 64
          %v2854 = vpop.permute.xlu0 %2853
          %2855 = vrot.lane.b32.xlu0 %v2818, 64
          %v2856 = vpop.permute.xlu0 %2855
          %2857 = vrot.lane.b32.xlu0 %v2819, 64
          %v2858 = vpop.permute.xlu0 %2857
          %2859 = vrot.lane.b32.xlu0 %v2820, 64
          %v2860 = vpop.permute.xlu0 %2859
          %2861 = vrot.lane.b32.xlu0 %v2821, 64
          %v2862 = vpop.permute.xlu0 %2861
          %2863 = vrot.lane.b32.xlu0 %v2822, 64
          %v2864 = vpop.permute.xlu0 %2863
          %2865 = vrot.lane.b32.xlu0 %v2823, 64
          %v2866 = vpop.permute.xlu0 %2865
          %2867 = vrot.lane.b32.xlu0 %v2824, 64
          %v2868 = vpop.permute.xlu0 %2867
          %2869 = vrot.lane.b32.xlu0 %v2825, 64
          %v2870 = vpop.permute.xlu0 %2869
          %2871 = vrot.lane.b32.xlu0 %v2826, 64
          %v2872 = vpop.permute.xlu0 %2871
          %2873 = vrot.lane.b32.xlu0 %v2827, 64
          %v2874 = vpop.permute.xlu0 %2873
          %2875 = vrot.lane.b32.xlu0 %v2828, 64
          %v2876 = vpop.permute.xlu0 %2875
          %v2877 = vmul.f32 %v2846, %v1508
          %v2878 = vmul.f32 %v2848, %v1509
          %v2879 = vmul.f32 %v2850, %v1510
          %v2880 = vmul.f32 %v2852, %v1511
          %v2881 = vmul.f32 %v2854, %v1512
          %v2882 = vmul.f32 %v2856, %v1513
          %v2883 = vmul.f32 %v2858, %v1514
          %v2884 = vmul.f32 %v2860, %v1515
          %v2885 = vmul.f32 %v2862, %v1516
          %v2886 = vmul.f32 %v2864, %v1517
          %v2887 = vmul.f32 %v2866, %v1518
          %v2888 = vmul.f32 %v2868, %v1519
          %v2889 = vmul.f32 %v2870, %v1520
          %v2890 = vmul.f32 %v2872, %v1521
          %v2891 = vmul.f32 %v2874, %v1522
          %v2892 = vmul.f32 %v2876, %v1523
          %v2893 = vadd.f32 %v2829, %v2877
          %v2894 = vadd.f32 %v2830, %v2878
          %v2895 = vadd.f32 %v2831, %v2879
          %v2896 = vadd.f32 %v2832, %v2880
          %v2897 = vadd.f32 %v2833, %v2881
          %v2898 = vadd.f32 %v2834, %v2882
          %v2899 = vadd.f32 %v2835, %v2883
          %v2900 = vadd.f32 %v2836, %v2884
          %v2901 = vadd.f32 %v2837, %v2885
          %v2902 = vadd.f32 %v2838, %v2886
          %v2903 = vadd.f32 %v2839, %v2887
          %v2904 = vadd.f32 %v2840, %v2888
          %v2905 = vadd.f32 %v2841, %v2889
          %v2906 = vadd.f32 %v2842, %v2890
          %v2907 = vadd.f32 %v2843, %v2891
          %v2908 = vadd.f32 %v2844, %v2892
          %v2909 = vld [vmem:[#allocation2 + $0x28] sm:$0xff]
          %v2910 = vld [vmem:[#allocation2 + $0x58] sm:$0xff]
          %v2911 = vld [vmem:[#allocation2 + $0x88] sm:$0xff]
          %v2912 = vld [vmem:[#allocation2 + $0xb8] sm:$0xff]
          %v2913 = vld [vmem:[#allocation2 + $0xe8] sm:$0xff]
          %v2914 = vld [vmem:[#allocation2 + $0x118] sm:$0xff]
          %v2915 = vld [vmem:[#allocation2 + $0x148] sm:$0xff]
          %v2916 = vld [vmem:[#allocation2 + $0x178] sm:$0xff]
          %v2917 = vld [vmem:[#allocation2 + $0x1a8] sm:$0xff]
          %v2918 = vld [vmem:[#allocation2 + $0x1d8] sm:$0xff]
          %v2919 = vld [vmem:[#allocation2 + $0x208] sm:$0xff]
          %v2920 = vld [vmem:[#allocation2 + $0x238] sm:$0xff]
          %v2921 = vld [vmem:[#allocation2 + $0x268] sm:$0xff]
          %v2922 = vld [vmem:[#allocation2 + $0x298] sm:$0xff]
          %v2923 = vld [vmem:[#allocation2 + $0x2c8] sm:$0xff]
          %v2924 = vld [vmem:[#allocation2 + $0x2f8] sm:$0xff]
          %s2925 = sld [smem:[#allocation11]]
          %v2926 = vstv %s2925
          %v2927 = vmul.f32 %v2926, %v2909
          %v2928 = vmul.f32 %v2926, %v2910
          %v2929 = vmul.f32 %v2926, %v2911
          %v2930 = vmul.f32 %v2926, %v2912
          %v2931 = vmul.f32 %v2926, %v2913
          %v2932 = vmul.f32 %v2926, %v2914
          %v2933 = vmul.f32 %v2926, %v2915
          %v2934 = vmul.f32 %v2926, %v2916
          %v2935 = vmul.f32 %v2926, %v2917
          %v2936 = vmul.f32 %v2926, %v2918
          %v2937 = vmul.f32 %v2926, %v2919
          %v2938 = vmul.f32 %v2926, %v2920
          %v2939 = vmul.f32 %v2926, %v2921
          %v2940 = vmul.f32 %v2926, %v2922
          %v2941 = vmul.f32 %v2926, %v2923
          %v2942 = vmul.f32 %v2926, %v2924
          %s2943 = sld [smem:[#allocation11 + $0x1]]
          %v2944 = vld [vmem:[#allocation15 + $0x8] sm:$0xff]
          %v2945 = vld [vmem:[#allocation15 + $0x18] sm:$0xff]
          %v2946 = vld [vmem:[#allocation15 + $0x28] sm:$0xff]
          %v2947 = vld [vmem:[#allocation15 + $0x38] sm:$0xff]
          %v2948 = vld [vmem:[#allocation15 + $0x48] sm:$0xff]
          %v2949 = vld [vmem:[#allocation15 + $0x58] sm:$0xff]
          %v2950 = vld [vmem:[#allocation15 + $0x68] sm:$0xff]
          %v2951 = vld [vmem:[#allocation15 + $0x78] sm:$0xff]
          %v2952 = vld [vmem:[#allocation15 + $0x88] sm:$0xff]
          %v2953 = vld [vmem:[#allocation15 + $0x98] sm:$0xff]
          %v2954 = vld [vmem:[#allocation15 + $0xa8] sm:$0xff]
          %v2955 = vld [vmem:[#allocation15 + $0xb8] sm:$0xff]
          %v2956 = vld [vmem:[#allocation15 + $0xc8] sm:$0xff]
          %v2957 = vld [vmem:[#allocation15 + $0xd8] sm:$0xff]
          %v2958 = vld [vmem:[#allocation15 + $0xe8] sm:$0xff]
          %v2959 = vld [vmem:[#allocation15 + $0xf8] sm:$0xff]
          %v2960 = vstv %s2943
          %v2961 = vmul.f32 %v2960, %v2944
          %v2962 = vmul.f32 %v2960, %v2945
          %v2963 = vmul.f32 %v2960, %v2946
          %v2964 = vmul.f32 %v2960, %v2947
          %v2965 = vmul.f32 %v2960, %v2948
          %v2966 = vmul.f32 %v2960, %v2949
          %v2967 = vmul.f32 %v2960, %v2950
          %v2968 = vmul.f32 %v2960, %v2951
          %v2969 = vmul.f32 %v2960, %v2952
          %v2970 = vmul.f32 %v2960, %v2953
          %v2971 = vmul.f32 %v2960, %v2954
          %v2972 = vmul.f32 %v2960, %v2955
          %v2973 = vmul.f32 %v2960, %v2956
          %v2974 = vmul.f32 %v2960, %v2957
          %v2975 = vmul.f32 %v2960, %v2958
          %v2976 = vmul.f32 %v2960, %v2959
          %v2977 = vadd.f32 %v2927, %v2961
          %v2978 = vadd.f32 %v2928, %v2962
          %v2979 = vadd.f32 %v2929, %v2963
          %v2980 = vadd.f32 %v2930, %v2964
          %v2981 = vadd.f32 %v2931, %v2965
          %v2982 = vadd.f32 %v2932, %v2966
          %v2983 = vadd.f32 %v2933, %v2967
          %v2984 = vadd.f32 %v2934, %v2968
          %v2985 = vadd.f32 %v2935, %v2969
          %v2986 = vadd.f32 %v2936, %v2970
          %v2987 = vadd.f32 %v2937, %v2971
          %v2988 = vadd.f32 %v2938, %v2972
          %v2989 = vadd.f32 %v2939, %v2973
          %v2990 = vadd.f32 %v2940, %v2974
          %v2991 = vadd.f32 %v2941, %v2975
          %v2992 = vadd.f32 %v2942, %v2976
          %v2993 = vpack.c.bf16 %v2686, %v2685
          %v2994 = vpack.c.bf16 %v2688, %v2687
          %v2995 = vpack.c.bf16 %v2690, %v2689
          %v2996 = vpack.c.bf16 %v2692, %v2691
          %v2997 = vpack.c.bf16 %v2694, %v2693
          %v2998 = vpack.c.bf16 %v2696, %v2695
          %v2999 = vpack.c.bf16 %v2698, %v2697
          %v3000 = vpack.c.bf16 %v2700, %v2699
          %v3001 = vpack.c.bf16 %v2894, %v2893
          %v3002 = vpack.c.bf16 %v2896, %v2895
          %v3003 = vpack.c.bf16 %v2898, %v2897
          %v3004 = vpack.c.bf16 %v2900, %v2899
          %v3005 = vpack.c.bf16 %v2902, %v2901
          %v3006 = vpack.c.bf16 %v2904, %v2903
          %v3007 = vpack.c.bf16 %v2906, %v2905
          %v3008 = vpack.c.bf16 %v2908, %v2907
          %3009 = vmatprep.subr.bf16.mxu0 0
          %3010 = vmatpush1.bf16.xpose.msra.mxu0 %v3001
          %3011 = vmatprep.subr.bf16.mxu0 0
          %3012 = vmatpush1.bf16.xpose.msra.mxu0 %v3002
          %3013 = vmatprep.subr.bf16.mxu0 0
          %3014 = vmatpush1.bf16.xpose.msra.mxu0 %v3003
          %3015 = vmatprep.subr.bf16.mxu0 0
          %3016 = vmatpush1.bf16.xpose.msra.mxu0 %v3004
          %3017 = vmatprep.subr.bf16.mxu0 0
          %3018 = vmatpush1.bf16.xpose.msra.mxu0 %v3005
          %3019 = vmatprep.subr.bf16.mxu0 0
          %3020 = vmatpush1.bf16.xpose.msra.mxu0 %v3006
          %3021 = vmatprep.subr.bf16.mxu0 0
          %3022 = vmatpush1.bf16.xpose.msra.mxu0 %v3007
          %3023 = vmatprep.subr.bf16.mxu0 0
          %3024 = vmatpush1.bf16.xpose.msra.mxu0 %v3008
          %3025 = vmatprep.subr.bf16.mxu0 0
          %3026 = vmatpush1.bf16.xpose.msra.mxu0 0
          %3027 = vmatprep.subr.bf16.mxu0 0
          %3028 = vmatpush1.bf16.xpose.msra.mxu0 0
          %3029 = vmatprep.subr.bf16.mxu0 0
          %3030 = vmatpush1.bf16.xpose.msra.mxu0 0
          %3031 = vmatprep.subr.bf16.mxu0 0
          %3032 = vmatpush1.bf16.xpose.msra.mxu0 0
          %3033 = vmatprep.subr.bf16.mxu0 0
          %3034 = vmatpush1.bf16.xpose.msra.mxu0 0
          %3035 = vmatprep.subr.bf16.mxu0 0
          %3036 = vmatpush1.bf16.xpose.msra.mxu0 0
          %3037 = vmatprep.subr.bf16.mxu0 0
          %3038 = vmatpush1.bf16.xpose.msra.mxu0 0
          %3039 = vmatprep.subr.bf16.mxu0 0
          %3040 = vmatpush1.bf16.xpose.msra.mxu0 0
          %3041 = vmatprep.mubr.bf16.mxu0 0
          %3042 = vmatmul.mubr.bf16.gmra.mrb[0].mxu0 %v2993
          %v3043 = vpop.f32.mrb[0].mxu0
          %v3044 = vadd.f32 %v1559, %v3043
          %v3045 = vpop.f32.mrb[0].mxu0
          %v3046 = vpop.f32.mrb[0].mxu0
          %v3047 = vadd.f32 %v1560, %v3046
          %v3048 = vpop.f32.mrb[0].mxu0
          %3049 = vmatprep.mubr.bf16.mxu0 0
          %3050 = vmatmul.mubr.bf16.gmra.mrb[0].mxu0 %v2994
          %v3051 = vpop.f32.mrb[0].mxu0
          %v3052 = vadd.f32 %v1561, %v3051
          %v3053 = vpop.f32.mrb[0].mxu0
          %v3054 = vpop.f32.mrb[0].mxu0
          %v3055 = vadd.f32 %v1562, %v3054
          %v3056 = vpop.f32.mrb[0].mxu0
          %3057 = vmatprep.mubr.bf16.mxu0 0
          %3058 = vmatmul.mubr.bf16.gmra.mrb[0].mxu0 %v2995
          %v3059 = vpop.f32.mrb[0].mxu0
          %v3060 = vadd.f32 %v1563, %v3059
          %v3061 = vpop.f32.mrb[0].mxu0
          %v3062 = vpop.f32.mrb[0].mxu0
          %v3063 = vadd.f32 %v1564, %v3062
          %v3064 = vpop.f32.mrb[0].mxu0
          %3065 = vmatprep.mubr.bf16.mxu0 0
          %3066 = vmatmul.mubr.bf16.gmra.mrb[0].mxu0 %v2996
          %v3067 = vpop.f32.mrb[0].mxu0
          %v3068 = vadd.f32 %v1565, %v3067
          %v3069 = vpop.f32.mrb[0].mxu0
          %v3070 = vpop.f32.mrb[0].mxu0
          %v3071 = vadd.f32 %v1566, %v3070
          %v3072 = vpop.f32.mrb[0].mxu0
          %3073 = vmatprep.mubr.bf16.mxu0 0
          %3074 = vmatmul.mubr.bf16.gmra.mrb[0].mxu0 %v2997
          %v3075 = vpop.f32.mrb[0].mxu0
          %v3076 = vadd.f32 %v1567, %v3075
          %v3077 = vpop.f32.mrb[0].mxu0
          %v3078 = vpop.f32.mrb[0].mxu0
          %v3079 = vadd.f32 %v1568, %v3078
          %v3080 = vpop.f32.mrb[0].mxu0
          %3081 = vmatprep.mubr.bf16.mxu0 0
          %3082 = vmatmul.mubr.bf16.gmra.mrb[0].mxu0 %v2998
          %v3083 = vpop.f32.mrb[0].mxu0
          %v3084 = vadd.f32 %v1569, %v3083
          %v3085 = vpop.f32.mrb[0].mxu0
          %v3086 = vpop.f32.mrb[0].mxu0
          %v3087 = vadd.f32 %v1570, %v3086
          %v3088 = vpop.f32.mrb[0].mxu0
          %3089 = vmatprep.mubr.bf16.mxu0 0
          %3090 = vmatmul.mubr.bf16.gmra.mrb[0].mxu0 %v2999
          %v3091 = vpop.f32.mrb[0].mxu0
          %v3092 = vadd.f32 %v1571, %v3091
          %v3093 = vpop.f32.mrb[0].mxu0
          %v3094 = vpop.f32.mrb[0].mxu0
          %v3095 = vadd.f32 %v1572, %v3094
          %v3096 = vpop.f32.mrb[0].mxu0
          %3097 = vmatprep.mubr.bf16.mxu0 0
          %3098 = vmatmul.mubr.bf16.gmra.mrb[0].mxu0 %v3000
          %v3099 = vpop.f32.mrb[0].mxu0
          %v3100 = vadd.f32 %v1573, %v3099
          %v3101 = vpop.f32.mrb[0].mxu0
          %v3102 = vpop.f32.mrb[0].mxu0
          %v3103 = vadd.f32 %v1574, %v3102
          %v3104 = vpop.f32.mrb[0].mxu0
          %3105 = vdwg.mxu0
          %3106 = vmax.xlane.f32.xlu0 %v3044
          %v3107 = vpop.xlane.xlu0 %3106
          %3108 = vmax.xlane.f32.xlu0 %v3047
          %v3109 = vpop.xlane.xlu0 %3108
          %3110 = vmax.xlane.f32.xlu0 %v3052
          %v3111 = vpop.xlane.xlu0 %3110
          %3112 = vmax.xlane.f32.xlu0 %v3055
          %v3113 = vpop.xlane.xlu0 %3112
          %3114 = vmax.xlane.f32.xlu0 %v3060
          %v3115 = vpop.xlane.xlu0 %3114
          %3116 = vmax.xlane.f32.xlu0 %v3063
          %v3117 = vpop.xlane.xlu0 %3116
          %3118 = vmax.xlane.f32.xlu0 %v3068
          %v3119 = vpop.xlane.xlu0 %3118
          %3120 = vmax.xlane.f32.xlu0 %v3071
          %v3121 = vpop.xlane.xlu0 %3120
          %3122 = vmax.xlane.f32.xlu0 %v3076
          %v3123 = vpop.xlane.xlu0 %3122
          %3124 = vmax.xlane.f32.xlu0 %v3079
          %v3125 = vpop.xlane.xlu0 %3124
          %3126 = vmax.xlane.f32.xlu0 %v3084
          %v3127 = vpop.xlane.xlu0 %3126
          %3128 = vmax.xlane.f32.xlu0 %v3087
          %v3129 = vpop.xlane.xlu0 %3128
          %3130 = vmax.xlane.f32.xlu0 %v3092
          %v3131 = vpop.xlane.xlu0 %3130
          %3132 = vmax.xlane.f32.xlu0 %v3095
          %v3133 = vpop.xlane.xlu0 %3132
          %3134 = vmax.xlane.f32.xlu0 %v3100
          %v3135 = vpop.xlane.xlu0 %3134
          %3136 = vmax.xlane.f32.xlu0 %v3103
          %v3137 = vpop.xlane.xlu0 %3136
          %v3138 = vsub.f32 %v3044, %v3107
          %v3139 = vsub.f32 %v3047, %v3109
          %v3140 = vsub.f32 %v3052, %v3111
          %v3141 = vsub.f32 %v3055, %v3113
          %v3142 = vsub.f32 %v3060, %v3115
          %v3143 = vsub.f32 %v3063, %v3117
          %v3144 = vsub.f32 %v3068, %v3119
          %v3145 = vsub.f32 %v3071, %v3121
          %v3146 = vsub.f32 %v3076, %v3123
          %v3147 = vsub.f32 %v3079, %v3125
          %v3148 = vsub.f32 %v3084, %v3127
          %v3149 = vsub.f32 %v3087, %v3129
          %v3150 = vsub.f32 %v3092, %v3131
          %v3151 = vsub.f32 %v3095, %v3133
          %v3152 = vsub.f32 %v3100, %v3135
          %v3153 = vsub.f32 %v3103, %v3137
          %v3154 = vmul.f32 %v3138, 1.442695
          %v3155 = vpow.pop %v3154
          %v3156 = vmul.f32 %v3139, 1.442695
          %v3157 = vpow.pop %v3156
          %v3158 = vmul.f32 %v3140, 1.442695
          %v3159 = vpow.pop %v3158
          %v3160 = vmul.f32 %v3141, 1.442695
          %v3161 = vpow.pop %v3160
          %v3162 = vmul.f32 %v3142, 1.442695
          %v3163 = vpow.pop %v3162
          %v3164 = vmul.f32 %v3143, 1.442695
          %v3165 = vpow.pop %v3164
          %v3166 = vmul.f32 %v3144, 1.442695
          %v3167 = vpow.pop %v3166
          %v3168 = vmul.f32 %v3145, 1.442695
          %v3169 = vpow.pop %v3168
          %v3170 = vmul.f32 %v3146, 1.442695
          %v3171 = vpow.pop %v3170
          %v3172 = vmul.f32 %v3147, 1.442695
          %v3173 = vpow.pop %v3172
          %v3174 = vmul.f32 %v3148, 1.442695
          %v3175 = vpow.pop %v3174
          %v3176 = vmul.f32 %v3149, 1.442695
          %v3177 = vpow.pop %v3176
          %v3178 = vmul.f32 %v3150, 1.442695
          %v3179 = vpow.pop %v3178
          %v3180 = vmul.f32 %v3151, 1.442695
          %v3181 = vpow.pop %v3180
          %v3182 = vmul.f32 %v3152, 1.442695
          %v3183 = vpow.pop %v3182
          %v3184 = vmul.f32 %v3153, 1.442695
          %v3185 = vpow.pop %v3184
          %3186 = vadd.xlane.f32.xlu0 %v3155
          %v3187 = vpop.xlane.xlu0 %3186
          %3188 = vadd.xlane.f32.xlu0 %v3157
          %v3189 = vpop.xlane.xlu0 %3188
          %3190 = vadd.xlane.f32.xlu0 %v3159
          %v3191 = vpop.xlane.xlu0 %3190
          %3192 = vadd.xlane.f32.xlu0 %v3161
          %v3193 = vpop.xlane.xlu0 %3192
          %3194 = vadd.xlane.f32.xlu0 %v3163
          %v3195 = vpop.xlane.xlu0 %3194
          %3196 = vadd.xlane.f32.xlu0 %v3165
          %v3197 = vpop.xlane.xlu0 %3196
          %3198 = vadd.xlane.f32.xlu0 %v3167
          %v3199 = vpop.xlane.xlu0 %3198
          %3200 = vadd.xlane.f32.xlu0 %v3169
          %v3201 = vpop.xlane.xlu0 %3200
          %3202 = vadd.xlane.f32.xlu0 %v3171
          %v3203 = vpop.xlane.xlu0 %3202
          %3204 = vadd.xlane.f32.xlu0 %v3173
          %v3205 = vpop.xlane.xlu0 %3204
          %3206 = vadd.xlane.f32.xlu0 %v3175
          %v3207 = vpop.xlane.xlu0 %3206
          %3208 = vadd.xlane.f32.xlu0 %v3177
          %v3209 = vpop.xlane.xlu0 %3208
          %3210 = vadd.xlane.f32.xlu0 %v3179
          %v3211 = vpop.xlane.xlu0 %3210
          %3212 = vadd.xlane.f32.xlu0 %v3181
          %v3213 = vpop.xlane.xlu0 %3212
          %3214 = vadd.xlane.f32.xlu0 %v3183
          %v3215 = vpop.xlane.xlu0 %3214
          %3216 = vadd.xlane.f32.xlu0 %v3185
          %v3217 = vpop.xlane.xlu0 %3216
          %v3218 = vrcp.pop %v3187
          %v3219 = vrcp.pop %v3189
          %v3220 = vrcp.pop %v3191
          %v3221 = vrcp.pop %v3193
          %v3222 = vrcp.pop %v3195
          %v3223 = vrcp.pop %v3197
          %v3224 = vrcp.pop %v3199
          %v3225 = vrcp.pop %v3201
          %v3226 = vrcp.pop %v3203
          %v3227 = vrcp.pop %v3205
          %v3228 = vrcp.pop %v3207
          %v3229 = vrcp.pop %v3209
          %v3230 = vrcp.pop %v3211
          %v3231 = vrcp.pop %v3213
          %v3232 = vrcp.pop %v3215
          %v3233 = vrcp.pop %v3217
          %v3234 = vmul.f32 %v3155, %v3218
          %v3235 = vmul.f32 %v3157, %v3219
          %v3236 = vmul.f32 %v3159, %v3220
          %v3237 = vmul.f32 %v3161, %v3221
          %v3238 = vmul.f32 %v3163, %v3222
          %v3239 = vmul.f32 %v3165, %v3223
          %v3240 = vmul.f32 %v3167, %v3224
          %v3241 = vmul.f32 %v3169, %v3225
          %v3242 = vmul.f32 %v3171, %v3226
          %v3243 = vmul.f32 %v3173, %v3227
          %v3244 = vmul.f32 %v3175, %v3228
          %v3245 = vmul.f32 %v3177, %v3229
          %v3246 = vmul.f32 %v3179, %v3230
          %v3247 = vmul.f32 %v3181, %v3231
          %v3248 = vmul.f32 %v3183, %v3232
          %v3249 = vmul.f32 %v3185, %v3233
          %v3250 = vpack.c.bf16 %v3235, %v3234
          %v3251 = vpack.c.bf16 %v3237, %v3236
          %v3252 = vpack.c.bf16 %v3239, %v3238
          %v3253 = vpack.c.bf16 %v3241, %v3240
          %v3254 = vpack.c.bf16 %v3243, %v3242
          %v3255 = vpack.c.bf16 %v3245, %v3244
          %v3256 = vpack.c.bf16 %v3247, %v3246
          %v3257 = vpack.c.bf16 %v3249, %v3248
          %v3258 = vpack.c.bf16 %v2978, %v2977
          %v3259 = vpack.c.bf16 %v2980, %v2979
          %v3260 = vpack.c.bf16 %v2982, %v2981
          %v3261 = vpack.c.bf16 %v2984, %v2983
          %v3262 = vpack.c.bf16 %v2986, %v2985
          %v3263 = vpack.c.bf16 %v2988, %v2987
          %v3264 = vpack.c.bf16 %v2990, %v2989
          %v3265 = vpack.c.bf16 %v2992, %v2991
          %3266 = vmatprep.subr.bf16.mxu0 0
          %3267 = vmatpush1.bf16.msra.mxu0 %v3258
          %3268 = vmatprep.subr.bf16.mxu0 0
          %3269 = vmatpush1.bf16.msra.mxu0 %v3259
          %3270 = vmatprep.subr.bf16.mxu0 0
          %3271 = vmatpush1.bf16.msra.mxu0 %v3260
          %3272 = vmatprep.subr.bf16.mxu0 0
          %3273 = vmatpush1.bf16.msra.mxu0 %v3261
          %3274 = vmatprep.subr.bf16.mxu0 0
          %3275 = vmatpush1.bf16.msra.mxu0 %v3262
          %3276 = vmatprep.subr.bf16.mxu0 0
          %3277 = vmatpush1.bf16.msra.mxu0 %v3263
          %3278 = vmatprep.subr.bf16.mxu0 0
          %3279 = vmatpush1.bf16.msra.mxu0 %v3264
          %3280 = vmatprep.subr.bf16.mxu0 0
          %3281 = vmatpush1.bf16.msra.mxu0 %v3265
          %3282 = vmatprep.subr.bf16.mxu0 0
          %3283 = vmatpush1.bf16.msra.mxu0 0
          %3284 = vmatprep.subr.bf16.mxu0 0
          %3285 = vmatpush1.bf16.msra.mxu0 0
          %3286 = vmatprep.subr.bf16.mxu0 0
          %3287 = vmatpush1.bf16.msra.mxu0 0
          %3288 = vmatprep.subr.bf16.mxu0 0
          %3289 = vmatpush1.bf16.msra.mxu0 0
          %3290 = vmatprep.subr.bf16.mxu0 0
          %3291 = vmatpush1.bf16.msra.mxu0 0
          %3292 = vmatprep.subr.bf16.mxu0 0
          %3293 = vmatpush1.bf16.msra.mxu0 0
          %3294 = vmatprep.subr.bf16.mxu0 0
          %3295 = vmatpush1.bf16.msra.mxu0 0
          %3296 = vmatprep.subr.bf16.mxu0 0
          %3297 = vmatpush1.bf16.msra.mxu0 0
          %3298 = vmatprep.mubr.bf16.mxu0 0
          %3299 = vmatmul.mubr.bf16.gmra.mrb[0].mxu0 %v3250
          %v3300 = vpop.f32.mrb[0].mxu0
          %v3301 = vadd.f32 0.0, %v3300
          %v3302 = vpop.f32.mrb[0].mxu0
          %v3303 = vpop.f32.mrb[0].mxu0
          %v3304 = vadd.f32 0.0, %v3303
          %v3305 = vpop.f32.mrb[0].mxu0
          %3306 = vmatprep.mubr.bf16.mxu0 0
          %3307 = vmatmul.mubr.bf16.gmra.mrb[0].mxu0 %v3251
          %v3308 = vpop.f32.mrb[0].mxu0
          %v3309 = vadd.f32 0.0, %v3308
          %v3310 = vpop.f32.mrb[0].mxu0
          %v3311 = vpop.f32.mrb[0].mxu0
          %v3312 = vadd.f32 0.0, %v3311
          %v3313 = vpop.f32.mrb[0].mxu0
          %3314 = vmatprep.mubr.bf16.mxu0 0
          %3315 = vmatmul.mubr.bf16.gmra.mrb[0].mxu0 %v3252
          %v3316 = vpop.f32.mrb[0].mxu0
          %v3317 = vadd.f32 0.0, %v3316
          %v3318 = vpop.f32.mrb[0].mxu0
          %v3319 = vpop.f32.mrb[0].mxu0
          %v3320 = vadd.f32 0.0, %v3319
          %v3321 = vpop.f32.mrb[0].mxu0
          %3322 = vmatprep.mubr.bf16.mxu0 0
          %3323 = vmatmul.mubr.bf16.gmra.mrb[0].mxu0 %v3253
          %v3324 = vpop.f32.mrb[0].mxu0
          %v3325 = vadd.f32 0.0, %v3324
          %v3326 = vpop.f32.mrb[0].mxu0
          %v3327 = vpop.f32.mrb[0].mxu0
          %v3328 = vadd.f32 0.0, %v3327
          %v3329 = vpop.f32.mrb[0].mxu0
          %3330 = vmatprep.mubr.bf16.mxu0 0
          %3331 = vmatmul.mubr.bf16.gmra.mrb[0].mxu0 %v3254
          %v3332 = vpop.f32.mrb[0].mxu0
          %v3333 = vadd.f32 0.0, %v3332
          %v3334 = vpop.f32.mrb[0].mxu0
          %v3335 = vpop.f32.mrb[0].mxu0
          %v3336 = vadd.f32 0.0, %v3335
          %v3337 = vpop.f32.mrb[0].mxu0
          %3338 = vmatprep.mubr.bf16.mxu0 0
          %3339 = vmatmul.mubr.bf16.gmra.mrb[0].mxu0 %v3255
          %v3340 = vpop.f32.mrb[0].mxu0
          %v3341 = vadd.f32 0.0, %v3340
          %v3342 = vpop.f32.mrb[0].mxu0
          %v3343 = vpop.f32.mrb[0].mxu0
          %v3344 = vadd.f32 0.0, %v3343
          %v3345 = vpop.f32.mrb[0].mxu0
          %3346 = vmatprep.mubr.bf16.mxu0 0
          %3347 = vmatmul.mubr.bf16.gmra.mrb[0].mxu0 %v3256
          %v3348 = vpop.f32.mrb[0].mxu0
          %v3349 = vadd.f32 0.0, %v3348
          %v3350 = vpop.f32.mrb[0].mxu0
          %v3351 = vpop.f32.mrb[0].mxu0
          %v3352 = vadd.f32 0.0, %v3351
          %v3353 = vpop.f32.mrb[0].mxu0
          %3354 = vmatprep.mubr.bf16.mxu0 0
          %3355 = vmatmul.mubr.bf16.gmra.mrb[0].mxu0 %v3257
          %v3356 = vpop.f32.mrb[0].mxu0
          %v3357 = vadd.f32 0.0, %v3356
          %v3358 = vpop.f32.mrb[0].mxu0
          %v3359 = vpop.f32.mrb[0].mxu0
          %v3360 = vadd.f32 0.0, %v3359
          %v3361 = vpop.f32.mrb[0].mxu0
          %3362 = vdwg.mxu0
          %v3363 = vpack.c.bf16 %v3304, %v3301
          %v3364 = vpack.c.bf16 %v3312, %v3309
          %v3365 = vpack.c.bf16 %v3320, %v3317
          %v3366 = vpack.c.bf16 %v3328, %v3325
          %v3367 = vpack.c.bf16 %v3336, %v3333
          %v3368 = vpack.c.bf16 %v3344, %v3341
          %v3369 = vpack.c.bf16 %v3352, %v3349
          %v3370 = vpack.c.bf16 %v3360, %v3357
          %3371 = vst [vmem:[#allocation3 + $0x8] sm:$0xff] %v3363
          %3372 = vst [vmem:[#allocation3 + $0x18] sm:$0xff] %v3364
          %3373 = vst [vmem:[#allocation3 + $0x28] sm:$0xff] %v3365
          %3374 = vst [vmem:[#allocation3 + $0x38] sm:$0xff] %v3366
          %3375 = vst [vmem:[#allocation3 + $0x48] sm:$0xff] %v3367
          %3376 = vst [vmem:[#allocation3 + $0x58] sm:$0xff] %v3368
          %3377 = vst [vmem:[#allocation3 + $0x68] sm:$0xff] %v3369
          %3378 = vst [vmem:[#allocation3 + $0x78] sm:$0xff] %v3370
          %v3379 = vld [vmem:[#allocation3] sm:$0xff]
          %v3380 = vld [vmem:[#allocation3 + $0x8] sm:$0xff]
          %v3381 = vld [vmem:[#allocation3 + $0x10] sm:$0xff]
          %v3382 = vld [vmem:[#allocation3 + $0x18] sm:$0xff]
          %v3383 = vld [vmem:[#allocation3 + $0x20] sm:$0xff]
          %v3384 = vld [vmem:[#allocation3 + $0x28] sm:$0xff]
          %v3385 = vld [vmem:[#allocation3 + $0x30] sm:$0xff]
          %v3386 = vld [vmem:[#allocation3 + $0x38] sm:$0xff]
          %v3387 = vld [vmem:[#allocation3 + $0x40] sm:$0xff]
          %v3388 = vld [vmem:[#allocation3 + $0x48] sm:$0xff]
          %v3389 = vld [vmem:[#allocation3 + $0x50] sm:$0xff]
          %v3390 = vld [vmem:[#allocation3 + $0x58] sm:$0xff]
          %v3391 = vld [vmem:[#allocation3 + $0x60] sm:$0xff]
          %v3392 = vld [vmem:[#allocation3 + $0x68] sm:$0xff]
          %v3393 = vld [vmem:[#allocation3 + $0x70] sm:$0xff]
          %v3394 = vld [vmem:[#allocation3 + $0x78] sm:$0xff]
          %v3395 = vld [vmem:[#allocation21] sm:$0xf]
          %v3396 = vld [vmem:[#allocation21 + $0x4] sm:$0xf]
          %v3397 = vld [vmem:[#allocation21 + $0x8] sm:$0xf]
          %v3398 = vld [vmem:[#allocation21 + $0xc] sm:$0xf]
          %v3399 = vld [vmem:[#allocation21 + $0x10] sm:$0xf]
          %v3400 = vld [vmem:[#allocation21 + $0x14] sm:$0xf]
          %v3401 = vld [vmem:[#allocation21 + $0x18] sm:$0xf]
          %v3402 = vld [vmem:[#allocation21 + $0x1c] sm:$0xf]
          %v3403 = vld [vmem:[#allocation21 + $0x20] sm:$0xf]
          %v3404 = vld [vmem:[#allocation21 + $0x24] sm:$0xf]
          %v3405 = vld [vmem:[#allocation21 + $0x28] sm:$0xf]
          %v3406 = vld [vmem:[#allocation21 + $0x2c] sm:$0xf]
          %v3407 = vld [vmem:[#allocation21 + $0x30] sm:$0xf]
          %v3408 = vld [vmem:[#allocation21 + $0x34] sm:$0xf]
          %v3409 = vld [vmem:[#allocation21 + $0x38] sm:$0xf]
          %v3410 = vld [vmem:[#allocation21 + $0x3c] sm:$0xf]
          %v3411 = vld [vmem:[#allocation21 + $0x40] sm:$0xf]
          %v3412 = vld [vmem:[#allocation21 + $0x44] sm:$0xf]
          %v3413 = vld [vmem:[#allocation21 + $0x48] sm:$0xf]
          %v3414 = vld [vmem:[#allocation21 + $0x4c] sm:$0xf]
          %v3415 = vld [vmem:[#allocation21 + $0x50] sm:$0xf]
          %v3416 = vld [vmem:[#allocation21 + $0x54] sm:$0xf]
          %v3417 = vld [vmem:[#allocation21 + $0x58] sm:$0xf]
          %v3418 = vld [vmem:[#allocation21 + $0x5c] sm:$0xf]
          %v3419 = vld [vmem:[#allocation21 + $0x60] sm:$0xf]
          %v3420 = vld [vmem:[#allocation21 + $0x64] sm:$0xf]
          %v3421 = vld [vmem:[#allocation21 + $0x68] sm:$0xf]
          %v3422 = vld [vmem:[#allocation21 + $0x6c] sm:$0xf]
          %v3423 = vld [vmem:[#allocation21 + $0x70] sm:$0xf]
          %v3424 = vld [vmem:[#allocation21 + $0x74] sm:$0xf]
          %v3425 = vld [vmem:[#allocation21 + $0x78] sm:$0xf]
          %v3426 = vld [vmem:[#allocation21 + $0x7c] sm:$0xf]
          %v3459 = vunpack.c.l.b16 %v3395
          %v3460 = vunpack.c.l.b16 %v3396
          %v3461 = vunpack.c.l.b16 %v3397
          %v3462 = vunpack.c.l.b16 %v3398
          %v3463 = vunpack.c.l.b16 %v3399
          %v3464 = vunpack.c.l.b16 %v3400
          %v3465 = vunpack.c.l.b16 %v3401
          %v3466 = vunpack.c.l.b16 %v3402
          %v3467 = vunpack.c.l.b16 %v3403
          %v3468 = vunpack.c.l.b16 %v3404
          %v3469 = vunpack.c.l.b16 %v3405
          %v3470 = vunpack.c.l.b16 %v3406
          %v3471 = vunpack.c.l.b16 %v3407
          %v3472 = vunpack.c.l.b16 %v3408
          %v3473 = vunpack.c.l.b16 %v3409
          %v3474 = vunpack.c.l.b16 %v3410
          %v3475 = vunpack.c.l.b16 %v3411
          %v3476 = vunpack.c.l.b16 %v3412
          %v3477 = vunpack.c.l.b16 %v3413
          %v3478 = vunpack.c.l.b16 %v3414
          %v3479 = vunpack.c.l.b16 %v3415
          %v3480 = vunpack.c.l.b16 %v3416
          %v3481 = vunpack.c.l.b16 %v3417
          %v3482 = vunpack.c.l.b16 %v3418
          %v3483 = vunpack.c.l.b16 %v3419
          %v3484 = vunpack.c.l.b16 %v3420
          %v3485 = vunpack.c.l.b16 %v3421
          %v3486 = vunpack.c.l.b16 %v3422
          %v3487 = vunpack.c.l.b16 %v3423
          %v3488 = vunpack.c.l.b16 %v3424
          %v3489 = vunpack.c.l.b16 %v3425
          %v3490 = vunpack.c.l.b16 %v3426
          %v3491 = vpack.c.b16 %v3460, %v3459
          %v3492 = vpack.c.b16 %v3462, %v3461
          %v3493 = vpack.c.b16 %v3464, %v3463
          %v3494 = vpack.c.b16 %v3466, %v3465
          %v3495 = vpack.c.b16 %v3468, %v3467
          %v3496 = vpack.c.b16 %v3470, %v3469
          %v3497 = vpack.c.b16 %v3472, %v3471
          %v3498 = vpack.c.b16 %v3474, %v3473
          %v3499 = vpack.c.b16 %v3476, %v3475
          %v3500 = vpack.c.b16 %v3478, %v3477
          %v3501 = vpack.c.b16 %v3480, %v3479
          %v3502 = vpack.c.b16 %v3482, %v3481
          %v3503 = vpack.c.b16 %v3484, %v3483
          %v3504 = vpack.c.b16 %v3486, %v3485
          %v3505 = vpack.c.b16 %v3488, %v3487
          %v3506 = vpack.c.b16 %v3490, %v3489
          %3523 = vmatprep.subr.bf16.mxu0 0
          %3524 = vmatpush1.bf16.msra.mxu0 %v3491
          %3525 = vmatprep.subr.bf16.mxu0 0
          %3526 = vmatpush1.bf16.msra.mxu0 %v3492
          %3527 = vmatprep.subr.bf16.mxu0 0
          %3528 = vmatpush1.bf16.msra.mxu0 %v3493
          %3529 = vmatprep.subr.bf16.mxu0 0
          %3530 = vmatpush1.bf16.msra.mxu0 %v3494
          %3531 = vmatprep.subr.bf16.mxu0 0
          %3532 = vmatpush1.bf16.msra.mxu0 %v3495
          %3533 = vmatprep.subr.bf16.mxu0 0
          %3534 = vmatpush1.bf16.msra.mxu0 %v3496
          %3535 = vmatprep.subr.bf16.mxu0 0
          %3536 = vmatpush1.bf16.msra.mxu0 %v3497
          %3537 = vmatprep.subr.bf16.mxu0 0
          %3538 = vmatpush1.bf16.msra.mxu0 %v3498
          %3539 = vmatprep.subr.bf16.mxu0 0
          %3540 = vmatpush1.bf16.msra.mxu0 %v3499
          %3541 = vmatprep.subr.bf16.mxu0 0
          %3542 = vmatpush1.bf16.msra.mxu0 %v3500
          %3543 = vmatprep.subr.bf16.mxu0 0
          %3544 = vmatpush1.bf16.msra.mxu0 %v3501
          %3545 = vmatprep.subr.bf16.mxu0 0
          %3546 = vmatpush1.bf16.msra.mxu0 %v3502
          %3547 = vmatprep.subr.bf16.mxu0 0
          %3548 = vmatpush1.bf16.msra.mxu0 %v3503
          %3549 = vmatprep.subr.bf16.mxu0 0
          %3550 = vmatpush1.bf16.msra.mxu0 %v3504
          %3551 = vmatprep.subr.bf16.mxu0 0
          %3552 = vmatpush1.bf16.msra.mxu0 %v3505
          %3553 = vmatprep.subr.bf16.mxu0 0
          %3554 = vmatpush1.bf16.msra.mxu0 %v3506
          %3555 = vmatprep.mubr.bf16.mxu0 %v3380
          %3556 = vmatmul.mubr.bf16.gmra.mrb[0].mxu0 %v3379
          %v3557 = vpop.f32.mrb[0].mxu0
          %v3558 = vadd.f32 0.0, %v3557
          %v3559 = vpop.f32.mrb[0].mxu0
          %v3560 = vpop.f32.mrb[0].mxu0
          %v3561 = vadd.f32 0.0, %v3560
          %v3562 = vpop.f32.mrb[0].mxu0
          %3563 = vmatprep.mubr.bf16.mxu0 %v3382
          %3564 = vmatmul.mubr.bf16.gmra.mrb[0].mxu0 %v3381
          %v3565 = vpop.f32.mrb[0].mxu0
          %v3566 = vadd.f32 0.0, %v3565
          %v3567 = vpop.f32.mrb[0].mxu0
          %v3568 = vpop.f32.mrb[0].mxu0
          %v3569 = vadd.f32 0.0, %v3568
          %v3570 = vpop.f32.mrb[0].mxu0
          %3571 = vmatprep.mubr.bf16.mxu0 %v3384
          %3572 = vmatmul.mubr.bf16.gmra.mrb[0].mxu0 %v3383
          %v3573 = vpop.f32.mrb[0].mxu0
          %v3574 = vadd.f32 0.0, %v3573
          %v3575 = vpop.f32.mrb[0].mxu0
          %v3576 = vpop.f32.mrb[0].mxu0
          %v3577 = vadd.f32 0.0, %v3576
          %v3578 = vpop.f32.mrb[0].mxu0
          %3579 = vmatprep.mubr.bf16.mxu0 %v3386
          %3580 = vmatmul.mubr.bf16.gmra.mrb[0].mxu0 %v3385
          %v3581 = vpop.f32.mrb[0].mxu0
          %v3582 = vadd.f32 0.0, %v3581
          %v3583 = vpop.f32.mrb[0].mxu0
          %v3584 = vpop.f32.mrb[0].mxu0
          %v3585 = vadd.f32 0.0, %v3584
          %v3586 = vpop.f32.mrb[0].mxu0
          %3587 = vmatprep.mubr.bf16.mxu0 %v3388
          %3588 = vmatmul.mubr.bf16.gmra.mrb[0].mxu0 %v3387
          %v3589 = vpop.f32.mrb[0].mxu0
          %v3590 = vadd.f32 0.0, %v3589
          %v3591 = vpop.f32.mrb[0].mxu0
          %v3592 = vpop.f32.mrb[0].mxu0
          %v3593 = vadd.f32 0.0, %v3592
          %v3594 = vpop.f32.mrb[0].mxu0
          %3595 = vmatprep.mubr.bf16.mxu0 %v3390
          %3596 = vmatmul.mubr.bf16.gmra.mrb[0].mxu0 %v3389
          %v3597 = vpop.f32.mrb[0].mxu0
          %v3598 = vadd.f32 0.0, %v3597
          %v3599 = vpop.f32.mrb[0].mxu0
          %v3600 = vpop.f32.mrb[0].mxu0
          %v3601 = vadd.f32 0.0, %v3600
          %v3602 = vpop.f32.mrb[0].mxu0
          %3603 = vmatprep.mubr.bf16.mxu0 %v3392
          %3604 = vmatmul.mubr.bf16.gmra.mrb[0].mxu0 %v3391
          %v3605 = vpop.f32.mrb[0].mxu0
          %v3606 = vadd.f32 0.0, %v3605
          %v3607 = vpop.f32.mrb[0].mxu0
          %v3608 = vpop.f32.mrb[0].mxu0
          %v3609 = vadd.f32 0.0, %v3608
          %v3610 = vpop.f32.mrb[0].mxu0
          %3611 = vmatprep.mubr.bf16.mxu0 %v3394
          %3612 = vmatmul.mubr.bf16.gmra.mrb[0].mxu0 %v3393
          %v3613 = vpop.f32.mrb[0].mxu0
          %v3614 = vadd.f32 0.0, %v3613
          %v3615 = vpop.f32.mrb[0].mxu0
          %v3616 = vpop.f32.mrb[0].mxu0
          %v3617 = vadd.f32 0.0, %v3616
          %v3618 = vpop.f32.mrb[0].mxu0
          %3619 = vdwg.mxu0
          %v3620 = vadd.f32 %v632, %v3558
          %v3621 = vadd.f32 %v633, %v3561
          %v3622 = vadd.f32 %v634, %v3566
          %v3623 = vadd.f32 %v635, %v3569
          %v3624 = vadd.f32 %v636, %v3574
          %v3625 = vadd.f32 %v637, %v3577
          %v3626 = vadd.f32 %v638, %v3582
          %v3627 = vadd.f32 %v639, %v3585
          %v3628 = vadd.f32 %v640, %v3590
          %v3629 = vadd.f32 %v641, %v3593
          %v3630 = vadd.f32 %v642, %v3598
          %v3631 = vadd.f32 %v643, %v3601
          %v3632 = vadd.f32 %v644, %v3606
          %v3633 = vadd.f32 %v645, %v3609
          %v3634 = vadd.f32 %v646, %v3614
          %v3635 = vadd.f32 %v647, %v3617
          %3636 = vst [vmem:[#allocation4] sm:$0xff] %v3620
          %3637 = vst [vmem:[#allocation4 + $0x8] sm:$0xff] %v3621
          %3638 = vst [vmem:[#allocation4 + $0x10] sm:$0xff] %v3622
          %3639 = vst [vmem:[#allocation4 + $0x18] sm:$0xff] %v3623
          %3640 = vst [vmem:[#allocation4 + $0x20] sm:$0xff] %v3624
          %3641 = vst [vmem:[#allocation4 + $0x28] sm:$0xff] %v3625
          %3642 = vst [vmem:[#allocation4 + $0x30] sm:$0xff] %v3626
          %3643 = vst [vmem:[#allocation4 + $0x38] sm:$0xff] %v3627
          %3644 = vst [vmem:[#allocation4 + $0x40] sm:$0xff] %v3628
          %3645 = vst [vmem:[#allocation4 + $0x48] sm:$0xff] %v3629
          %3646 = vst [vmem:[#allocation4 + $0x50] sm:$0xff] %v3630
          %3647 = vst [vmem:[#allocation4 + $0x58] sm:$0xff] %v3631
          %3648 = vst [vmem:[#allocation4 + $0x60] sm:$0xff] %v3632
          %3649 = vst [vmem:[#allocation4 + $0x68] sm:$0xff] %v3633
          %3650 = vst [vmem:[#allocation4 + $0x70] sm:$0xff] %v3634
          %3651 = vst [vmem:[#allocation4 + $0x78] sm:$0xff] %v3635
          %v3652 = vmul.f32 %v3620, %v3620
          %v3653 = vmul.f32 %v3621, %v3621
          %v3654 = vmul.f32 %v3622, %v3622
          %v3655 = vmul.f32 %v3623, %v3623
          %v3656 = vmul.f32 %v3624, %v3624
          %v3657 = vmul.f32 %v3625, %v3625
          %v3658 = vmul.f32 %v3626, %v3626
          %v3659 = vmul.f32 %v3627, %v3627
          %v3660 = vmul.f32 %v3628, %v3628
          %v3661 = vmul.f32 %v3629, %v3629
          %v3662 = vmul.f32 %v3630, %v3630
          %v3663 = vmul.f32 %v3631, %v3631
          %v3664 = vmul.f32 %v3632, %v3632
          %v3665 = vmul.f32 %v3633, %v3633
          %v3666 = vmul.f32 %v3634, %v3634
          %v3667 = vmul.f32 %v3635, %v3635
          %3668 = vadd.xlane.f32.xlu0 %v3652
          %v3669 = vpop.xlane.xlu0 %3668
          %3670 = vadd.xlane.f32.xlu0 %v3653
          %v3671 = vpop.xlane.xlu0 %3670
          %3672 = vadd.xlane.f32.xlu0 %v3654
          %v3673 = vpop.xlane.xlu0 %3672
          %3674 = vadd.xlane.f32.xlu0 %v3655
          %v3675 = vpop.xlane.xlu0 %3674
          %3676 = vadd.xlane.f32.xlu0 %v3656
          %v3677 = vpop.xlane.xlu0 %3676
          %3678 = vadd.xlane.f32.xlu0 %v3657
          %v3679 = vpop.xlane.xlu0 %3678
          %3680 = vadd.xlane.f32.xlu0 %v3658
          %v3681 = vpop.xlane.xlu0 %3680
          %3682 = vadd.xlane.f32.xlu0 %v3659
          %v3683 = vpop.xlane.xlu0 %3682
          %3684 = vadd.xlane.f32.xlu0 %v3660
          %v3685 = vpop.xlane.xlu0 %3684
          %3686 = vadd.xlane.f32.xlu0 %v3661
          %v3687 = vpop.xlane.xlu0 %3686
          %3688 = vadd.xlane.f32.xlu0 %v3662
          %v3689 = vpop.xlane.xlu0 %3688
          %3690 = vadd.xlane.f32.xlu0 %v3663
          %v3691 = vpop.xlane.xlu0 %3690
          %3692 = vadd.xlane.f32.xlu0 %v3664
          %v3693 = vpop.xlane.xlu0 %3692
          %3694 = vadd.xlane.f32.xlu0 %v3665
          %v3695 = vpop.xlane.xlu0 %3694
          %3696 = vadd.xlane.f32.xlu0 %v3666
          %v3697 = vpop.xlane.xlu0 %3696
          %3698 = vadd.xlane.f32.xlu0 %v3667
          %v3699 = vpop.xlane.xlu0 %3698
          %v3700 = vmul.f32 %v3669, %v696
          %v3701 = vmul.f32 %v3671, %v696
          %v3702 = vmul.f32 %v3673, %v696
          %v3703 = vmul.f32 %v3675, %v696
          %v3704 = vmul.f32 %v3677, %v696
          %v3705 = vmul.f32 %v3679, %v696
          %v3706 = vmul.f32 %v3681, %v696
          %v3707 = vmul.f32 %v3683, %v696
          %v3708 = vmul.f32 %v3685, %v696
          %v3709 = vmul.f32 %v3687, %v696
          %v3710 = vmul.f32 %v3689, %v696
          %v3711 = vmul.f32 %v3691, %v696
          %v3712 = vmul.f32 %v3693, %v696
          %v3713 = vmul.f32 %v3695, %v696
          %v3714 = vmul.f32 %v3697, %v696
          %v3715 = vmul.f32 %v3699, %v696
          %v3716 = vadd.f32 %v3700, 1.1920929e-07
          %v3717 = vadd.f32 %v3701, 1.1920929e-07
          %v3718 = vadd.f32 %v3702, 1.1920929e-07
          %v3719 = vadd.f32 %v3703, 1.1920929e-07
          %v3720 = vadd.f32 %v3704, 1.1920929e-07
          %v3721 = vadd.f32 %v3705, 1.1920929e-07
          %v3722 = vadd.f32 %v3706, 1.1920929e-07
          %v3723 = vadd.f32 %v3707, 1.1920929e-07
          %v3724 = vadd.f32 %v3708, 1.1920929e-07
          %v3725 = vadd.f32 %v3709, 1.1920929e-07
          %v3726 = vadd.f32 %v3710, 1.1920929e-07
          %v3727 = vadd.f32 %v3711, 1.1920929e-07
          %v3728 = vadd.f32 %v3712, 1.1920929e-07
          %v3729 = vadd.f32 %v3713, 1.1920929e-07
          %v3730 = vadd.f32 %v3714, 1.1920929e-07
          %v3731 = vadd.f32 %v3715, 1.1920929e-07
          %v3732 = vrsqrt.pop %v3716
          %v3733 = vrsqrt.pop %v3717
          %v3734 = vrsqrt.pop %v3718
          %v3735 = vrsqrt.pop %v3719
          %v3736 = vrsqrt.pop %v3720
          %v3737 = vrsqrt.pop %v3721
          %v3738 = vrsqrt.pop %v3722
          %v3739 = vrsqrt.pop %v3723
          %v3740 = vrsqrt.pop %v3724
          %v3741 = vrsqrt.pop %v3725
          %v3742 = vrsqrt.pop %v3726
          %v3743 = vrsqrt.pop %v3727
          %v3744 = vrsqrt.pop %v3728
          %v3745 = vrsqrt.pop %v3729
          %v3746 = vrsqrt.pop %v3730
          %v3747 = vrsqrt.pop %v3731
          %v3748 = vmul.f32 %v3620, %v3732
          %v3749 = vmul.f32 %v3621, %v3733
          %v3750 = vmul.f32 %v3622, %v3734
          %v3751 = vmul.f32 %v3623, %v3735
          %v3752 = vmul.f32 %v3624, %v3736
          %v3753 = vmul.f32 %v3625, %v3737
          %v3754 = vmul.f32 %v3626, %v3738
          %v3755 = vmul.f32 %v3627, %v3739
          %v3756 = vmul.f32 %v3628, %v3740
          %v3757 = vmul.f32 %v3629, %v3741
          %v3758 = vmul.f32 %v3630, %v3742
          %v3759 = vmul.f32 %v3631, %v3743
          %v3760 = vmul.f32 %v3632, %v3744
          %v3761 = vmul.f32 %v3633, %v3745
          %v3762 = vmul.f32 %v3634, %v3746
          %v3763 = vmul.f32 %v3635, %v3747
          %v3764 = vpack.c.bf16 %v3749, %v3748
          %v3765 = vpack.c.bf16 %v3751, %v3750
          %v3766 = vpack.c.bf16 %v3753, %v3752
          %v3767 = vpack.c.bf16 %v3755, %v3754
          %v3768 = vpack.c.bf16 %v3757, %v3756
          %v3769 = vpack.c.bf16 %v3759, %v3758
          %v3770 = vpack.c.bf16 %v3761, %v3760
          %v3771 = vpack.c.bf16 %v3763, %v3762
          %3772 = vst [vmem:[#allocation5] sm:$0xff] %v3764
          %3773 = vst [vmem:[#allocation5 + $0x8] sm:$0xff] %v3765
          %3774 = vst [vmem:[#allocation5 + $0x10] sm:$0xff] %v3766
          %3775 = vst [vmem:[#allocation5 + $0x18] sm:$0xff] %v3767
          %3776 = vst [vmem:[#allocation5 + $0x20] sm:$0xff] %v3768
          %3777 = vst [vmem:[#allocation5 + $0x28] sm:$0xff] %v3769
          %3778 = vst [vmem:[#allocation5 + $0x30] sm:$0xff] %v3770
          %3779 = vst [vmem:[#allocation5 + $0x38] sm:$0xff] %v3771
        $region112: #{tpu_custom_call.1} parent=63 // pred_fallthru
          _
        %v3780 = vld [vmem:[#allocation5] sm:$0xff]
        %v3781 = vld [vmem:[#allocation5 + $0x8] sm:$0xff]
        %v3782 = vld [vmem:[#allocation5 + $0x10] sm:$0xff]
        %v3783 = vld [vmem:[#allocation5 + $0x18] sm:$0xff]
        %v3784 = vld [vmem:[#allocation5 + $0x20] sm:$0xff]
        %v3785 = vld [vmem:[#allocation5 + $0x28] sm:$0xff]
        %v3786 = vld [vmem:[#allocation5 + $0x30] sm:$0xff]
        %v3787 = vld [vmem:[#allocation5 + $0x38] sm:$0xff]
        %v3788 = vld [vmem:[%s508] sm:$0xff]
        %v3789 = vld [vmem:[%s508 + $0x8] sm:$0xff]
        %v3790 = vld [vmem:[%s508 + $0x10] sm:$0xff]
        %v3791 = vld [vmem:[%s508 + $0x18] sm:$0xff]
        %v3792 = vld [vmem:[%s508 + $0x20] sm:$0xff]
        %v3793 = vld [vmem:[%s508 + $0x28] sm:$0xff]
        %v3794 = vld [vmem:[%s508 + $0x30] sm:$0xff]
        %v3795 = vld [vmem:[%s508 + $0x38] sm:$0xff]
        %v3796 = vld [vmem:[%s508 + $0x40] sm:$0xff]
        %v3797 = vld [vmem:[%s508 + $0x48] sm:$0xff]
        %v3798 = vld [vmem:[%s508 + $0x50] sm:$0xff]
        %v3799 = vld [vmem:[%s508 + $0x58] sm:$0xff]
        %v3800 = vld [vmem:[%s508 + $0x60] sm:$0xff]
        %v3801 = vld [vmem:[%s508 + $0x68] sm:$0xff]
        %v3802 = vld [vmem:[%s508 + $0x70] sm:$0xff]
        %v3803 = vld [vmem:[%s508 + $0x78] sm:$0xff]
        %v3820 = vunpack.c.l.b16 %v3788
        %v3821 = vunpack.c.h.b16 %v3788
        %v3822 = vunpack.c.l.b16 %v3789
        %v3823 = vunpack.c.h.b16 %v3789
        %v3824 = vunpack.c.l.b16 %v3790
        %v3825 = vunpack.c.h.b16 %v3790
        %v3826 = vunpack.c.l.b16 %v3791
        %v3827 = vunpack.c.h.b16 %v3791
        %v3828 = vunpack.c.l.b16 %v3792
        %v3829 = vunpack.c.h.b16 %v3792
        %v3830 = vunpack.c.l.b16 %v3793
        %v3831 = vunpack.c.h.b16 %v3793
        %v3832 = vunpack.c.l.b16 %v3794
        %v3833 = vunpack.c.h.b16 %v3794
        %v3834 = vunpack.c.l.b16 %v3795
        %v3835 = vunpack.c.h.b16 %v3795
        %v3836 = vunpack.c.l.b16 %v3796
        %v3837 = vunpack.c.h.b16 %v3796
        %v3838 = vunpack.c.l.b16 %v3797
        %v3839 = vunpack.c.h.b16 %v3797
        %v3840 = vunpack.c.l.b16 %v3798
        %v3841 = vunpack.c.h.b16 %v3798
        %v3842 = vunpack.c.l.b16 %v3799
        %v3843 = vunpack.c.h.b16 %v3799
        %v3844 = vunpack.c.l.b16 %v3800
        %v3845 = vunpack.c.h.b16 %v3800
        %v3846 = vunpack.c.l.b16 %v3801
        %v3847 = vunpack.c.h.b16 %v3801
        %v3848 = vunpack.c.l.b16 %v3802
        %v3849 = vunpack.c.h.b16 %v3802
        %v3850 = vunpack.c.l.b16 %v3803
        %v3851 = vunpack.c.h.b16 %v3803
        %v3852 = vpack.c.b16 %v3822, %v3820
        %v3853 = vpack.c.b16 %v3823, %v3821
        %v3854 = vpack.c.b16 %v3826, %v3824
        %v3855 = vpack.c.b16 %v3827, %v3825
        %v3856 = vpack.c.b16 %v3830, %v3828
        %v3857 = vpack.c.b16 %v3831, %v3829
        %v3858 = vpack.c.b16 %v3834, %v3832
        %v3859 = vpack.c.b16 %v3835, %v3833
        %v3860 = vpack.c.b16 %v3838, %v3836
        %v3861 = vpack.c.b16 %v3839, %v3837
        %v3862 = vpack.c.b16 %v3842, %v3840
        %v3863 = vpack.c.b16 %v3843, %v3841
        %v3864 = vpack.c.b16 %v3846, %v3844
        %v3865 = vpack.c.b16 %v3847, %v3845
        %v3866 = vpack.c.b16 %v3850, %v3848
        %v3867 = vpack.c.b16 %v3851, %v3849
        %3884 = vmatprep.subr.bf16.mxu0 %v3853
        %3885 = vmatpush1.bf16.msra.mxu0 %v3852
        %3886 = vmatprep.subr.bf16.mxu0 %v3855
        %3887 = vmatpush1.bf16.msra.mxu0 %v3854
        %3888 = vmatprep.subr.bf16.mxu0 %v3857
        %3889 = vmatpush1.bf16.msra.mxu0 %v3856
        %3890 = vmatprep.subr.bf16.mxu0 %v3859
        %3891 = vmatpush1.bf16.msra.mxu0 %v3858
        %3892 = vmatprep.subr.bf16.mxu0 %v3861
        %3893 = vmatpush1.bf16.msra.mxu0 %v3860
        %3894 = vmatprep.subr.bf16.mxu0 %v3863
        %3895 = vmatpush1.bf16.msra.mxu0 %v3862
        %3896 = vmatprep.subr.bf16.mxu0 %v3865
        %3897 = vmatpush1.bf16.msra.mxu0 %v3864
        %3898 = vmatprep.subr.bf16.mxu0 %v3867
        %3899 = vmatpush1.bf16.msra.mxu0 %v3866
        %3900 = vmatprep.subr.bf16.mxu0 0
        %3901 = vmatpush1.bf16.msra.mxu0 0
        %3902 = vmatprep.subr.bf16.mxu0 0
        %3903 = vmatpush1.bf16.msra.mxu0 0
        %3904 = vmatprep.subr.bf16.mxu0 0
        %3905 = vmatpush1.bf16.msra.mxu0 0
        %3906 = vmatprep.subr.bf16.mxu0 0
        %3907 = vmatpush1.bf16.msra.mxu0 0
        %3908 = vmatprep.subr.bf16.mxu0 0
        %3909 = vmatpush1.bf16.msra.mxu0 0
        %3910 = vmatprep.subr.bf16.mxu0 0
        %3911 = vmatpush1.bf16.msra.mxu0 0
        %3912 = vmatprep.subr.bf16.mxu0 0
        %3913 = vmatpush1.bf16.msra.mxu0 0
        %3914 = vmatprep.subr.bf16.mxu0 0
        %3915 = vmatpush1.bf16.msra.mxu0 0
        %3916 = vmatprep.mubr.bf16.mxu0 0
        %3917 = vmatmul.mubr.bf16.gmra.mrb[0].mxu0 %v3780
        %v3918 = vpop.f32.mrb[0].mxu0
        %v3919 = vadd.f32 0.0, %v3918
        %v3920 = vpop.f32.mrb[0].mxu0
        %v3921 = vadd.f32 0.0, %v3920
        %v3922 = vpop.f32.mrb[0].mxu0
        %v3923 = vadd.f32 0.0, %v3922
        %v3924 = vpop.f32.mrb[0].mxu0
        %v3925 = vadd.f32 0.0, %v3924
        %3926 = vmatprep.mubr.bf16.mxu0 0
        %3927 = vmatmul.mubr.bf16.gmra.mrb[0].mxu0 %v3781
        %v3928 = vpop.f32.mrb[0].mxu0
        %v3929 = vadd.f32 0.0, %v3928
        %v3930 = vpop.f32.mrb[0].mxu0
        %v3931 = vadd.f32 0.0, %v3930
        %v3932 = vpop.f32.mrb[0].mxu0
        %v3933 = vadd.f32 0.0, %v3932
        %v3934 = vpop.f32.mrb[0].mxu0
        %v3935 = vadd.f32 0.0, %v3934
        %3936 = vmatprep.mubr.bf16.mxu0 0
        %3937 = vmatmul.mubr.bf16.gmra.mrb[0].mxu0 %v3782
        %v3938 = vpop.f32.mrb[0].mxu0
        %v3939 = vadd.f32 0.0, %v3938
        %v3940 = vpop.f32.mrb[0].mxu0
        %v3941 = vadd.f32 0.0, %v3940
        %v3942 = vpop.f32.mrb[0].mxu0
        %v3943 = vadd.f32 0.0, %v3942
        %v3944 = vpop.f32.mrb[0].mxu0
        %v3945 = vadd.f32 0.0, %v3944
        %3946 = vmatprep.mubr.bf16.mxu0 0
        %3947 = vmatmul.mubr.bf16.gmra.mrb[0].mxu0 %v3783
        %v3948 = vpop.f32.mrb[0].mxu0
        %v3949 = vadd.f32 0.0, %v3948
        %v3950 = vpop.f32.mrb[0].mxu0
        %v3951 = vadd.f32 0.0, %v3950
        %v3952 = vpop.f32.mrb[0].mxu0
        %v3953 = vadd.f32 0.0, %v3952
        %v3954 = vpop.f32.mrb[0].mxu0
        %v3955 = vadd.f32 0.0, %v3954
        %3956 = vmatprep.mubr.bf16.mxu0 0
        %3957 = vmatmul.mubr.bf16.gmra.mrb[0].mxu0 %v3784
        %v3958 = vpop.f32.mrb[0].mxu0
        %v3959 = vadd.f32 0.0, %v3958
        %v3960 = vpop.f32.mrb[0].mxu0
        %v3961 = vadd.f32 0.0, %v3960
        %v3962 = vpop.f32.mrb[0].mxu0
        %v3963 = vadd.f32 0.0, %v3962
        %v3964 = vpop.f32.mrb[0].mxu0
        %v3965 = vadd.f32 0.0, %v3964
        %3966 = vmatprep.mubr.bf16.mxu0 0
        %3967 = vmatmul.mubr.bf16.gmra.mrb[0].mxu0 %v3785
        %v3968 = vpop.f32.mrb[0].mxu0
        %v3969 = vadd.f32 0.0, %v3968
        %v3970 = vpop.f32.mrb[0].mxu0
        %v3971 = vadd.f32 0.0, %v3970
        %v3972 = vpop.f32.mrb[0].mxu0
        %v3973 = vadd.f32 0.0, %v3972
        %v3974 = vpop.f32.mrb[0].mxu0
        %v3975 = vadd.f32 0.0, %v3974
        %3976 = vmatprep.mubr.bf16.mxu0 0
        %3977 = vmatmul.mubr.bf16.gmra.mrb[0].mxu0 %v3786
        %v3978 = vpop.f32.mrb[0].mxu0
        %v3979 = vadd.f32 0.0, %v3978
        %v3980 = vpop.f32.mrb[0].mxu0
        %v3981 = vadd.f32 0.0, %v3980
        %v3982 = vpop.f32.mrb[0].mxu0
        %v3983 = vadd.f32 0.0, %v3982
        %v3984 = vpop.f32.mrb[0].mxu0
        %v3985 = vadd.f32 0.0, %v3984
        %3986 = vmatprep.mubr.bf16.mxu0 0
        %3987 = vmatmul.mubr.bf16.gmra.mrb[0].mxu0 %v3787
        %v3988 = vpop.f32.mrb[0].mxu0
        %v3989 = vadd.f32 0.0, %v3988
        %v3990 = vpop.f32.mrb[0].mxu0
        %v3991 = vadd.f32 0.0, %v3990
        %v3992 = vpop.f32.mrb[0].mxu0
        %v3993 = vadd.f32 0.0, %v3992
        %v3994 = vpop.f32.mrb[0].mxu0
        %v3995 = vadd.f32 0.0, %v3994
        %3996 = vdwg.mxu0
        %v3997 = vmax.f32 %v3919, 0.0
        %v3998 = vmax.f32 %v3921, 0.0
        %v3999 = vmax.f32 %v3923, 0.0
        %v4000 = vmax.f32 %v3925, 0.0
        %v4001 = vmax.f32 %v3929, 0.0
        %v4002 = vmax.f32 %v3931, 0.0
        %v4003 = vmax.f32 %v3933, 0.0
        %v4004 = vmax.f32 %v3935, 0.0
        %v4005 = vmax.f32 %v3939, 0.0
        %v4006 = vmax.f32 %v3941, 0.0
        %v4007 = vmax.f32 %v3943, 0.0
        %v4008 = vmax.f32 %v3945, 0.0
        %v4009 = vmax.f32 %v3949, 0.0
        %v4010 = vmax.f32 %v3951, 0.0
        %v4011 = vmax.f32 %v3953, 0.0
        %v4012 = vmax.f32 %v3955, 0.0
        %v4013 = vmax.f32 %v3959, 0.0
        %v4014 = vmax.f32 %v3961, 0.0
        %v4015 = vmax.f32 %v3963, 0.0
        %v4016 = vmax.f32 %v3965, 0.0
        %v4017 = vmax.f32 %v3969, 0.0
        %v4018 = vmax.f32 %v3971, 0.0
        %v4019 = vmax.f32 %v3973, 0.0
        %v4020 = vmax.f32 %v3975, 0.0
        %v4021 = vmax.f32 %v3979, 0.0
        %v4022 = vmax.f32 %v3981, 0.0
        %v4023 = vmax.f32 %v3983, 0.0
        %v4024 = vmax.f32 %v3985, 0.0
        %v4025 = vmax.f32 %v3989, 0.0
        %v4026 = vmax.f32 %v3991, 0.0
        %v4027 = vmax.f32 %v3993, 0.0
        %v4028 = vmax.f32 %v3995, 0.0
        %v4029 = vmul.f32 %v3997, %v3997
        %v4030 = vmul.f32 %v3998, %v3998
        %v4031 = vmul.f32 %v3999, %v3999
        %v4032 = vmul.f32 %v4000, %v4000
        %v4033 = vmul.f32 %v4001, %v4001
        %v4034 = vmul.f32 %v4002, %v4002
        %v4035 = vmul.f32 %v4003, %v4003
        %v4036 = vmul.f32 %v4004, %v4004
        %v4037 = vmul.f32 %v4005, %v4005
        %v4038 = vmul.f32 %v4006, %v4006
        %v4039 = vmul.f32 %v4007, %v4007
        %v4040 = vmul.f32 %v4008, %v4008
        %v4041 = vmul.f32 %v4009, %v4009
        %v4042 = vmul.f32 %v4010, %v4010
        %v4043 = vmul.f32 %v4011, %v4011
        %v4044 = vmul.f32 %v4012, %v4012
        %v4045 = vmul.f32 %v4013, %v4013
        %v4046 = vmul.f32 %v4014, %v4014
        %v4047 = vmul.f32 %v4015, %v4015
        %v4048 = vmul.f32 %v4016, %v4016
        %v4049 = vmul.f32 %v4017, %v4017
        %v4050 = vmul.f32 %v4018, %v4018
        %v4051 = vmul.f32 %v4019, %v4019
        %v4052 = vmul.f32 %v4020, %v4020
        %v4053 = vmul.f32 %v4021, %v4021
        %v4054 = vmul.f32 %v4022, %v4022
        %v4055 = vmul.f32 %v4023, %v4023
        %v4056 = vmul.f32 %v4024, %v4024
        %v4057 = vmul.f32 %v4025, %v4025
        %v4058 = vmul.f32 %v4026, %v4026
        %v4059 = vmul.f32 %v4027, %v4027
        %v4060 = vmul.f32 %v4028, %v4028
        %v4061 = vpack.c.bf16 %v4031, %v4029
        %v4062 = vpack.c.bf16 %v4032, %v4030
        %v4063 = vpack.c.bf16 %v4035, %v4033
        %v4064 = vpack.c.bf16 %v4036, %v4034
        %v4065 = vpack.c.bf16 %v4039, %v4037
        %v4066 = vpack.c.bf16 %v4040, %v4038
        %v4067 = vpack.c.bf16 %v4043, %v4041
        %v4068 = vpack.c.bf16 %v4044, %v4042
        %v4069 = vpack.c.bf16 %v4047, %v4045
        %v4070 = vpack.c.bf16 %v4048, %v4046
        %v4071 = vpack.c.bf16 %v4051, %v4049
        %v4072 = vpack.c.bf16 %v4052, %v4050
        %v4073 = vpack.c.bf16 %v4055, %v4053
        %v4074 = vpack.c.bf16 %v4056, %v4054
        %v4075 = vpack.c.bf16 %v4059, %v4057
        %v4076 = vpack.c.bf16 %v4060, %v4058
        %v4077 = vld [vmem:[%s517] sm:$0xf]
        %v4078 = vld [vmem:[%s517 + $0x4] sm:$0xf]
        %v4079 = vld [vmem:[%s517 + $0x8] sm:$0xf]
        %v4080 = vld [vmem:[%s517 + $0xc] sm:$0xf]
        %v4081 = vld [vmem:[%s517 + $0x10] sm:$0xf]
        %v4082 = vld [vmem:[%s517 + $0x14] sm:$0xf]
        %v4083 = vld [vmem:[%s517 + $0x18] sm:$0xf]
        %v4084 = vld [vmem:[%s517 + $0x1c] sm:$0xf]
        %v4085 = vld [vmem:[%s517 + $0x20] sm:$0xf]
        %v4086 = vld [vmem:[%s517 + $0x24] sm:$0xf]
        %v4087 = vld [vmem:[%s517 + $0x28] sm:$0xf]
        %v4088 = vld [vmem:[%s517 + $0x2c] sm:$0xf]
        %v4089 = vld [vmem:[%s517 + $0x30] sm:$0xf]
        %v4090 = vld [vmem:[%s517 + $0x34] sm:$0xf]
        %v4091 = vld [vmem:[%s517 + $0x38] sm:$0xf]
        %v4092 = vld [vmem:[%s517 + $0x3c] sm:$0xf]
        %v4093 = vld [vmem:[%s517 + $0x40] sm:$0xf]
        %v4094 = vld [vmem:[%s517 + $0x44] sm:$0xf]
        %v4095 = vld [vmem:[%s517 + $0x48] sm:$0xf]
        %v4096 = vld [vmem:[%s517 + $0x4c] sm:$0xf]
        %v4097 = vld [vmem:[%s517 + $0x50] sm:$0xf]
        %v4098 = vld [vmem:[%s517 + $0x54] sm:$0xf]
        %v4099 = vld [vmem:[%s517 + $0x58] sm:$0xf]
        %v4100 = vld [vmem:[%s517 + $0x5c] sm:$0xf]
        %v4101 = vld [vmem:[%s517 + $0x60] sm:$0xf]
        %v4102 = vld [vmem:[%s517 + $0x64] sm:$0xf]
        %v4103 = vld [vmem:[%s517 + $0x68] sm:$0xf]
        %v4104 = vld [vmem:[%s517 + $0x6c] sm:$0xf]
        %v4105 = vld [vmem:[%s517 + $0x70] sm:$0xf]
        %v4106 = vld [vmem:[%s517 + $0x74] sm:$0xf]
        %v4107 = vld [vmem:[%s517 + $0x78] sm:$0xf]
        %v4108 = vld [vmem:[%s517 + $0x7c] sm:$0xf]
        %v4141 = vunpack.c.l.b16 %v4077
        %v4142 = vunpack.c.l.b16 %v4078
        %v4143 = vunpack.c.l.b16 %v4079
        %v4144 = vunpack.c.l.b16 %v4080
        %v4145 = vunpack.c.l.b16 %v4081
        %v4146 = vunpack.c.l.b16 %v4082
        %v4147 = vunpack.c.l.b16 %v4083
        %v4148 = vunpack.c.l.b16 %v4084
        %v4149 = vunpack.c.l.b16 %v4085
        %v4150 = vunpack.c.l.b16 %v4086
        %v4151 = vunpack.c.l.b16 %v4087
        %v4152 = vunpack.c.l.b16 %v4088
        %v4153 = vunpack.c.l.b16 %v4089
        %v4154 = vunpack.c.l.b16 %v4090
        %v4155 = vunpack.c.l.b16 %v4091
        %v4156 = vunpack.c.l.b16 %v4092
        %v4157 = vunpack.c.l.b16 %v4093
        %v4158 = vunpack.c.l.b16 %v4094
        %v4159 = vunpack.c.l.b16 %v4095
        %v4160 = vunpack.c.l.b16 %v4096
        %v4161 = vunpack.c.l.b16 %v4097
        %v4162 = vunpack.c.l.b16 %v4098
        %v4163 = vunpack.c.l.b16 %v4099
        %v4164 = vunpack.c.l.b16 %v4100
        %v4165 = vunpack.c.l.b16 %v4101
        %v4166 = vunpack.c.l.b16 %v4102
        %v4167 = vunpack.c.l.b16 %v4103
        %v4168 = vunpack.c.l.b16 %v4104
        %v4169 = vunpack.c.l.b16 %v4105
        %v4170 = vunpack.c.l.b16 %v4106
        %v4171 = vunpack.c.l.b16 %v4107
        %v4172 = vunpack.c.l.b16 %v4108
        %v4173 = vpack.c.b16 %v4142, %v4141
        %v4174 = vpack.c.b16 %v4144, %v4143
        %v4175 = vpack.c.b16 %v4146, %v4145
        %v4176 = vpack.c.b16 %v4148, %v4147
        %v4177 = vpack.c.b16 %v4150, %v4149
        %v4178 = vpack.c.b16 %v4152, %v4151
        %v4179 = vpack.c.b16 %v4154, %v4153
        %v4180 = vpack.c.b16 %v4156, %v4155
        %v4181 = vpack.c.b16 %v4158, %v4157
        %v4182 = vpack.c.b16 %v4160, %v4159
        %v4183 = vpack.c.b16 %v4162, %v4161
        %v4184 = vpack.c.b16 %v4164, %v4163
        %v4185 = vpack.c.b16 %v4166, %v4165
        %v4186 = vpack.c.b16 %v4168, %v4167
        %v4187 = vpack.c.b16 %v4170, %v4169
        %v4188 = vpack.c.b16 %v4172, %v4171
        %4205 = vmatprep.subr.bf16.mxu0 0
        %4206 = vmatpush1.bf16.msra.mxu0 %v4173
        %4207 = vmatprep.subr.bf16.mxu0 0
        %4208 = vmatpush1.bf16.msra.mxu0 %v4174
        %4209 = vmatprep.subr.bf16.mxu0 0
        %4210 = vmatpush1.bf16.msra.mxu0 %v4175
        %4211 = vmatprep.subr.bf16.mxu0 0
        %4212 = vmatpush1.bf16.msra.mxu0 %v4176
        %4213 = vmatprep.subr.bf16.mxu0 0
        %4214 = vmatpush1.bf16.msra.mxu0 %v4177
        %4215 = vmatprep.subr.bf16.mxu0 0
        %4216 = vmatpush1.bf16.msra.mxu0 %v4178
        %4217 = vmatprep.subr.bf16.mxu0 0
        %4218 = vmatpush1.bf16.msra.mxu0 %v4179
        %4219 = vmatprep.subr.bf16.mxu0 0
        %4220 = vmatpush1.bf16.msra.mxu0 %v4180
        %4221 = vmatprep.subr.bf16.mxu0 0
        %4222 = vmatpush1.bf16.msra.mxu0 %v4181
        %4223 = vmatprep.subr.bf16.mxu0 0
        %4224 = vmatpush1.bf16.msra.mxu0 %v4182
        %4225 = vmatprep.subr.bf16.mxu0 0
        %4226 = vmatpush1.bf16.msra.mxu0 %v4183
        %4227 = vmatprep.subr.bf16.mxu0 0
        %4228 = vmatpush1.bf16.msra.mxu0 %v4184
        %4229 = vmatprep.subr.bf16.mxu0 0
        %4230 = vmatpush1.bf16.msra.mxu0 %v4185
        %4231 = vmatprep.subr.bf16.mxu0 0
        %4232 = vmatpush1.bf16.msra.mxu0 %v4186
        %4233 = vmatprep.subr.bf16.mxu0 0
        %4234 = vmatpush1.bf16.msra.mxu0 %v4187
        %4235 = vmatprep.subr.bf16.mxu0 0
        %4236 = vmatpush1.bf16.msra.mxu0 %v4188
        %4237 = vmatprep.mubr.bf16.mxu0 %v4062
        %4238 = vmatmul.mubr.bf16.gmra.mrb[0].mxu0 %v4061
        %v4239 = vpop.f32.mrb[0].mxu0
        %v4240 = vadd.f32 0.0, %v4239
        %v4241 = vpop.f32.mrb[0].mxu0
        %v4242 = vpop.f32.mrb[0].mxu0
        %v4243 = vadd.f32 0.0, %v4242
        %v4244 = vpop.f32.mrb[0].mxu0
        %4245 = vmatprep.mubr.bf16.mxu0 %v4064
        %4246 = vmatmul.mubr.bf16.gmra.mrb[0].mxu0 %v4063
        %v4247 = vpop.f32.mrb[0].mxu0
        %v4248 = vadd.f32 0.0, %v4247
        %v4249 = vpop.f32.mrb[0].mxu0
        %v4250 = vpop.f32.mrb[0].mxu0
        %v4251 = vadd.f32 0.0, %v4250
        %v4252 = vpop.f32.mrb[0].mxu0
        %4253 = vmatprep.mubr.bf16.mxu0 %v4066
        %4254 = vmatmul.mubr.bf16.gmra.mrb[0].mxu0 %v4065
        %v4255 = vpop.f32.mrb[0].mxu0
        %v4256 = vadd.f32 0.0, %v4255
        %v4257 = vpop.f32.mrb[0].mxu0
        %v4258 = vpop.f32.mrb[0].mxu0
        %v4259 = vadd.f32 0.0, %v4258
        %v4260 = vpop.f32.mrb[0].mxu0
        %4261 = vmatprep.mubr.bf16.mxu0 %v4068
        %4262 = vmatmul.mubr.bf16.gmra.mrb[0].mxu0 %v4067
        %v4263 = vpop.f32.mrb[0].mxu0
        %v4264 = vadd.f32 0.0, %v4263
        %v4265 = vpop.f32.mrb[0].mxu0
        %v4266 = vpop.f32.mrb[0].mxu0
        %v4267 = vadd.f32 0.0, %v4266
        %v4268 = vpop.f32.mrb[0].mxu0
        %4269 = vmatprep.mubr.bf16.mxu0 %v4070
        %4270 = vmatmul.mubr.bf16.gmra.mrb[0].mxu0 %v4069
        %v4271 = vpop.f32.mrb[0].mxu0
        %v4272 = vadd.f32 0.0, %v4271
        %v4273 = vpop.f32.mrb[0].mxu0
        %v4274 = vpop.f32.mrb[0].mxu0
        %v4275 = vadd.f32 0.0, %v4274
        %v4276 = vpop.f32.mrb[0].mxu0
        %4277 = vmatprep.mubr.bf16.mxu0 %v4072
        %4278 = vmatmul.mubr.bf16.gmra.mrb[0].mxu0 %v4071
        %v4279 = vpop.f32.mrb[0].mxu0
        %v4280 = vadd.f32 0.0, %v4279
        %v4281 = vpop.f32.mrb[0].mxu0
        %v4282 = vpop.f32.mrb[0].mxu0
        %v4283 = vadd.f32 0.0, %v4282
        %v4284 = vpop.f32.mrb[0].mxu0
        %4285 = vmatprep.mubr.bf16.mxu0 %v4074
        %4286 = vmatmul.mubr.bf16.gmra.mrb[0].mxu0 %v4073
        %v4287 = vpop.f32.mrb[0].mxu0
        %v4288 = vadd.f32 0.0, %v4287
        %v4289 = vpop.f32.mrb[0].mxu0
        %v4290 = vpop.f32.mrb[0].mxu0
        %v4291 = vadd.f32 0.0, %v4290
        %v4292 = vpop.f32.mrb[0].mxu0
        %4293 = vmatprep.mubr.bf16.mxu0 %v4076
        %4294 = vmatmul.mubr.bf16.gmra.mrb[0].mxu0 %v4075
        %v4295 = vpop.f32.mrb[0].mxu0
        %v4296 = vadd.f32 0.0, %v4295
        %v4297 = vpop.f32.mrb[0].mxu0
        %v4298 = vpop.f32.mrb[0].mxu0
        %v4299 = vadd.f32 0.0, %v4298
        %v4300 = vpop.f32.mrb[0].mxu0
        %4301 = vdwg.mxu0
        %p4302 = scmp.ne.s32.totalorder %s32, 1
        // Predicated region
        $region113: #{tpu_custom_call.1} parent=63 // pred_check
          %p4303 = pneg %p4302
        $region114: #{tpu_custom_call.1} parent=63 // pred_check_branch
          %4305 = sbr.rel (%p4303) target = $region116
        $region115: #{tpu_custom_call.1} parent=63 // pred_region
          %v4306 = vld [vmem:[#allocation4] sm:$0xff]
          %v4307 = vld [vmem:[#allocation4 + $0x8] sm:$0xff]
          %v4308 = vld [vmem:[#allocation4 + $0x10] sm:$0xff]
          %v4309 = vld [vmem:[#allocation4 + $0x18] sm:$0xff]
          %v4310 = vld [vmem:[#allocation4 + $0x20] sm:$0xff]
          %v4311 = vld [vmem:[#allocation4 + $0x28] sm:$0xff]
          %v4312 = vld [vmem:[#allocation4 + $0x30] sm:$0xff]
          %v4313 = vld [vmem:[#allocation4 + $0x38] sm:$0xff]
          %v4314 = vld [vmem:[#allocation4 + $0x40] sm:$0xff]
          %v4315 = vld [vmem:[#allocation4 + $0x48] sm:$0xff]
          %v4316 = vld [vmem:[#allocation4 + $0x50] sm:$0xff]
          %v4317 = vld [vmem:[#allocation4 + $0x58] sm:$0xff]
          %v4318 = vld [vmem:[#allocation4 + $0x60] sm:$0xff]
          %v4319 = vld [vmem:[#allocation4 + $0x68] sm:$0xff]
          %v4320 = vld [vmem:[#allocation4 + $0x70] sm:$0xff]
          %v4321 = vld [vmem:[#allocation4 + $0x78] sm:$0xff]
          %v4322 = vadd.f32 %v4306, %v4240
          %v4323 = vadd.f32 %v4307, %v4243
          %v4324 = vadd.f32 %v4308, %v4248
          %v4325 = vadd.f32 %v4309, %v4251
          %v4326 = vadd.f32 %v4310, %v4256
          %v4327 = vadd.f32 %v4311, %v4259
          %v4328 = vadd.f32 %v4312, %v4264
          %v4329 = vadd.f32 %v4313, %v4267
          %v4330 = vadd.f32 %v4314, %v4272
          %v4331 = vadd.f32 %v4315, %v4275
          %v4332 = vadd.f32 %v4316, %v4280
          %v4333 = vadd.f32 %v4317, %v4283
          %v4334 = vadd.f32 %v4318, %v4288
          %v4335 = vadd.f32 %v4319, %v4291
          %v4336 = vadd.f32 %v4320, %v4296
          %v4337 = vadd.f32 %v4321, %v4299
          %4338 = vst [vmem:[#allocation4] sm:$0xff] %v4322
          %4339 = vst [vmem:[#allocation4 + $0x8] sm:$0xff] %v4323
          %4340 = vst [vmem:[#allocation4 + $0x10] sm:$0xff] %v4324
          %4341 = vst [vmem:[#allocation4 + $0x18] sm:$0xff] %v4325
          %4342 = vst [vmem:[#allocation4 + $0x20] sm:$0xff] %v4326
          %4343 = vst [vmem:[#allocation4 + $0x28] sm:$0xff] %v4327
          %4344 = vst [vmem:[#allocation4 + $0x30] sm:$0xff] %v4328
          %4345 = vst [vmem:[#allocation4 + $0x38] sm:$0xff] %v4329
          %4346 = vst [vmem:[#allocation4 + $0x40] sm:$0xff] %v4330
          %4347 = vst [vmem:[#allocation4 + $0x48] sm:$0xff] %v4331
          %4348 = vst [vmem:[#allocation4 + $0x50] sm:$0xff] %v4332
          %4349 = vst [vmem:[#allocation4 + $0x58] sm:$0xff] %v4333
          %4350 = vst [vmem:[#allocation4 + $0x60] sm:$0xff] %v4334
          %4351 = vst [vmem:[#allocation4 + $0x68] sm:$0xff] %v4335
          %4352 = vst [vmem:[#allocation4 + $0x70] sm:$0xff] %v4336
          %4353 = vst [vmem:[#allocation4 + $0x78] sm:$0xff] %v4337
        $region116: #{tpu_custom_call.1} parent=63 // pred_fallthru
          _
        %p4354 = scmp.eq.s32.totalorder %s32, 1
        // Predicated region
        $region117: #{tpu_custom_call.1} parent=63 // pred_check
          %p4355 = pneg %p4354
        $region118: #{tpu_custom_call.1} parent=63 // pred_check_branch
          %4357 = sbr.rel (%p4355) target = $region120
        $region119: #{tpu_custom_call.1} parent=63 // pred_region
          %v4358 = vld [vmem:[#allocation4] sm:$0xff]
          %v4359 = vld [vmem:[#allocation4 + $0x8] sm:$0xff]
          %v4360 = vld [vmem:[#allocation4 + $0x10] sm:$0xff]
          %v4361 = vld [vmem:[#allocation4 + $0x18] sm:$0xff]
          %v4362 = vld [vmem:[#allocation4 + $0x20] sm:$0xff]
          %v4363 = vld [vmem:[#allocation4 + $0x28] sm:$0xff]
          %v4364 = vld [vmem:[#allocation4 + $0x30] sm:$0xff]
          %v4365 = vld [vmem:[#allocation4 + $0x38] sm:$0xff]
          %v4366 = vld [vmem:[#allocation4 + $0x40] sm:$0xff]
          %v4367 = vld [vmem:[#allocation4 + $0x48] sm:$0xff]
          %v4368 = vld [vmem:[#allocation4 + $0x50] sm:$0xff]
          %v4369 = vld [vmem:[#allocation4 + $0x58] sm:$0xff]
          %v4370 = vld [vmem:[#allocation4 + $0x60] sm:$0xff]
          %v4371 = vld [vmem:[#allocation4 + $0x68] sm:$0xff]
          %v4372 = vld [vmem:[#allocation4 + $0x70] sm:$0xff]
          %v4373 = vld [vmem:[#allocation4 + $0x78] sm:$0xff]
          %v4374 = vadd.f32 %v4358, %v4240
          %v4375 = vadd.f32 %v4359, %v4243
          %v4376 = vadd.f32 %v4360, %v4248
          %v4377 = vadd.f32 %v4361, %v4251
          %v4378 = vadd.f32 %v4362, %v4256
          %v4379 = vadd.f32 %v4363, %v4259
          %v4380 = vadd.f32 %v4364, %v4264
          %v4381 = vadd.f32 %v4365, %v4267
          %v4382 = vadd.f32 %v4366, %v4272
          %v4383 = vadd.f32 %v4367, %v4275
          %v4384 = vadd.f32 %v4368, %v4280
          %v4385 = vadd.f32 %v4369, %v4283
          %v4386 = vadd.f32 %v4370, %v4288
          %v4387 = vadd.f32 %v4371, %v4291
          %v4388 = vadd.f32 %v4372, %v4296
          %v4389 = vadd.f32 %v4373, %v4299
          %4390 = vst [vmem:[#allocation25] sm:$0xff] %v4374
          %4391 = vst [vmem:[#allocation25 + $0x8] sm:$0xff] %v4375
          %4392 = vst [vmem:[#allocation25 + $0x10] sm:$0xff] %v4376
          %4393 = vst [vmem:[#allocation25 + $0x18] sm:$0xff] %v4377
          %4394 = vst [vmem:[#allocation25 + $0x20] sm:$0xff] %v4378
          %4395 = vst [vmem:[#allocation25 + $0x28] sm:$0xff] %v4379
          %4396 = vst [vmem:[#allocation25 + $0x30] sm:$0xff] %v4380
          %4397 = vst [vmem:[#allocation25 + $0x38] sm:$0xff] %v4381
          %4398 = vst [vmem:[#allocation25 + $0x40] sm:$0xff] %v4382
          %4399 = vst [vmem:[#allocation25 + $0x48] sm:$0xff] %v4383
          %4400 = vst [vmem:[#allocation25 + $0x50] sm:$0xff] %v4384
          %4401 = vst [vmem:[#allocation25 + $0x58] sm:$0xff] %v4385
          %4402 = vst [vmem:[#allocation25 + $0x60] sm:$0xff] %v4386
          %4403 = vst [vmem:[#allocation25 + $0x68] sm:$0xff] %v4387
          %4404 = vst [vmem:[#allocation25 + $0x70] sm:$0xff] %v4388
          %4405 = vst [vmem:[#allocation25 + $0x78] sm:$0xff] %v4389
        $region120: #{tpu_custom_call.1} parent=63 // pred_fallthru
          _
        // Predicated region
        $region121: #{tpu_custom_call.1} parent=63 // pred_check
          %p4406 = pneg %p286
        $region122: #{tpu_custom_call.1} parent=63 // pred_check_branch
          %4408 = sbr.rel (%p4406) target = $region124
        $region123: #{tpu_custom_call.1} parent=63 // pred_region
          %s4410 = ssub.s32 2048, 2048
          %4411 = vsyncadd [#allocation8], %s4410
          %s4412 = sshll.u32 [#allocation25], 4
          %s4413 = int_to_ptr.vmem [resolvable:$true] %s4412
          %4418 = dma.vmem_to_hbm [thread:$0]  %s4413, 2048, %s11, [#allocation8], 128, 128, 8
        $region124: #{tpu_custom_call.1} parent=63 // pred_fallthru
          _
        // Predicated region
        $region125: #{tpu_custom_call.1} parent=63 // pred_check
          %p4419 = pneg %p286
        $region126: #{tpu_custom_call.1} parent=63 // pred_check_branch
          %4421 = sbr.rel (%p4419) target = $region128
        $region127: #{tpu_custom_call.1} parent=63 // pred_region
          %4422 = dma.done [#allocation8], 2048
        $region128: #{tpu_custom_call.1} parent=63 // pred_fallthru
          _
      $region64: #{tpu_custom_call.1} parent=5 // pred_fallthru
        _
      %p4423 = scmp.le.s32.totalorder 2, %s27
      // Predicated region
      $region129: #{tpu_custom_call.1} parent=5 // pred_check
        %p4424 = pneg %p4423
      $region130: #{tpu_custom_call.1} parent=5 // pred_check_branch
        %4426 = sbr.rel (%p4424) target = $region132
      $region131: #{tpu_custom_call.1} parent=5 // pred_region
        %s4427 = ssub.s32 %s27, 2
      $region132: #{tpu_custom_call.1} parent=5 // pred_fallthru
        _
    $region6: #{tpu_custom_call.1} parent=1 // loop_footer
      %s31 = sadd.s32 1, %s27
    $region7: #{tpu_custom_call.1} parent=1 // loop_footer_branch
      %26 = sbr.rel target = $region3
    $region8: #{tpu_custom_call.1} parent=1 // loop_exit
      _
    %4428 = vsyncpa [#allocation7], 1
    %s4429 = scalar_lea.sflag [#allocation7], 1
    %4430 = vsyncpa %s4429, 1
    %4431 = vsyncpa [#allocation14], 1
    %4432 = vsyncpa [#allocation17], 1
    %4433 = vsyncpa [#allocation20], 1
    %4434 = vsyncpa [#allocation23], 1
    %s4435 = scalar_lea.sflag [#allocation23], 1
    %4436 = vsyncpa %s4435, 1
    %4437 = vsyncpa [#allocation8], 1
    %s4438 = scalar_lea.sflag [#allocation8], 1
    %4439 = vsyncpa %s4438, 1
    %4440 = vsyncpa [#allocation9], 1
    %s4441 = scalar_lea.sflag [#allocation9], 1
    %4442 = vsyncpa %s4441, 1
    %4443 = vsyncpa [#allocation10], 1
    %s4444 = scalar_lea.sflag [#allocation10], 1
    %4445 = vsyncpa %s4444, 1

</llo_original>
